<compile_context>
chip_gen: v6e
topology: v6e:2x2x1
jax: 0.10.0
libtpu: 0.0.40
codegen_flags: <defaults>
</compile_context>

<pallas_src>
import functools

import jax
import jax.numpy as jnp
from jax import lax
from jax.experimental import pallas as pl
from jax.experimental.pallas import tpu as pltpu

_LANE = 128


def _round_up(x, m):
    return (x + m - 1) // m * m


def _resnet_block_kernel(xph_ref, w1_ref, w2_ref, s1_ref, b1_ref,
                         s2_ref, b2_ref, sc_ref, o_ref, hpad_ref, *, stride):
    """Fused ResNet block for one batch element (all channels lane-padded to 128k).

    xph_ref : (1, s*s, Lh, Lw, Cp)  f32  phase-decomposed, spatially padded input
    w1_ref  : (9, Cp, Cq)           bf16 conv1 weights, taps flattened, zero padded
    w2_ref  : (9, Cq, Cq)           bf16 conv2 weights
    s*_ref  : (1, Cq)               f32  folded BN scale / bias
    sc_ref  : (1, Ho, Wo, Cq)       bf16 shortcut (already subsampled / channel padded)
    o_ref   : (1, Ho, Wo, Cq)       f32  output
    hpad_ref: (Ho+2, Wo+2, Cq)      f32  VMEM scratch holding the padded intermediate
    """
    _, ho, wo, cq = o_ref.shape
    cp = xph_ref.shape[-1]
    m = ho * wo

    # ---- conv1 (3x3, stride s) + BN1 + ReLU -------------------------------
    acc = jnp.zeros((m, cq), jnp.float32)
    for kh in range(3):
        for kw in range(3):
            ph = (kh % stride) * stride + (kw % stride)
            r0, c0 = kh // stride, kw // stride
            slab = xph_ref[0, ph, r0:r0 + ho, c0:c0 + wo, :]
            slab = slab.reshape(m, cp).astype(jnp.bfloat16)      # bf16 MXU path
            acc += jnp.dot(slab, w1_ref[kh * 3 + kw],
                           preferred_element_type=jnp.float32)
    y1 = jnp.maximum(acc * s1_ref[...] + b1_ref[...], 0.0)

    # ---- stage intermediate in VMEM: zero halo + interior (masked) store --
    hpad_ref[...] = jnp.zeros_like(hpad_ref)
    hpad_ref[1:1 + ho, 1:1 + wo, :] = y1.reshape(ho, wo, cq)

    # ---- conv2 (3x3, stride 1) + BN2 + residual + ReLU --------------------
    acc2 = jnp.zeros((m, cq), jnp.float32)
    for kh in range(3):
        for kw in range(3):
            slab = hpad_ref[kh:kh + ho, kw:kw + wo, :]
            slab = slab.reshape(m, cq).astype(jnp.bfloat16)
            acc2 += jnp.dot(slab, w2_ref[kh * 3 + kw],
                            preferred_element_type=jnp.float32)
    y2 = acc2 * s2_ref[...] + b2_ref[...]
    y2 = y2 + sc_ref[0].reshape(m, cq).astype(jnp.float32)
    y2 = jnp.maximum(y2, 0.0)
    o_ref[...] = y2.reshape(1, ho, wo, cq).astype(o_ref.dtype)


def resnet_block_forward(x_nchw, params, *, stride):
    """Equivalent of ResNetBlock.forward (inference BN). Input/output are NCHW f32."""
    x = jnp.transpose(x_nchw, (0, 2, 3, 1)).astype(jnp.float32)      # -> NHWC
    n, h, w, cin = x.shape
    cout = params["w1"].shape[-1]
    ho, wo = h // stride, w // stride
    cp = _round_up(cin, _LANE)       # lane-dense padded in-channels
    cq = _round_up(cout, _LANE)      # lane-dense padded out-channels

    # conv1 input: channel pad (lane-dense), halo pad, phase split only if s>1.
    xcp = jnp.pad(x, ((0, 0), (0, 0), (0, 0), (0, cp - cin)))
    xsp = jnp.pad(xcp, ((0, 0), (1, 1), (1, 1), (0, 0)))
    lh = 2 // stride + ho
    lw = 2 // stride + wo
    if stride == 1:
        phases = xsp[:, None]                              # no phase-stack copy
    else:
        phases = jnp.stack(
            [xsp[:, p::stride, q::stride, :][:, :lh, :lw, :]
             for p in range(stride) for q in range(stride)], axis=1)
    nph = stride * stride

    # Weights: (3,3,ci,co) -> (9, Cpad, Cpad) bf16, zero padded.
    w1 = jnp.zeros((9, cp, cq), jnp.bfloat16)
    w1 = w1.at[:, :cin, :cout].set(
        params["w1"].reshape(9, cin, cout).astype(jnp.bfloat16))
    w2 = jnp.zeros((9, cq, cq), jnp.bfloat16)
    w2 = w2.at[:, :cout, :cout].set(
        params["w2"].reshape(9, cout, cout).astype(jnp.bfloat16))

    def pad_vec(v):
        return jnp.pad(v.astype(jnp.float32), (0, cq - cout)).reshape(1, cq)

    s1, b1 = pad_vec(params["scale1"]), pad_vec(params["bias1"])
    s2, b2 = pad_vec(params["scale2"]), pad_vec(params["bias2"])

    # ShortcutConnection: strided subsample + channel zero padding (out_c//4 each side).
    if stride != 1 or cin != cout:
        pc = cout // 4
        sc = x[:, ::stride, ::stride, :]
        sc = jnp.pad(sc, ((0, 0), (0, 0), (0, 0), (pc, pc)))
    else:
        sc = x
    sc = jnp.pad(sc, ((0, 0), (0, 0), (0, 0), (0, cq - sc.shape[-1])))
    sc = sc.astype(jnp.bfloat16)

    kernel = functools.partial(_resnet_block_kernel, stride=stride)

    out = pl.pallas_call(
        kernel,
        out_shape=jax.ShapeDtypeStruct((n, ho, wo, cq), jnp.float32),
        grid=(n,),
        in_specs=[
            pl.BlockSpec((1, nph, lh, lw, cp), lambda i: (i, 0, 0, 0, 0)),
            pl.BlockSpec((9, cp, cq), lambda i: (0, 0, 0)),
            pl.BlockSpec((9, cq, cq), lambda i: (0, 0, 0)),
            pl.BlockSpec((1, cq), lambda i: (0, 0)),
            pl.BlockSpec((1, cq), lambda i: (0, 0)),
            pl.BlockSpec((1, cq), lambda i: (0, 0)),
            pl.BlockSpec((1, cq), lambda i: (0, 0)),
            pl.BlockSpec((1, ho, wo, cq), lambda i: (i, 0, 0, 0)),
        ],
        out_specs=pl.BlockSpec((1, ho, wo, cq), lambda i: (i, 0, 0, 0)),
        scratch_shapes=[pltpu.VMEM((ho + 2, wo + 2, cq), jnp.float32)],
        compiler_params=pltpu.CompilerParams(
            dimension_semantics=("parallel",),
            vmem_limit_bytes=32 * 1024 * 1024),
    )(phases, w1, w2, s1, b1, s2, b2, sc)

    out = out[..., :cout]                                # drop channel padding
    return jnp.transpose(out, (0, 3, 1, 2))              # -> NCHW


def init_params(key, in_channels, out_channels, eps=1e-5):
    ks = jax.random.split(key, 12)

    def conv_w(k, cin, cout):
        bound = (1.0 / (cin * 9)) ** 0.5
        return jax.random.uniform(k, (3, 3, cin, cout), jnp.float32, -bound, bound)

    def bn_fold(kg, kb, km, kv, c):
        gamma = 1.0 + 0.1 * jax.random.normal(kg, (c,), jnp.float32)
        beta = 0.1 * jax.random.normal(kb, (c,), jnp.float32)
        mean = 0.1 * jax.random.normal(km, (c,), jnp.float32)
        var = jax.random.uniform(kv, (c,), jnp.float32, 0.5, 1.5)
        scale = gamma / jnp.sqrt(var + eps)
        bias = beta - mean * scale
        return scale, bias

    w1 = conv_w(ks[0], in_channels, out_channels)
    w2 = conv_w(ks[1], out_channels, out_channels)
    s1, b1 = bn_fold(ks[2], ks[3], ks[4], ks[5], out_channels)
    s2, b2 = bn_fold(ks[6], ks[7], ks[8], ks[9], out_channels)
    return {"w1": w1, "scale1": s1, "bias1": b1,
            "w2": w2, "scale2": s2, "bias2": b2}


def _ref_forward(x_nchw, params, *, stride):
    """Pure-JAX reference mirroring the kernel's bf16 quantization points."""
    x = jnp.transpose(x_nchw, (0, 2, 3, 1)).astype(jnp.float32)
    q = lambda a: a.astype(jnp.bfloat16).astype(jnp.float32)

    def conv(z, wgt, s):
        return lax.conv_general_dilated(
            z, q(wgt), (s, s), ((1, 1), (1, 1)),
            dimension_numbers=("NHWC", "HWIO", "NHWC"),
            precision=lax.Precision.HIGHEST)

    h = conv(q(x), params["w1"], stride) * params["scale1"] + params["bias1"]
    h = jnp.maximum(h, 0.0)
    out = conv(q(h), params["w2"], 1) * params["scale2"] + params["bias2"]

    cin, cout = x.shape[-1], params["w1"].shape[-1]
    if stride != 1 or cin != cout:
        pc = cout // 4
        sc = x[:, ::stride, ::stride, :]
        sc = jnp.pad(sc, ((0, 0), (0, 0), (0, 0), (pc, pc)))
    else:
        sc = x
    out = jnp.maximum(out + q(sc), 0.0)
    return jnp.transpose(out, (0, 3, 1, 2))


if __name__ == "__main__":
    key = jax.random.PRNGKey(0)
    k1, k2, k3, k4 = jax.random.split(key, 4)

    # Case 1: stride-2 block with channel expansion (exercises ShortcutConnection).
    N, Cin, H, W, Cout, stride = 2, 4, 16, 16, 8, 2
    x = jax.random.normal(k1, (N, Cin, H, W), jnp.float32)
    params = init_params(k2, Cin, Cout)
    out = jax.block_until_ready(resnet_block_forward(x, params, stride=stride))
    assert out.shape == (N, Cout, H // stride, W // stride), out.shape
    ref = _ref_forward(x, params, stride=stride)
    if not jnp.allclose(out, ref, atol=2e-2, rtol=2e-2):
        raise AssertionError("stride-2 mismatch, max abs diff = "
                             f"{float(jnp.max(jnp.abs(out - ref)))}")

    # Case 2: stride-1 block with identity shortcut.
    N2, C2, H2 = 2, 8, 8
    x2 = jax.random.normal(k3, (N2, C2, H2, H2), jnp.float32)
    params2 = init_params(k4, C2, C2)
    out2 = jax.block_until_ready(resnet_block_forward(x2, params2, stride=1))
    assert out2.shape == (N2, C2, H2, H2), out2.shape
    ref2 = _ref_forward(x2, params2, stride=1)
    if not jnp.allclose(out2, ref2, atol=2e-2, rtol=2e-2):
        raise AssertionError("stride-1 mismatch, max abs diff = "
                             f"{float(jnp.max(jnp.abs(out2 - ref2)))}")

    print("KERNEL_OK")
</pallas_src>

<mosaic_0001>
module attributes {stable_mosaic.version = 11 : i64} {
  func.func @_resnet_block_kernel(%arg0: i32, %arg1: memref<1x4x9x9x128xf32, #tpu.memory_space<vmem>>, %arg2: memref<9x128x128xbf16, #tpu.memory_space<vmem>>, %arg3: memref<9x128x128xbf16, #tpu.memory_space<vmem>>, %arg4: memref<1x128xf32, #tpu.memory_space<vmem>>, %arg5: memref<1x128xf32, #tpu.memory_space<vmem>>, %arg6: memref<1x128xf32, #tpu.memory_space<vmem>>, %arg7: memref<1x128xf32, #tpu.memory_space<vmem>>, %arg8: memref<1x8x8x128xbf16, #tpu.memory_space<vmem>>, %arg9: memref<1x8x8x128xf32, #tpu.memory_space<vmem>>, %arg10: memref<10x10x128xf32, #tpu.memory_space<vmem>>) attributes {dimension_semantics = [#tpu.dimension_semantics<parallel>], iteration_bounds = array<i64: 2>, scalar_prefetch = 0 : i64, scratch_operands = 1 : i64, tpu.core_type = #tpu.core_type<tc>, window_params = [{transform_indices = @transform_0, window_bounds = array<i64: 1, 4, 9, 9, 128>}, {pipeline_mode = #tpu.pipeline_mode<synchronous>, transform_indices = @transform_1, window_bounds = array<i64: 9, 128, 128>}, {pipeline_mode = #tpu.pipeline_mode<synchronous>, transform_indices = @transform_2, window_bounds = array<i64: 9, 128, 128>}, {pipeline_mode = #tpu.pipeline_mode<synchronous>, transform_indices = @transform_3, window_bounds = array<i64: 1, 128>}, {pipeline_mode = #tpu.pipeline_mode<synchronous>, transform_indices = @transform_4, window_bounds = array<i64: 1, 128>}, {pipeline_mode = #tpu.pipeline_mode<synchronous>, transform_indices = @transform_5, window_bounds = array<i64: 1, 128>}, {pipeline_mode = #tpu.pipeline_mode<synchronous>, transform_indices = @transform_6, window_bounds = array<i64: 1, 128>}, {transform_indices = @transform_7, window_bounds = array<i64: 1, 8, 8, 128>}, {transform_indices = @transform_8, window_bounds = array<i64: 1, 8, 8, 128>}]} {
    %cst = arith.constant 0.000000e+00 : f32
    %0 = vector.broadcast %cst : f32 to vector<64x128xf32>
    %c0 = arith.constant 0 : index
    %c0_0 = arith.constant 0 : index
    %c0_1 = arith.constant 0 : index
    %c0_2 = arith.constant 0 : index
    %c0_3 = arith.constant 0 : index
    %1 = vector.load %arg1[%c0, %c0_0, %c0_1, %c0_2, %c0_3] : memref<1x4x9x9x128xf32, #tpu.memory_space<vmem>>, vector<1x1x8x8x128xf32>
    %2 = vector.shape_cast %1 : vector<1x1x8x8x128xf32> to vector<8x8x128xf32>
    %3 = vector.shape_cast %2 : vector<8x8x128xf32> to vector<64x128xf32>
    %4 = arith.truncf %3 : vector<64x128xf32> to vector<64x128xbf16>
    %c0_4 = arith.constant 0 : index
    %c0_5 = arith.constant 0 : index
    %c0_6 = arith.constant 0 : index
    %5 = vector.load %arg2[%c0_4, %c0_5, %c0_6] : memref<9x128x128xbf16, #tpu.memory_space<vmem>>, vector<1x128x128xbf16>
    %6 = vector.shape_cast %5 : vector<1x128x128xbf16> to vector<128x128xbf16>
    %cst_7 = arith.constant dense<0.000000e+00> : vector<64x128xf32>
    %7 = tpu.matmul %4, %6, %cst_7 {dimension_numbers = #tpu.dot_dimension_numbers<[1], [0], [0], [1], [0, 0, 1, 1], [], []>} : vector<64x128xbf16>, vector<128x128xbf16>, vector<64x128xf32> -> vector<64x128xf32>
    %8 = arith.addf %0, %7 : vector<64x128xf32>
    %c0_8 = arith.constant 0 : index
    %c1 = arith.constant 1 : index
    %c0_9 = arith.constant 0 : index
    %c0_10 = arith.constant 0 : index
    %c0_11 = arith.constant 0 : index
    %9 = vector.load %arg1[%c0_8, %c1, %c0_9, %c0_10, %c0_11] : memref<1x4x9x9x128xf32, #tpu.memory_space<vmem>>, vector<1x1x8x8x128xf32>
    %10 = vector.shape_cast %9 : vector<1x1x8x8x128xf32> to vector<8x8x128xf32>
    %11 = vector.shape_cast %10 : vector<8x8x128xf32> to vector<64x128xf32>
    %12 = arith.truncf %11 : vector<64x128xf32> to vector<64x128xbf16>
    %c1_12 = arith.constant 1 : index
    %c0_13 = arith.constant 0 : index
    %c0_14 = arith.constant 0 : index
    %13 = vector.load %arg2[%c1_12, %c0_13, %c0_14] : memref<9x128x128xbf16, #tpu.memory_space<vmem>>, vector<1x128x128xbf16>
    %14 = vector.shape_cast %13 : vector<1x128x128xbf16> to vector<128x128xbf16>
    %cst_15 = arith.constant dense<0.000000e+00> : vector<64x128xf32>
    %15 = tpu.matmul %12, %14, %cst_15 {dimension_numbers = #tpu.dot_dimension_numbers<[1], [0], [0], [1], [0, 0, 1, 1], [], []>} : vector<64x128xbf16>, vector<128x128xbf16>, vector<64x128xf32> -> vector<64x128xf32>
    %16 = arith.addf %8, %15 : vector<64x128xf32>
    %c0_16 = arith.constant 0 : index
    %c0_17 = arith.constant 0 : index
    %c0_18 = arith.constant 0 : index
    %c1_19 = arith.constant 1 : index
    %c0_20 = arith.constant 0 : index
    %17 = vector.load %arg1[%c0_16, %c0_17, %c0_18, %c1_19, %c0_20] : memref<1x4x9x9x128xf32, #tpu.memory_space<vmem>>, vector<1x1x8x8x128xf32>
    %18 = vector.shape_cast %17 : vector<1x1x8x8x128xf32> to vector<8x8x128xf32>
    %19 = vector.shape_cast %18 : vector<8x8x128xf32> to vector<64x128xf32>
    %20 = arith.truncf %19 : vector<64x128xf32> to vector<64x128xbf16>
    %c2 = arith.constant 2 : index
    %c0_21 = arith.constant 0 : index
    %c0_22 = arith.constant 0 : index
    %21 = vector.load %arg2[%c2, %c0_21, %c0_22] : memref<9x128x128xbf16, #tpu.memory_space<vmem>>, vector<1x128x128xbf16>
    %22 = vector.shape_cast %21 : vector<1x128x128xbf16> to vector<128x128xbf16>
    %cst_23 = arith.constant dense<0.000000e+00> : vector<64x128xf32>
    %23 = tpu.matmul %20, %22, %cst_23 {dimension_numbers = #tpu.dot_dimension_numbers<[1], [0], [0], [1], [0, 0, 1, 1], [], []>} : vector<64x128xbf16>, vector<128x128xbf16>, vector<64x128xf32> -> vector<64x128xf32>
    %24 = arith.addf %16, %23 : vector<64x128xf32>
    %c0_24 = arith.constant 0 : index
    %c2_25 = arith.constant 2 : index
    %c0_26 = arith.constant 0 : index
    %c0_27 = arith.constant 0 : index
    %c0_28 = arith.constant 0 : index
    %25 = vector.load %arg1[%c0_24, %c2_25, %c0_26, %c0_27, %c0_28] : memref<1x4x9x9x128xf32, #tpu.memory_space<vmem>>, vector<1x1x8x8x128xf32>
    %26 = vector.shape_cast %25 : vector<1x1x8x8x128xf32> to vector<8x8x128xf32>
    %27 = vector.shape_cast %26 : vector<8x8x128xf32> to vector<64x128xf32>
    %28 = arith.truncf %27 : vector<64x128xf32> to vector<64x128xbf16>
    %c3 = arith.constant 3 : index
    %c0_29 = arith.constant 0 : index
    %c0_30 = arith.constant 0 : index
    %29 = vector.load %arg2[%c3, %c0_29, %c0_30] : memref<9x128x128xbf16, #tpu.memory_space<vmem>>, vector<1x128x128xbf16>
    %30 = vector.shape_cast %29 : vector<1x128x128xbf16> to vector<128x128xbf16>
    %cst_31 = arith.constant dense<0.000000e+00> : vector<64x128xf32>
    %31 = tpu.matmul %28, %30, %cst_31 {dimension_numbers = #tpu.dot_dimension_numbers<[1], [0], [0], [1], [0, 0, 1, 1], [], []>} : vector<64x128xbf16>, vector<128x128xbf16>, vector<64x128xf32> -> vector<64x128xf32>
    %32 = arith.addf %24, %31 : vector<64x128xf32>
    %c0_32 = arith.constant 0 : index
    %c3_33 = arith.constant 3 : index
    %c0_34 = arith.constant 0 : index
    %c0_35 = arith.constant 0 : index
    %c0_36 = arith.constant 0 : index
    %33 = vector.load %arg1[%c0_32, %c3_33, %c0_34, %c0_35, %c0_36] : memref<1x4x9x9x128xf32, #tpu.memory_space<vmem>>, vector<1x1x8x8x128xf32>
    %34 = vector.shape_cast %33 : vector<1x1x8x8x128xf32> to vector<8x8x128xf32>
    %35 = vector.shape_cast %34 : vector<8x8x128xf32> to vector<64x128xf32>
    %36 = arith.truncf %35 : vector<64x128xf32> to vector<64x128xbf16>
    %c4 = arith.constant 4 : index
    %c0_37 = arith.constant 0 : index
    %c0_38 = arith.constant 0 : index
    %37 = vector.load %arg2[%c4, %c0_37, %c0_38] : memref<9x128x128xbf16, #tpu.memory_space<vmem>>, vector<1x128x128xbf16>
    %38 = vector.shape_cast %37 : vector<1x128x128xbf16> to vector<128x128xbf16>
    %cst_39 = arith.constant dense<0.000000e+00> : vector<64x128xf32>
    %39 = tpu.matmul %36, %38, %cst_39 {dimension_numbers = #tpu.dot_dimension_numbers<[1], [0], [0], [1], [0, 0, 1, 1], [], []>} : vector<64x128xbf16>, vector<128x128xbf16>, vector<64x128xf32> -> vector<64x128xf32>
    %40 = arith.addf %32, %39 : vector<64x128xf32>
    %c0_40 = arith.constant 0 : index
    %c2_41 = arith.constant 2 : index
    %c0_42 = arith.constant 0 : index
    %c1_43 = arith.constant 1 : index
    %c0_44 = arith.constant 0 : index
    %41 = vector.load %arg1[%c0_40, %c2_41, %c0_42, %c1_43, %c0_44] : memref<1x4x9x9x128xf32, #tpu.memory_space<vmem>>, vector<1x1x8x8x128xf32>
    %42 = vector.shape_cast %41 : vector<1x1x8x8x128xf32> to vector<8x8x128xf32>
    %43 = vector.shape_cast %42 : vector<8x8x128xf32> to vector<64x128xf32>
    %44 = arith.truncf %43 : vector<64x128xf32> to vector<64x128xbf16>
    %c5 = arith.constant 5 : index
    %c0_45 = arith.constant 0 : index
    %c0_46 = arith.constant 0 : index
    %45 = vector.load %arg2[%c5, %c0_45, %c0_46] : memref<9x128x128xbf16, #tpu.memory_space<vmem>>, vector<1x128x128xbf16>
    %46 = vector.shape_cast %45 : vector<1x128x128xbf16> to vector<128x128xbf16>
    %cst_47 = arith.constant dense<0.000000e+00> : vector<64x128xf32>
    %47 = tpu.matmul %44, %46, %cst_47 {dimension_numbers = #tpu.dot_dimension_numbers<[1], [0], [0], [1], [0, 0, 1, 1], [], []>} : vector<64x128xbf16>, vector<128x128xbf16>, vector<64x128xf32> -> vector<64x128xf32>
    %48 = arith.addf %40, %47 : vector<64x128xf32>
    %c0_48 = arith.constant 0 : index
    %c0_49 = arith.constant 0 : index
    %c1_50 = arith.constant 1 : index
    %c0_51 = arith.constant 0 : index
    %c0_52 = arith.constant 0 : index
    %49 = vector.load %arg1[%c0_48, %c0_49, %c1_50, %c0_51, %c0_52] : memref<1x4x9x9x128xf32, #tpu.memory_space<vmem>>, vector<1x1x8x8x128xf32>
    %50 = vector.shape_cast %49 : vector<1x1x8x8x128xf32> to vector<8x8x128xf32>
    %51 = vector.shape_cast %50 : vector<8x8x128xf32> to vector<64x128xf32>
    %52 = arith.truncf %51 : vector<64x128xf32> to vector<64x128xbf16>
    %c6 = arith.constant 6 : index
    %c0_53 = arith.constant 0 : index
    %c0_54 = arith.constant 0 : index
    %53 = vector.load %arg2[%c6, %c0_53, %c0_54] : memref<9x128x128xbf16, #tpu.memory_space<vmem>>, vector<1x128x128xbf16>
    %54 = vector.shape_cast %53 : vector<1x128x128xbf16> to vector<128x128xbf16>
    %cst_55 = arith.constant dense<0.000000e+00> : vector<64x128xf32>
    %55 = tpu.matmul %52, %54, %cst_55 {dimension_numbers = #tpu.dot_dimension_numbers<[1], [0], [0], [1], [0, 0, 1, 1], [], []>} : vector<64x128xbf16>, vector<128x128xbf16>, vector<64x128xf32> -> vector<64x128xf32>
    %56 = arith.addf %48, %55 : vector<64x128xf32>
    %c0_56 = arith.constant 0 : index
    %c1_57 = arith.constant 1 : index
    %c1_58 = arith.constant 1 : index
    %c0_59 = arith.constant 0 : index
    %c0_60 = arith.constant 0 : index
    %57 = vector.load %arg1[%c0_56, %c1_57, %c1_58, %c0_59, %c0_60] : memref<1x4x9x9x128xf32, #tpu.memory_space<vmem>>, vector<1x1x8x8x128xf32>
    %58 = vector.shape_cast %57 : vector<1x1x8x8x128xf32> to vector<8x8x128xf32>
    %59 = vector.shape_cast %58 : vector<8x8x128xf32> to vector<64x128xf32>
    %60 = arith.truncf %59 : vector<64x128xf32> to vector<64x128xbf16>
    %c7 = arith.constant 7 : index
    %c0_61 = arith.constant 0 : index
    %c0_62 = arith.constant 0 : index
    %61 = vector.load %arg2[%c7, %c0_61, %c0_62] : memref<9x128x128xbf16, #tpu.memory_space<vmem>>, vector<1x128x128xbf16>
    %62 = vector.shape_cast %61 : vector<1x128x128xbf16> to vector<128x128xbf16>
    %cst_63 = arith.constant dense<0.000000e+00> : vector<64x128xf32>
    %63 = tpu.matmul %60, %62, %cst_63 {dimension_numbers = #tpu.dot_dimension_numbers<[1], [0], [0], [1], [0, 0, 1, 1], [], []>} : vector<64x128xbf16>, vector<128x128xbf16>, vector<64x128xf32> -> vector<64x128xf32>
    %64 = arith.addf %56, %63 : vector<64x128xf32>
    %c0_64 = arith.constant 0 : index
    %c0_65 = arith.constant 0 : index
    %c1_66 = arith.constant 1 : index
    %c1_67 = arith.constant 1 : index
    %c0_68 = arith.constant 0 : index
    %65 = vector.load %arg1[%c0_64, %c0_65, %c1_66, %c1_67, %c0_68] : memref<1x4x9x9x128xf32, #tpu.memory_space<vmem>>, vector<1x1x8x8x128xf32>
    %66 = vector.shape_cast %65 : vector<1x1x8x8x128xf32> to vector<8x8x128xf32>
    %67 = vector.shape_cast %66 : vector<8x8x128xf32> to vector<64x128xf32>
    %68 = arith.truncf %67 : vector<64x128xf32> to vector<64x128xbf16>
    %c8 = arith.constant 8 : index
    %c0_69 = arith.constant 0 : index
    %c0_70 = arith.constant 0 : index
    %69 = vector.load %arg2[%c8, %c0_69, %c0_70] : memref<9x128x128xbf16, #tpu.memory_space<vmem>>, vector<1x128x128xbf16>
    %70 = vector.shape_cast %69 : vector<1x128x128xbf16> to vector<128x128xbf16>
    %cst_71 = arith.constant dense<0.000000e+00> : vector<64x128xf32>
    %71 = tpu.matmul %68, %70, %cst_71 {dimension_numbers = #tpu.dot_dimension_numbers<[1], [0], [0], [1], [0, 0, 1, 1], [], []>} : vector<64x128xbf16>, vector<128x128xbf16>, vector<64x128xf32> -> vector<64x128xf32>
    %72 = arith.addf %64, %71 : vector<64x128xf32>
    %c0_72 = arith.constant 0 : index
    %c0_73 = arith.constant 0 : index
    %73 = vector.load %arg4[%c0_72, %c0_73] : memref<1x128xf32, #tpu.memory_space<vmem>>, vector<1x128xf32>
    %74 = vector.broadcast %73 : vector<1x128xf32> to vector<64x128xf32>
    %75 = arith.mulf %72, %74 : vector<64x128xf32>
    %c0_74 = arith.constant 0 : index
    %c0_75 = arith.constant 0 : index
    %76 = vector.load %arg5[%c0_74, %c0_75] : memref<1x128xf32, #tpu.memory_space<vmem>>, vector<1x128xf32>
    %77 = vector.broadcast %76 : vector<1x128xf32> to vector<64x128xf32>
    %78 = arith.addf %75, %77 : vector<64x128xf32>
    %cst_76 = arith.constant 0.000000e+00 : f32
    %79 = vector.broadcast %cst_76 : f32 to vector<64x128xf32>
    %80 = arith.maximumf %78, %79 : vector<64x128xf32>
    %cst_77 = arith.constant 0.000000e+00 : f32
    %81 = vector.broadcast %cst_77 : f32 to vector<10x10x128xf32>
    %c0_78 = arith.constant 0 : index
    %c0_79 = arith.constant 0 : index
    %c0_80 = arith.constant 0 : index
    %82 = vector.load %arg10[%c0_78, %c0_79, %c0_80] : memref<10x10x128xf32, #tpu.memory_space<vmem>>, vector<10x10x128xf32>
    tpu.vector_store %arg10[%c0_78, %c0_79, %c0_80], %81 {strides = array<i32>} : memref<10x10x128xf32, #tpu.memory_space<vmem>>, vector<10x10x128xf32>,
    %83 = vector.shape_cast %80 : vector<64x128xf32> to vector<8x8x128xf32>
    %c1_81 = arith.constant 1 : index
    %c1_82 = arith.constant 1 : index
    %c0_83 = arith.constant 0 : index
    %84 = vector.load %arg10[%c1_81, %c1_82, %c0_83] : memref<10x10x128xf32, #tpu.memory_space<vmem>>, vector<8x8x128xf32>
    tpu.vector_store %arg10[%c1_81, %c1_82, %c0_83], %83 {strides = array<i32>} : memref<10x10x128xf32, #tpu.memory_space<vmem>>, vector<8x8x128xf32>,
    %cst_84 = arith.constant 0.000000e+00 : f32
    %85 = vector.broadcast %cst_84 : f32 to vector<64x128xf32>
    %c0_85 = arith.constant 0 : index
    %c0_86 = arith.constant 0 : index
    %c0_87 = arith.constant 0 : index
    %86 = vector.load %arg10[%c0_85, %c0_86, %c0_87] : memref<10x10x128xf32, #tpu.memory_space<vmem>>, vector<8x8x128xf32>
    %87 = vector.shape_cast %86 : vector<8x8x128xf32> to vector<64x128xf32>
    %88 = arith.truncf %87 : vector<64x128xf32> to vector<64x128xbf16>
    %c0_88 = arith.constant 0 : index
    %c0_89 = arith.constant 0 : index
    %c0_90 = arith.constant 0 : index
    %89 = vector.load %arg3[%c0_88, %c0_89, %c0_90] : memref<9x128x128xbf16, #tpu.memory_space<vmem>>, vector<1x128x128xbf16>
    %90 = vector.shape_cast %89 : vector<1x128x128xbf16> to vector<128x128xbf16>
    %cst_91 = arith.constant dense<0.000000e+00> : vector<64x128xf32>
    %91 = tpu.matmul %88, %90, %cst_91 {dimension_numbers = #tpu.dot_dimension_numbers<[1], [0], [0], [1], [0, 0, 1, 1], [], []>} : vector<64x128xbf16>, vector<128x128xbf16>, vector<64x128xf32> -> vector<64x128xf32>
    %92 = arith.addf %85, %91 : vector<64x128xf32>
    %c0_92 = arith.constant 0 : index
    %c1_93 = arith.constant 1 : index
    %c0_94 = arith.constant 0 : index
    %93 = vector.load %arg10[%c0_92, %c1_93, %c0_94] : memref<10x10x128xf32, #tpu.memory_space<vmem>>, vector<8x8x128xf32>
    %94 = vector.shape_cast %93 : vector<8x8x128xf32> to vector<64x128xf32>
    %95 = arith.truncf %94 : vector<64x128xf32> to vector<64x128xbf16>
    %c1_95 = arith.constant 1 : index
    %c0_96 = arith.constant 0 : index
    %c0_97 = arith.constant 0 : index
    %96 = vector.load %arg3[%c1_95, %c0_96, %c0_97] : memref<9x128x128xbf16, #tpu.memory_space<vmem>>, vector<1x128x128xbf16>
    %97 = vector.shape_cast %96 : vector<1x128x128xbf16> to vector<128x128xbf16>
    %cst_98 = arith.constant dense<0.000000e+00> : vector<64x128xf32>
    %98 = tpu.matmul %95, %97, %cst_98 {dimension_numbers = #tpu.dot_dimension_numbers<[1], [0], [0], [1], [0, 0, 1, 1], [], []>} : vector<64x128xbf16>, vector<128x128xbf16>, vector<64x128xf32> -> vector<64x128xf32>
    %99 = arith.addf %92, %98 : vector<64x128xf32>
    %c0_99 = arith.constant 0 : index
    %c2_100 = arith.constant 2 : index
    %c0_101 = arith.constant 0 : index
    %100 = vector.load %arg10[%c0_99, %c2_100, %c0_101] : memref<10x10x128xf32, #tpu.memory_space<vmem>>, vector<8x8x128xf32>
    %101 = vector.shape_cast %100 : vector<8x8x128xf32> to vector<64x128xf32>
    %102 = arith.truncf %101 : vector<64x128xf32> to vector<64x128xbf16>
    %c2_102 = arith.constant 2 : index
    %c0_103 = arith.constant 0 : index
    %c0_104 = arith.constant 0 : index
    %103 = vector.load %arg3[%c2_102, %c0_103, %c0_104] : memref<9x128x128xbf16, #tpu.memory_space<vmem>>, vector<1x128x128xbf16>
    %104 = vector.shape_cast %103 : vector<1x128x128xbf16> to vector<128x128xbf16>
    %cst_105 = arith.constant dense<0.000000e+00> : vector<64x128xf32>
    %105 = tpu.matmul %102, %104, %cst_105 {dimension_numbers = #tpu.dot_dimension_numbers<[1], [0], [0], [1], [0, 0, 1, 1], [], []>} : vector<64x128xbf16>, vector<128x128xbf16>, vector<64x128xf32> -> vector<64x128xf32>
    %106 = arith.addf %99, %105 : vector<64x128xf32>
    %c1_106 = arith.constant 1 : index
    %c0_107 = arith.constant 0 : index
    %c0_108 = arith.constant 0 : index
    %107 = vector.load %arg10[%c1_106, %c0_107, %c0_108] : memref<10x10x128xf32, #tpu.memory_space<vmem>>, vector<8x8x128xf32>
    %108 = vector.shape_cast %107 : vector<8x8x128xf32> to vector<64x128xf32>
    %109 = arith.truncf %108 : vector<64x128xf32> to vector<64x128xbf16>
    %c3_109 = arith.constant 3 : index
    %c0_110 = arith.constant 0 : index
    %c0_111 = arith.constant 0 : index
    %110 = vector.load %arg3[%c3_109, %c0_110, %c0_111] : memref<9x128x128xbf16, #tpu.memory_space<vmem>>, vector<1x128x128xbf16>
    %111 = vector.shape_cast %110 : vector<1x128x128xbf16> to vector<128x128xbf16>
    %cst_112 = arith.constant dense<0.000000e+00> : vector<64x128xf32>
    %112 = tpu.matmul %109, %111, %cst_112 {dimension_numbers = #tpu.dot_dimension_numbers<[1], [0], [0], [1], [0, 0, 1, 1], [], []>} : vector<64x128xbf16>, vector<128x128xbf16>, vector<64x128xf32> -> vector<64x128xf32>
    %113 = arith.addf %106, %112 : vector<64x128xf32>
    %c1_113 = arith.constant 1 : index
    %c1_114 = arith.constant 1 : index
    %c0_115 = arith.constant 0 : index
    %114 = vector.load %arg10[%c1_113, %c1_114, %c0_115] : memref<10x10x128xf32, #tpu.memory_space<vmem>>, vector<8x8x128xf32>
    %115 = vector.shape_cast %114 : vector<8x8x128xf32> to vector<64x128xf32>
    %116 = arith.truncf %115 : vector<64x128xf32> to vector<64x128xbf16>
    %c4_116 = arith.constant 4 : index
    %c0_117 = arith.constant 0 : index
    %c0_118 = arith.constant 0 : index
    %117 = vector.load %arg3[%c4_116, %c0_117, %c0_118] : memref<9x128x128xbf16, #tpu.memory_space<vmem>>, vector<1x128x128xbf16>
    %118 = vector.shape_cast %117 : vector<1x128x128xbf16> to vector<128x128xbf16>
    %cst_119 = arith.constant dense<0.000000e+00> : vector<64x128xf32>
    %119 = tpu.matmul %116, %118, %cst_119 {dimension_numbers = #tpu.dot_dimension_numbers<[1], [0], [0], [1], [0, 0, 1, 1], [], []>} : vector<64x128xbf16>, vector<128x128xbf16>, vector<64x128xf32> -> vector<64x128xf32>
    %120 = arith.addf %113, %119 : vector<64x128xf32>
    %c1_120 = arith.constant 1 : index
    %c2_121 = arith.constant 2 : index
    %c0_122 = arith.constant 0 : index
    %121 = vector.load %arg10[%c1_120, %c2_121, %c0_122] : memref<10x10x128xf32, #tpu.memory_space<vmem>>, vector<8x8x128xf32>
    %122 = vector.shape_cast %121 : vector<8x8x128xf32> to vector<64x128xf32>
    %123 = arith.truncf %122 : vector<64x128xf32> to vector<64x128xbf16>
    %c5_123 = arith.constant 5 : index
    %c0_124 = arith.constant 0 : index
    %c0_125 = arith.constant 0 : index
    %124 = vector.load %arg3[%c5_123, %c0_124, %c0_125] : memref<9x128x128xbf16, #tpu.memory_space<vmem>>, vector<1x128x128xbf16>
    %125 = vector.shape_cast %124 : vector<1x128x128xbf16> to vector<128x128xbf16>
    %cst_126 = arith.constant dense<0.000000e+00> : vector<64x128xf32>
    %126 = tpu.matmul %123, %125, %cst_126 {dimension_numbers = #tpu.dot_dimension_numbers<[1], [0], [0], [1], [0, 0, 1, 1], [], []>} : vector<64x128xbf16>, vector<128x128xbf16>, vector<64x128xf32> -> vector<64x128xf32>
    %127 = arith.addf %120, %126 : vector<64x128xf32>
    %c2_127 = arith.constant 2 : index
    %c0_128 = arith.constant 0 : index
    %c0_129 = arith.constant 0 : index
    %128 = vector.load %arg10[%c2_127, %c0_128, %c0_129] : memref<10x10x128xf32, #tpu.memory_space<vmem>>, vector<8x8x128xf32>
    %129 = vector.shape_cast %128 : vector<8x8x128xf32> to vector<64x128xf32>
    %130 = arith.truncf %129 : vector<64x128xf32> to vector<64x128xbf16>
    %c6_130 = arith.constant 6 : index
    %c0_131 = arith.constant 0 : index
    %c0_132 = arith.constant 0 : index
    %131 = vector.load %arg3[%c6_130, %c0_131, %c0_132] : memref<9x128x128xbf16, #tpu.memory_space<vmem>>, vector<1x128x128xbf16>
    %132 = vector.shape_cast %131 : vector<1x128x128xbf16> to vector<128x128xbf16>
    %cst_133 = arith.constant dense<0.000000e+00> : vector<64x128xf32>
    %133 = tpu.matmul %130, %132, %cst_133 {dimension_numbers = #tpu.dot_dimension_numbers<[1], [0], [0], [1], [0, 0, 1, 1], [], []>} : vector<64x128xbf16>, vector<128x128xbf16>, vector<64x128xf32> -> vector<64x128xf32>
    %134 = arith.addf %127, %133 : vector<64x128xf32>
    %c2_134 = arith.constant 2 : index
    %c1_135 = arith.constant 1 : index
    %c0_136 = arith.constant 0 : index
    %135 = vector.load %arg10[%c2_134, %c1_135, %c0_136] : memref<10x10x128xf32, #tpu.memory_space<vmem>>, vector<8x8x128xf32>
    %136 = vector.shape_cast %135 : vector<8x8x128xf32> to vector<64x128xf32>
    %137 = arith.truncf %136 : vector<64x128xf32> to vector<64x128xbf16>
    %c7_137 = arith.constant 7 : index
    %c0_138 = arith.constant 0 : index
    %c0_139 = arith.constant 0 : index
    %138 = vector.load %arg3[%c7_137, %c0_138, %c0_139] : memref<9x128x128xbf16, #tpu.memory_space<vmem>>, vector<1x128x128xbf16>
    %139 = vector.shape_cast %138 : vector<1x128x128xbf16> to vector<128x128xbf16>
    %cst_140 = arith.constant dense<0.000000e+00> : vector<64x128xf32>
    %140 = tpu.matmul %137, %139, %cst_140 {dimension_numbers = #tpu.dot_dimension_numbers<[1], [0], [0], [1], [0, 0, 1, 1], [], []>} : vector<64x128xbf16>, vector<128x128xbf16>, vector<64x128xf32> -> vector<64x128xf32>
    %141 = arith.addf %134, %140 : vector<64x128xf32>
    %c2_141 = arith.constant 2 : index
    %c2_142 = arith.constant 2 : index
    %c0_143 = arith.constant 0 : index
    %142 = vector.load %arg10[%c2_141, %c2_142, %c0_143] : memref<10x10x128xf32, #tpu.memory_space<vmem>>, vector<8x8x128xf32>
    %143 = vector.shape_cast %142 : vector<8x8x128xf32> to vector<64x128xf32>
    %144 = arith.truncf %143 : vector<64x128xf32> to vector<64x128xbf16>
    %c8_144 = arith.constant 8 : index
    %c0_145 = arith.constant 0 : index
    %c0_146 = arith.constant 0 : index
    %145 = vector.load %arg3[%c8_144, %c0_145, %c0_146] : memref<9x128x128xbf16, #tpu.memory_space<vmem>>, vector<1x128x128xbf16>
    %146 = vector.shape_cast %145 : vector<1x128x128xbf16> to vector<128x128xbf16>
    %cst_147 = arith.constant dense<0.000000e+00> : vector<64x128xf32>
    %147 = tpu.matmul %144, %146, %cst_147 {dimension_numbers = #tpu.dot_dimension_numbers<[1], [0], [0], [1], [0, 0, 1, 1], [], []>} : vector<64x128xbf16>, vector<128x128xbf16>, vector<64x128xf32> -> vector<64x128xf32>
    %148 = arith.addf %141, %147 : vector<64x128xf32>
    %c0_148 = arith.constant 0 : index
    %c0_149 = arith.constant 0 : index
    %149 = vector.load %arg6[%c0_148, %c0_149] : memref<1x128xf32, #tpu.memory_space<vmem>>, vector<1x128xf32>
    %150 = vector.broadcast %149 : vector<1x128xf32> to vector<64x128xf32>
    %151 = arith.mulf %148, %150 : vector<64x128xf32>
    %c0_150 = arith.constant 0 : index
    %c0_151 = arith.constant 0 : index
    %152 = vector.load %arg7[%c0_150, %c0_151] : memref<1x128xf32, #tpu.memory_space<vmem>>, vector<1x128xf32>
    %153 = vector.broadcast %152 : vector<1x128xf32> to vector<64x128xf32>
    %154 = arith.addf %151, %153 : vector<64x128xf32>
    %c0_152 = arith.constant 0 : index
    %c0_153 = arith.constant 0 : index
    %c0_154 = arith.constant 0 : index
    %c0_155 = arith.constant 0 : index
    %155 = vector.load %arg8[%c0_152, %c0_153, %c0_154, %c0_155] : memref<1x8x8x128xbf16, #tpu.memory_space<vmem>>, vector<1x8x8x128xbf16>
    %156 = vector.shape_cast %155 : vector<1x8x8x128xbf16> to vector<8x8x128xbf16>
    %157 = vector.shape_cast %156 : vector<8x8x128xbf16> to vector<64x128xbf16>
    %158 = arith.extf %157 : vector<64x128xbf16> to vector<64x128xf32>
    %159 = arith.addf %154, %158 : vector<64x128xf32>
    %cst_156 = arith.constant 0.000000e+00 : f32
    %160 = vector.broadcast %cst_156 : f32 to vector<64x128xf32>
    %161 = arith.maximumf %159, %160 : vector<64x128xf32>
    %162 = vector.shape_cast %161 : vector<64x128xf32> to vector<1x8x8x128xf32>
    %c0_157 = arith.constant 0 : index
    %c0_158 = arith.constant 0 : index
    %c0_159 = arith.constant 0 : index
    %c0_160 = arith.constant 0 : index
    %163 = vector.load %arg9[%c0_157, %c0_158, %c0_159, %c0_160] : memref<1x8x8x128xf32, #tpu.memory_space<vmem>>, vector<1x8x8x128xf32>
    tpu.vector_store %arg9[%c0_157, %c0_158, %c0_159, %c0_160], %162 {strides = array<i32>} : memref<1x8x8x128xf32, #tpu.memory_space<vmem>>, vector<1x8x8x128xf32>,
    return
  }
  func.func @transform_0(%arg0: i32) -> (i32, i32, i32, i32, i32) {
    %c0_i32 = arith.constant 0 : i32
    %c0_i32_0 = arith.constant 0 : i32
    %c0_i32_1 = arith.constant 0 : i32
    %c0_i32_2 = arith.constant 0 : i32
    %c0_i32_3 = arith.constant 0 : i32
    return %arg0, %c0_i32, %c0_i32_0, %c0_i32_1, %c0_i32_2 : i32, i32, i32, i32, i32
  }
  func.func @transform_1(%arg0: i32) -> (i32, i32, i32) {
    %c0_i32 = arith.constant 0 : i32
    %c0_i32_0 = arith.constant 0 : i32
    %c0_i32_1 = arith.constant 0 : i32
    %c0_i32_2 = arith.constant 0 : i32
    return %c0_i32, %c0_i32_0, %c0_i32_1 : i32, i32, i32
  }
  func.func @transform_2(%arg0: i32) -> (i32, i32, i32) {
    %c0_i32 = arith.constant 0 : i32
    %c0_i32_0 = arith.constant 0 : i32
    %c0_i32_1 = arith.constant 0 : i32
    %c0_i32_2 = arith.constant 0 : i32
    return %c0_i32, %c0_i32_0, %c0_i32_1 : i32, i32, i32
  }
  func.func @transform_3(%arg0: i32) -> (i32, i32) {
    %c0_i32 = arith.constant 0 : i32
    %c0_i32_0 = arith.constant 0 : i32
    %c0_i32_1 = arith.constant 0 : i32
    return %c0_i32, %c0_i32_0 : i32, i32
  }
  func.func @transform_4(%arg0: i32) -> (i32, i32) {
    %c0_i32 = arith.constant 0 : i32
    %c0_i32_0 = arith.constant 0 : i32
    %c0_i32_1 = arith.constant 0 : i32
    return %c0_i32, %c0_i32_0 : i32, i32
  }
  func.func @transform_5(%arg0: i32) -> (i32, i32) {
    %c0_i32 = arith.constant 0 : i32
    %c0_i32_0 = arith.constant 0 : i32
    %c0_i32_1 = arith.constant 0 : i32
    return %c0_i32, %c0_i32_0 : i32, i32
  }
  func.func @transform_6(%arg0: i32) -> (i32, i32) {
    %c0_i32 = arith.constant 0 : i32
    %c0_i32_0 = arith.constant 0 : i32
    %c0_i32_1 = arith.constant 0 : i32
    return %c0_i32, %c0_i32_0 : i32, i32
  }
  func.func @transform_7(%arg0: i32) -> (i32, i32, i32, i32) {
    %c0_i32 = arith.constant 0 : i32
    %c0_i32_0 = arith.constant 0 : i32
    %c0_i32_1 = arith.constant 0 : i32
    %c0_i32_2 = arith.constant 0 : i32
    return %arg0, %c0_i32, %c0_i32_0, %c0_i32_1 : i32, i32, i32, i32
  }
  func.func @transform_8(%arg0: i32) -> (i32, i32, i32, i32) {
    %c0_i32 = arith.constant 0 : i32
    %c0_i32_0 = arith.constant 0 : i32
    %c0_i32_1 = arith.constant 0 : i32
    %c0_i32_2 = arith.constant 0 : i32
    return %arg0, %c0_i32, %c0_i32_0, %c0_i32_1 : i32, i32, i32, i32
  }
}

</mosaic_0001>

<llo_original>
// kernel: tpu_custom_call.1
$region0: #{tpu_custom_call.1}
  #allocation0 [shape = 'u32[]', space=smem, size = 0x4, offset = 0x4, fixed_abs, tag = 'smem constant byte address 0x4 - core index']
  #allocation1 [shape = 'u32[144,128]{1,0:T(1,128)}', space=vmem, size = 0x12000, scoped, tag = 'internal scratch']
  #allocation2 [shape = 'f32[10,10,128]{2,1,0:T(8,128)}', space=vmem, size = 0x14000, scoped, tag = 'scratch operand']
  %s0 = inlined_call_operand.vmem [shape: f32[2,4,9,9,128], index: 0, kind: input, shape index: {}]
  %s1 = inlined_call_operand.vmem [shape: bf16[9,128,128], index: 1, kind: input, shape index: {}]
  %s2 = inlined_call_operand.vmem [shape: bf16[9,128,128], index: 2, kind: input, shape index: {}]
  %s3 = inlined_call_operand.vmem [shape: f32[1,128], index: 3, kind: input, shape index: {}]
  %s4 = inlined_call_operand.vmem [shape: f32[1,128], index: 4, kind: input, shape index: {}]
  %s5 = inlined_call_operand.vmem [shape: f32[1,128], index: 5, kind: input, shape index: {}]
  %s6 = inlined_call_operand.vmem [shape: f32[1,128], index: 6, kind: input, shape index: {}]
  %s7 = inlined_call_operand.vmem [shape: bf16[2,8,8,128], index: 7, kind: input, shape index: {}]
  %s8 = inlined_call_operand.hbm [shape: f32[2,8,8,128], index: 8, kind: output, shape index: {}]
  %s9 = sld [smem:[#allocation0]]
  $region65: #{tpu_custom_call.1} parent=0
    _
  %s11 = ssub.s32 1, %s9
  %s12 = scalar_select 0, %s11, %s9
  $region1: #{tpu_custom_call.1} parent=0
    #allocation3 [shape = 'u8[65536]{0}', space=vmem, size = 0x10000, scoped, tag = 'output window, operand 0']
    #allocation4 [shape = 's32[2]{0}', space=sflag, size = 0x8, scoped, tag = 'scoped memory for tpu_custom_call.1']
    %13 = vsyncpa [#allocation4], 0
    %s14 = scalar_lea.sflag [#allocation4], 1
    %15 = vsyncpa %s14, 0
    loop: start=0, step=1, limit=4
    $region2: #{tpu_custom_call.1} parent=1 // loop_pre_header
      _
    $region3: #{tpu_custom_call.1} parent=1 // loop_header
      %s17 = sphi 0, %s21
      %p18 = scmp.ge.s32.totalorder %s17, 4
      %s27 = sphi 0, %s29
      %s30 = sphi 0, %s27
      %s31 = sphi 0, %s30
      %s47 = sphi 0, %s31
      %s51 = sphi 0, %s51
      %s53 = sphi 0, %s51
      %s54 = sphi 0, %s53
      %s68 = sphi 0, %s54
      %s72 = sphi 0, %s72
      %s74 = sphi 0, %s72
      %s75 = sphi 0, %s74
      %s89 = sphi 0, %s75
      %s93 = sphi 0, %s93
      %s95 = sphi 0, %s93
      %s96 = sphi 0, %s95
      %s110 = sphi 0, %s96
      %s114 = sphi 0, %s114
      %s116 = sphi 0, %s114
      %s117 = sphi 0, %s116
      %s131 = sphi 0, %s117
      %s135 = sphi 0, %s135
      %s137 = sphi 0, %s135
      %s138 = sphi 0, %s137
      %s152 = sphi 0, %s138
      %s156 = sphi 0, %s156
      %s158 = sphi 0, %s156
      %s159 = sphi 0, %s158
      %s173 = sphi 0, %s159
      %s179 = sphi 0, %s181
      %s182 = sphi 0, %s179
      %s183 = sphi 0, %s182
      %s199 = sphi 0, %s183
      %s205 = sphi 0, %s207
      %s208 = sphi 0, %s205
      %s209 = sphi 0, %s208
      %s225 = sphi 0, %s209
    $region4: #{tpu_custom_call.1} parent=1 // loop_header_branch
      %20 = sbr.rel (%p18) target = $region8
    $region5: #{tpu_custom_call.1} parent=1 // loop_body
      %s22 = ssub.s32 %s17, 1
      %s23 = ssub.s32 %s17, 2
      %s24 = sadd.s32 %s17, 1
      %s25 = ssub.s32 %s17, %s24
      %p26 = scmp.eq.s32.totalorder %s25, 0
      %s28 = sadd.s32 %s27, 1
      %s29 = scalar_select %p26, %s27, %s28
      %p32 = pneg %p26
      %p33 = scmp.eq.s32.totalorder %s17, 1
      %p34 = por %p32, %p33
      %p35 = scmp.ne.s32.totalorder %s27, %s30
      %p36 = scmp.eq.s32.totalorder %s17, 0
      %p37 = por %p35, %p36
      %p38 = scmp.ne.s32.totalorder %s27, %s30
      %p39 = scmp.eq.s32.totalorder %s22, 1
      %p40 = por %p38, %p39
      %p41 = scmp.ne.s32.totalorder %s30, %s31
      %p42 = scmp.eq.s32.totalorder %s22, 0
      %p43 = por %p41, %p42
      %p44 = scmp.ne.s32.totalorder %s30, %s31
      %p45 = scmp.eq.s32.totalorder %s23, 1
      %p46 = por %p44, %p45
      %p48 = scmp.ne.s32.totalorder %s31, %s47
      %p49 = scmp.eq.s32.totalorder %s23, 0
      %p50 = por %p48, %p49
      %s52 = sadd.s32 %s51, 1
      %p55 = scmp.eq.s32.totalorder %s17, 1
      %p56 = scmp.ne.s32.totalorder %s51, %s53
      %p57 = scmp.eq.s32.totalorder %s17, 0
      %p58 = por %p56, %p57
      %p59 = scmp.ne.s32.totalorder %s51, %s53
      %p60 = scmp.eq.s32.totalorder %s22, 1
      %p61 = por %p59, %p60
      %p62 = scmp.ne.s32.totalorder %s53, %s54
      %p63 = scmp.eq.s32.totalorder %s22, 0
      %p64 = por %p62, %p63
      %p65 = scmp.ne.s32.totalorder %s53, %s54
      %p66 = scmp.eq.s32.totalorder %s23, 1
      %p67 = por %p65, %p66
      %p69 = scmp.ne.s32.totalorder %s54, %s68
      %p70 = scmp.eq.s32.totalorder %s23, 0
      %p71 = por %p69, %p70
      %s73 = sadd.s32 %s72, 1
      %p76 = scmp.eq.s32.totalorder %s17, 1
      %p77 = scmp.ne.s32.totalorder %s72, %s74
      %p78 = scmp.eq.s32.totalorder %s17, 0
      %p79 = por %p77, %p78
      %p80 = scmp.ne.s32.totalorder %s72, %s74
      %p81 = scmp.eq.s32.totalorder %s22, 1
      %p82 = por %p80, %p81
      %p83 = scmp.ne.s32.totalorder %s74, %s75
      %p84 = scmp.eq.s32.totalorder %s22, 0
      %p85 = por %p83, %p84
      %p86 = scmp.ne.s32.totalorder %s74, %s75
      %p87 = scmp.eq.s32.totalorder %s23, 1
      %p88 = por %p86, %p87
      %p90 = scmp.ne.s32.totalorder %s75, %s89
      %p91 = scmp.eq.s32.totalorder %s23, 0
      %p92 = por %p90, %p91
      %s94 = sadd.s32 %s93, 1
      %p97 = scmp.eq.s32.totalorder %s17, 1
      %p98 = scmp.ne.s32.totalorder %s93, %s95
      %p99 = scmp.eq.s32.totalorder %s17, 0
      %p100 = por %p98, %p99
      %p101 = scmp.ne.s32.totalorder %s93, %s95
      %p102 = scmp.eq.s32.totalorder %s22, 1
      %p103 = por %p101, %p102
      %p104 = scmp.ne.s32.totalorder %s95, %s96
      %p105 = scmp.eq.s32.totalorder %s22, 0
      %p106 = por %p104, %p105
      %p107 = scmp.ne.s32.totalorder %s95, %s96
      %p108 = scmp.eq.s32.totalorder %s23, 1
      %p109 = por %p107, %p108
      %p111 = scmp.ne.s32.totalorder %s96, %s110
      %p112 = scmp.eq.s32.totalorder %s23, 0
      %p113 = por %p111, %p112
      %s115 = sadd.s32 %s114, 1
      %p118 = scmp.eq.s32.totalorder %s17, 1
      %p119 = scmp.ne.s32.totalorder %s114, %s116
      %p120 = scmp.eq.s32.totalorder %s17, 0
      %p121 = por %p119, %p120
      %p122 = scmp.ne.s32.totalorder %s114, %s116
      %p123 = scmp.eq.s32.totalorder %s22, 1
      %p124 = por %p122, %p123
      %p125 = scmp.ne.s32.totalorder %s116, %s117
      %p126 = scmp.eq.s32.totalorder %s22, 0
      %p127 = por %p125, %p126
      %p128 = scmp.ne.s32.totalorder %s116, %s117
      %p129 = scmp.eq.s32.totalorder %s23, 1
      %p130 = por %p128, %p129
      %p132 = scmp.ne.s32.totalorder %s117, %s131
      %p133 = scmp.eq.s32.totalorder %s23, 0
      %p134 = por %p132, %p133
      %s136 = sadd.s32 %s135, 1
      %p139 = scmp.eq.s32.totalorder %s17, 1
      %p140 = scmp.ne.s32.totalorder %s135, %s137
      %p141 = scmp.eq.s32.totalorder %s17, 0
      %p142 = por %p140, %p141
      %p143 = scmp.ne.s32.totalorder %s135, %s137
      %p144 = scmp.eq.s32.totalorder %s22, 1
      %p145 = por %p143, %p144
      %p146 = scmp.ne.s32.totalorder %s137, %s138
      %p147 = scmp.eq.s32.totalorder %s22, 0
      %p148 = por %p146, %p147
      %p149 = scmp.ne.s32.totalorder %s137, %s138
      %p150 = scmp.eq.s32.totalorder %s23, 1
      %p151 = por %p149, %p150
      %p153 = scmp.ne.s32.totalorder %s138, %s152
      %p154 = scmp.eq.s32.totalorder %s23, 0
      %p155 = por %p153, %p154
      %s157 = sadd.s32 %s156, 1
      %p160 = scmp.eq.s32.totalorder %s17, 1
      %p161 = scmp.ne.s32.totalorder %s156, %s158
      %p162 = scmp.eq.s32.totalorder %s17, 0
      %p163 = por %p161, %p162
      %p164 = scmp.ne.s32.totalorder %s156, %s158
      %p165 = scmp.eq.s32.totalorder %s22, 1
      %p166 = por %p164, %p165
      %p167 = scmp.ne.s32.totalorder %s158, %s159
      %p168 = scmp.eq.s32.totalorder %s22, 0
      %p169 = por %p167, %p168
      %p170 = scmp.ne.s32.totalorder %s158, %s159
      %p171 = scmp.eq.s32.totalorder %s23, 1
      %p172 = por %p170, %p171
      %p174 = scmp.ne.s32.totalorder %s159, %s173
      %p175 = scmp.eq.s32.totalorder %s23, 0
      %p176 = por %p174, %p175
      %s177 = ssub.s32 %s17, %s24
      %p178 = scmp.eq.s32.totalorder %s177, 0
      %s180 = sadd.s32 %s179, 1
      %s181 = scalar_select %p178, %s179, %s180
      %p184 = pneg %p178
      %p185 = scmp.eq.s32.totalorder %s17, 1
      %p186 = por %p184, %p185
      %p187 = scmp.ne.s32.totalorder %s179, %s182
      %p188 = scmp.eq.s32.totalorder %s17, 0
      %p189 = por %p187, %p188
      %p190 = scmp.ne.s32.totalorder %s179, %s182
      %p191 = scmp.eq.s32.totalorder %s22, 1
      %p192 = por %p190, %p191
      %p193 = scmp.ne.s32.totalorder %s182, %s183
      %p194 = scmp.eq.s32.totalorder %s22, 0
      %p195 = por %p193, %p194
      %p196 = scmp.ne.s32.totalorder %s182, %s183
      %p197 = scmp.eq.s32.totalorder %s23, 1
      %p198 = por %p196, %p197
      %p200 = scmp.ne.s32.totalorder %s183, %s199
      %p201 = scmp.eq.s32.totalorder %s23, 0
      %p202 = por %p200, %p201
      %s203 = ssub.s32 %s17, %s24
      %p204 = scmp.eq.s32.totalorder %s203, 0
      %s206 = sadd.s32 %s205, 1
      %s207 = scalar_select %p204, %s205, %s206
      %p210 = pneg %p204
      %p211 = scmp.eq.s32.totalorder %s17, 1
      %p212 = por %p210, %p211
      %p213 = scmp.ne.s32.totalorder %s205, %s208
      %p214 = scmp.eq.s32.totalorder %s17, 0
      %p215 = por %p213, %p214
      %p216 = scmp.ne.s32.totalorder %s205, %s208
      %p217 = scmp.eq.s32.totalorder %s22, 1
      %p218 = por %p216, %p217
      %p219 = scmp.ne.s32.totalorder %s208, %s209
      %p220 = scmp.eq.s32.totalorder %s22, 0
      %p221 = por %p219, %p220
      %p222 = scmp.ne.s32.totalorder %s208, %s209
      %p223 = scmp.eq.s32.totalorder %s23, 1
      %p224 = por %p222, %p223
      %p226 = scmp.ne.s32.totalorder %s209, %s225
      %p227 = scmp.eq.s32.totalorder %s23, 0
      %p228 = por %p226, %p227
      %p229 = scmp.le.s32.totalorder 1, %s17
      %p230 = scmp.lt.s32.totalorder %s17, 3
      %p231 = pnand %p229, %p230
      %p232 = pneg %p231
      // Predicated region
      $region9: #{tpu_custom_call.1} parent=5 // pred_check
        _
      $region10: #{tpu_custom_call.1} parent=5 // pred_check_branch
        %234 = sbr.rel (%p231) target = $region12
      $region11: #{tpu_custom_call.1} parent=5 // pred_region
        %s235 = ssub.s32 %s17, 1
        // Predicated region
        $region13: #{tpu_custom_call.1} parent=11 // pred_check
          %p236 = pneg %p64
        $region14: #{tpu_custom_call.1} parent=11 // pred_check_branch
          %238 = sbr.rel (%p236) target = $region16
        $region15: #{tpu_custom_call.1} parent=11 // pred_region
          _
        $region16: #{tpu_custom_call.1} parent=11 // pred_fallthru
          _
        // Predicated region
        $region17: #{tpu_custom_call.1} parent=11 // pred_check
          %p239 = pneg %p85
        $region18: #{tpu_custom_call.1} parent=11 // pred_check_branch
          %241 = sbr.rel (%p239) target = $region20
        $region19: #{tpu_custom_call.1} parent=11 // pred_region
          _
        $region20: #{tpu_custom_call.1} parent=11 // pred_fallthru
          _
        // Predicated region
        $region21: #{tpu_custom_call.1} parent=11 // pred_check
          %p242 = pneg %p106
        $region22: #{tpu_custom_call.1} parent=11 // pred_check_branch
          %244 = sbr.rel (%p242) target = $region24
        $region23: #{tpu_custom_call.1} parent=11 // pred_region
          _
        $region24: #{tpu_custom_call.1} parent=11 // pred_fallthru
          _
        // Predicated region
        $region25: #{tpu_custom_call.1} parent=11 // pred_check
          %p245 = pneg %p127
        $region26: #{tpu_custom_call.1} parent=11 // pred_check_branch
          %247 = sbr.rel (%p245) target = $region28
        $region27: #{tpu_custom_call.1} parent=11 // pred_region
          _
        $region28: #{tpu_custom_call.1} parent=11 // pred_fallthru
          _
        // Predicated region
        $region29: #{tpu_custom_call.1} parent=11 // pred_check
          %p248 = pneg %p148
        $region30: #{tpu_custom_call.1} parent=11 // pred_check_branch
          %250 = sbr.rel (%p248) target = $region32
        $region31: #{tpu_custom_call.1} parent=11 // pred_region
          _
        $region32: #{tpu_custom_call.1} parent=11 // pred_fallthru
          _
        // Predicated region
        $region33: #{tpu_custom_call.1} parent=11 // pred_check
          %p251 = pneg %p169
        $region34: #{tpu_custom_call.1} parent=11 // pred_check_branch
          %253 = sbr.rel (%p251) target = $region36
        $region35: #{tpu_custom_call.1} parent=11 // pred_region
          _
        $region36: #{tpu_custom_call.1} parent=11 // pred_fallthru
          _
      $region12: #{tpu_custom_call.1} parent=5 // pred_fallthru
        _
      %p254 = scmp.lt.s32.totalorder %s17, 2
      // Predicated region
      $region37: #{tpu_custom_call.1} parent=5 // pred_check
        %p255 = pneg %p254
      $region38: #{tpu_custom_call.1} parent=5 // pred_check_branch
        %257 = sbr.rel (%p255) target = $region40
      $region39: #{tpu_custom_call.1} parent=5 // pred_region
        // Predicated region
        $region41: #{tpu_custom_call.1} parent=39 // pred_check
          %p258 = pneg %p37
        $region42: #{tpu_custom_call.1} parent=39 // pred_check_branch
          %260 = sbr.rel (%p258) target = $region44
        $region43: #{tpu_custom_call.1} parent=39 // pred_region
          %p261 = scmp.lt.s32.totalorder %s17, 1
          %s262 = scalar_select %p261, %s17, 1
          %s263 = smul.addr %s262, 72
          %s264 = smul.addr %s263, 8
          %s265 = scalar_lea.vmem %s0, %s264
        $region44: #{tpu_custom_call.1} parent=39 // pred_fallthru
          _
        // Predicated region
        $region45: #{tpu_custom_call.1} parent=39 // pred_check
          %p266 = pneg %p189
        $region46: #{tpu_custom_call.1} parent=39 // pred_check_branch
          %268 = sbr.rel (%p266) target = $region48
        $region47: #{tpu_custom_call.1} parent=39 // pred_region
          %p269 = scmp.lt.s32.totalorder %s17, 1
          %s270 = scalar_select %p269, %s17, 1
          %s271 = smul.addr %s270, 8
          %s272 = smul.addr %s271, 4
          %s273 = scalar_lea.vmem %s7, %s272
        $region48: #{tpu_custom_call.1} parent=39 // pred_fallthru
          _
      $region40: #{tpu_custom_call.1} parent=5 // pred_fallthru
        _
      %p274 = scmp.le.s32.totalorder 1, %s17
      %p275 = scmp.lt.s32.totalorder %s17, 3
      %p276 = pnand %p274, %p275
      %p277 = pneg %p276
      // Predicated region
      $region49: #{tpu_custom_call.1} parent=5 // pred_check
        _
      $region50: #{tpu_custom_call.1} parent=5 // pred_check_branch
        %279 = sbr.rel (%p276) target = $region52
      $region51: #{tpu_custom_call.1} parent=5 // pred_region
        %s280 = ssub.s32 %s17, 1
        %p281 = scmp.lt.s32.totalorder %s22, 1
        %s282 = scalar_select %p281, %s22, 1
        %s283 = smul.addr %s282, 72
        %s284 = smul.addr %s283, 8
        %s285 = scalar_lea.vmem %s0, %s284
        %p286 = pneg %p43
        %p287 = pneg %p40
        %p288 = pneg %p64
        %p289 = pneg %p61
        %p290 = pneg %p85
        %p291 = pneg %p82
        %p292 = pneg %p106
        %p293 = pneg %p103
        %p294 = pneg %p127
        %p295 = pneg %p124
        %p296 = pneg %p148
        %p297 = pneg %p145
        %p298 = pneg %p169
        %p299 = pneg %p166
        %p300 = scmp.lt.s32.totalorder %s22, 1
        %s301 = scalar_select %p300, %s22, 1
        %s302 = smul.addr %s301, 8
        %s303 = smul.addr %s302, 4
        %s304 = scalar_lea.vmem %s7, %s303
        %p305 = pneg %p195
        %p306 = pneg %p192
        %p307 = pneg %p221
        %p308 = pneg %p218
        %s309 = sand.u32 %s208, 1
        %s310 = scalar_lea.sflag [#allocation4], %s309
        %s311 = sand.u32 %s208, 1
        %s312 = smul.addr %s311, 64
        %s313 = scalar_lea.vmem [#allocation3], %s312
        %p314 = scmp.lt.s32.totalorder %s22, 1
        %s315 = scalar_select %p314, %s22, 1
        %s316 = smul.addr %s315, 72
        %s317 = smul.addr %s316, 8
        %s318 = scalar_lea.vmem %s0, %s317
        %p319 = scmp.lt.s32.totalorder %s22, 1
        %s320 = scalar_select %p319, %s22, 1
        %s321 = smul.addr %s320, 8
        %s322 = smul.addr %s321, 4
        %s323 = scalar_lea.vmem %s7, %s322
        %v325 = vld [vmem:[%s318] sm:$0xff]
        %v326 = vld [vmem:[%s318 + $0x10] sm:$0xff]
        %v327 = vld [vmem:[%s318 + $0x20] sm:$0xff]
        %v328 = vld [vmem:[%s318 + $0x30] sm:$0xff]
        %v329 = vld [vmem:[%s318 + $0x40] sm:$0xff]
        %v330 = vld [vmem:[%s318 + $0x50] sm:$0xff]
        %v331 = vld [vmem:[%s318 + $0x60] sm:$0xff]
        %v332 = vld [vmem:[%s318 + $0x70] sm:$0xff]
        %v333 = vpack.c.bf16 %v326, %v325
        %v334 = vpack.c.bf16 %v328, %v327
        %v335 = vpack.c.bf16 %v330, %v329
        %v336 = vpack.c.bf16 %v332, %v331
        %v337 = vld [vmem:[%s1] sm:$0xf]
        %v338 = vld [vmem:[%s1 + $0x4] sm:$0xf]
        %v339 = vld [vmem:[%s1 + $0x8] sm:$0xf]
        %v340 = vld [vmem:[%s1 + $0xc] sm:$0xf]
        %v341 = vld [vmem:[%s1 + $0x10] sm:$0xf]
        %v342 = vld [vmem:[%s1 + $0x14] sm:$0xf]
        %v343 = vld [vmem:[%s1 + $0x18] sm:$0xf]
        %v344 = vld [vmem:[%s1 + $0x1c] sm:$0xf]
        %v345 = vld [vmem:[%s1 + $0x20] sm:$0xf]
        %v346 = vld [vmem:[%s1 + $0x24] sm:$0xf]
        %v347 = vld [vmem:[%s1 + $0x28] sm:$0xf]
        %v348 = vld [vmem:[%s1 + $0x2c] sm:$0xf]
        %v349 = vld [vmem:[%s1 + $0x30] sm:$0xf]
        %v350 = vld [vmem:[%s1 + $0x34] sm:$0xf]
        %v351 = vld [vmem:[%s1 + $0x38] sm:$0xf]
        %v352 = vld [vmem:[%s1 + $0x3c] sm:$0xf]
        %s353 = scalar_lea.vmem %s318, 144
        %v354 = vld [vmem:[%s353] sm:$0xff]
        %v355 = vld [vmem:[%s353 + $0x10] sm:$0xff]
        %v356 = vld [vmem:[%s353 + $0x20] sm:$0xff]
        %v357 = vld [vmem:[%s353 + $0x30] sm:$0xff]
        %v358 = vld [vmem:[%s353 + $0x40] sm:$0xff]
        %v359 = vld [vmem:[%s353 + $0x50] sm:$0xff]
        %v360 = vld [vmem:[%s353 + $0x60] sm:$0xff]
        %v361 = vld [vmem:[%s353 + $0x70] sm:$0xff]
        %v362 = vpack.c.bf16 %v355, %v354
        %v363 = vpack.c.bf16 %v357, %v356
        %v364 = vpack.c.bf16 %v359, %v358
        %v365 = vpack.c.bf16 %v361, %v360
        %s366 = scalar_lea.vmem %s1, 64
        %v367 = vld [vmem:[%s366] sm:$0xf]
        %v368 = vld [vmem:[%s366 + $0x4] sm:$0xf]
        %v369 = vld [vmem:[%s366 + $0x8] sm:$0xf]
        %v370 = vld [vmem:[%s366 + $0xc] sm:$0xf]
        %v371 = vld [vmem:[%s366 + $0x10] sm:$0xf]
        %v372 = vld [vmem:[%s366 + $0x14] sm:$0xf]
        %v373 = vld [vmem:[%s366 + $0x18] sm:$0xf]
        %v374 = vld [vmem:[%s366 + $0x1c] sm:$0xf]
        %v375 = vld [vmem:[%s366 + $0x20] sm:$0xf]
        %v376 = vld [vmem:[%s366 + $0x24] sm:$0xf]
        %v377 = vld [vmem:[%s366 + $0x28] sm:$0xf]
        %v378 = vld [vmem:[%s366 + $0x2c] sm:$0xf]
        %v379 = vld [vmem:[%s366 + $0x30] sm:$0xf]
        %v380 = vld [vmem:[%s366 + $0x34] sm:$0xf]
        %v381 = vld [vmem:[%s366 + $0x38] sm:$0xf]
        %v382 = vld [vmem:[%s366 + $0x3c] sm:$0xf]
        %v399 = vunpack.c.l.b16 %v367
        %v400 = vunpack.c.l.b16 %v368
        %v401 = vunpack.c.l.b16 %v369
        %v402 = vunpack.c.l.b16 %v370
        %v403 = vunpack.c.l.b16 %v371
        %v404 = vunpack.c.l.b16 %v372
        %v405 = vunpack.c.l.b16 %v373
        %v406 = vunpack.c.l.b16 %v374
        %v407 = vunpack.c.l.b16 %v375
        %v408 = vunpack.c.l.b16 %v376
        %v409 = vunpack.c.l.b16 %v377
        %v410 = vunpack.c.l.b16 %v378
        %v411 = vunpack.c.l.b16 %v379
        %v412 = vunpack.c.l.b16 %v380
        %v413 = vunpack.c.l.b16 %v381
        %v414 = vunpack.c.l.b16 %v382
        %v415 = vpack.c.b16 %v400, %v399
        %v416 = vpack.c.b16 %v402, %v401
        %v417 = vpack.c.b16 %v404, %v403
        %v418 = vpack.c.b16 %v406, %v405
        %v419 = vpack.c.b16 %v408, %v407
        %v420 = vpack.c.b16 %v410, %v409
        %v421 = vpack.c.b16 %v412, %v411
        %v422 = vpack.c.b16 %v414, %v413
        %431 = vmatprep.subr.bf16.mxu0 0
        %432 = vmatpush1.bf16.msra.mxu0 %v422
        %433 = vmatprep.subr.bf16.mxu0 0
        %434 = vmatpush1.bf16.msra.mxu0 %v421
        %435 = vmatprep.subr.bf16.mxu0 0
        %436 = vmatpush1.bf16.msra.mxu0 %v420
        %437 = vmatprep.subr.bf16.mxu0 0
        %438 = vmatpush1.bf16.msra.mxu0 %v419
        %439 = vmatprep.subr.bf16.mxu0 0
        %440 = vmatpush1.bf16.msra.mxu0 %v418
        %441 = vmatprep.subr.bf16.mxu0 0
        %442 = vmatpush1.bf16.msra.mxu0 %v417
        %443 = vmatprep.subr.bf16.mxu0 0
        %444 = vmatpush1.bf16.msra.mxu0 %v416
        %445 = vmatprep.subr.bf16.mxu0 0
        %446 = vmatpush1.bf16.msra.mxu0 %v415
        %447 = vmatprep.subr.bf16.mxu0 0
        %448 = vmatpush2.bf16.msra.mxu0 0
        %449 = vmatprep.subr.bf16.mxu0 0
        %450 = vmatpush2.bf16.msra.mxu0 0
        %451 = vmatprep.subr.bf16.mxu0 0
        %452 = vmatpush2.bf16.msra.mxu0 0
        %453 = vmatprep.subr.bf16.mxu0 0
        %454 = vmatpush2.bf16.msra.mxu0 0
        %455 = vmatprep.subr.bf16.mxu0 0
        %456 = vmatpush2.bf16.msra.mxu0 0
        %457 = vmatprep.subr.bf16.mxu0 0
        %458 = vmatpush2.bf16.msra.mxu0 0
        %459 = vmatprep.subr.bf16.mxu0 0
        %460 = vmatpush2.bf16.msra.mxu0 0
        %461 = vmatprep.subr.bf16.mxu0 0
        %462 = vmatpush2.bf16.msra.mxu0 0
        %463 = vmatprep.mubr.bf16.mxu0 0
        %464 = vmatmul.mubr.bf16.gmra.mxu0 %v362
        %v465 = vpop.f32.mrf.mxu0
        %v466 = vadd.f32 0.0, %v465
        %v467 = vpop.f32.mrf.mxu0
        %v468 = vpop.f32.mrf.mxu0
        %v469 = vadd.f32 0.0, %v468
        %v470 = vpop.f32.mrf.mxu0
        %471 = vmatprep.mubr.bf16.mxu0 0
        %472 = vmatmul.mubr.bf16.gmra.mxu0 %v363
        %v473 = vpop.f32.mrf.mxu0
        %v474 = vadd.f32 0.0, %v473
        %v475 = vpop.f32.mrf.mxu0
        %v476 = vpop.f32.mrf.mxu0
        %v477 = vadd.f32 0.0, %v476
        %v478 = vpop.f32.mrf.mxu0
        %479 = vmatprep.mubr.bf16.mxu0 0
        %480 = vmatmul.mubr.bf16.gmra.mxu0 %v364
        %v481 = vpop.f32.mrf.mxu0
        %v482 = vadd.f32 0.0, %v481
        %v483 = vpop.f32.mrf.mxu0
        %v484 = vpop.f32.mrf.mxu0
        %v485 = vadd.f32 0.0, %v484
        %v486 = vpop.f32.mrf.mxu0
        %487 = vmatprep.mubr.bf16.mxu0 0
        %488 = vmatmul.mubr.bf16.gmra.mxu0 %v365
        %v489 = vpop.f32.mrf.mxu0
        %v490 = vadd.f32 0.0, %v489
        %v491 = vpop.f32.mrf.mxu0
        %v492 = vpop.f32.mrf.mxu0
        %v493 = vadd.f32 0.0, %v492
        %v494 = vpop.f32.mrf.mxu0
        %495 = vdwg.mxu0
        %v512 = vunpack.c.l.b16 %v337
        %v513 = vunpack.c.l.b16 %v338
        %v514 = vunpack.c.l.b16 %v339
        %v515 = vunpack.c.l.b16 %v340
        %v516 = vunpack.c.l.b16 %v341
        %v517 = vunpack.c.l.b16 %v342
        %v518 = vunpack.c.l.b16 %v343
        %v519 = vunpack.c.l.b16 %v344
        %v520 = vunpack.c.l.b16 %v345
        %v521 = vunpack.c.l.b16 %v346
        %v522 = vunpack.c.l.b16 %v347
        %v523 = vunpack.c.l.b16 %v348
        %v524 = vunpack.c.l.b16 %v349
        %v525 = vunpack.c.l.b16 %v350
        %v526 = vunpack.c.l.b16 %v351
        %v527 = vunpack.c.l.b16 %v352
        %v528 = vpack.c.b16 %v513, %v512
        %v529 = vpack.c.b16 %v515, %v514
        %v530 = vpack.c.b16 %v517, %v516
        %v531 = vpack.c.b16 %v519, %v518
        %v532 = vpack.c.b16 %v521, %v520
        %v533 = vpack.c.b16 %v523, %v522
        %v534 = vpack.c.b16 %v525, %v524
        %v535 = vpack.c.b16 %v527, %v526
        %544 = vmatprep.subr.bf16.mxu0 0
        %545 = vmatpush1.bf16.msra.mxu0 %v535
        %546 = vmatprep.subr.bf16.mxu0 0
        %547 = vmatpush1.bf16.msra.mxu0 %v534
        %548 = vmatprep.subr.bf16.mxu0 0
        %549 = vmatpush1.bf16.msra.mxu0 %v533
        %550 = vmatprep.subr.bf16.mxu0 0
        %551 = vmatpush1.bf16.msra.mxu0 %v532
        %552 = vmatprep.subr.bf16.mxu0 0
        %553 = vmatpush1.bf16.msra.mxu0 %v531
        %554 = vmatprep.subr.bf16.mxu0 0
        %555 = vmatpush1.bf16.msra.mxu0 %v530
        %556 = vmatprep.subr.bf16.mxu0 0
        %557 = vmatpush1.bf16.msra.mxu0 %v529
        %558 = vmatprep.subr.bf16.mxu0 0
        %559 = vmatpush1.bf16.msra.mxu0 %v528
        %560 = vmatprep.subr.bf16.mxu0 0
        %561 = vmatpush2.bf16.msra.mxu0 0
        %562 = vmatprep.subr.bf16.mxu0 0
        %563 = vmatpush2.bf16.msra.mxu0 0
        %564 = vmatprep.subr.bf16.mxu0 0
        %565 = vmatpush2.bf16.msra.mxu0 0
        %566 = vmatprep.subr.bf16.mxu0 0
        %567 = vmatpush2.bf16.msra.mxu0 0
        %568 = vmatprep.subr.bf16.mxu0 0
        %569 = vmatpush2.bf16.msra.mxu0 0
        %570 = vmatprep.subr.bf16.mxu0 0
        %571 = vmatpush2.bf16.msra.mxu0 0
        %572 = vmatprep.subr.bf16.mxu0 0
        %573 = vmatpush2.bf16.msra.mxu0 0
        %574 = vmatprep.subr.bf16.mxu0 0
        %575 = vmatpush2.bf16.msra.mxu0 0
        %576 = vmatprep.mubr.bf16.mxu0 0
        %577 = vmatmul.mubr.bf16.gmra.mxu0 %v333
        %v578 = vpop.f32.mrf.mxu0
        %v579 = vadd.f32 %v466, %v578
        %v580 = vpop.f32.mrf.mxu0
        %v581 = vpop.f32.mrf.mxu0
        %v582 = vadd.f32 %v469, %v581
        %v583 = vpop.f32.mrf.mxu0
        %584 = vmatprep.mubr.bf16.mxu0 0
        %585 = vmatmul.mubr.bf16.gmra.mxu0 %v334
        %v586 = vpop.f32.mrf.mxu0
        %v587 = vadd.f32 %v474, %v586
        %v588 = vpop.f32.mrf.mxu0
        %v589 = vpop.f32.mrf.mxu0
        %v590 = vadd.f32 %v477, %v589
        %v591 = vpop.f32.mrf.mxu0
        %592 = vmatprep.mubr.bf16.mxu0 0
        %593 = vmatmul.mubr.bf16.gmra.mxu0 %v335
        %v594 = vpop.f32.mrf.mxu0
        %v595 = vadd.f32 %v482, %v594
        %v596 = vpop.f32.mrf.mxu0
        %v597 = vpop.f32.mrf.mxu0
        %v598 = vadd.f32 %v485, %v597
        %v599 = vpop.f32.mrf.mxu0
        %600 = vmatprep.mubr.bf16.mxu0 0
        %601 = vmatmul.mubr.bf16.gmra.mxu0 %v336
        %v602 = vpop.f32.mrf.mxu0
        %v603 = vadd.f32 %v490, %v602
        %v604 = vpop.f32.mrf.mxu0
        %v605 = vpop.f32.mrf.mxu0
        %v606 = vadd.f32 %v493, %v605
        %v607 = vpop.f32.mrf.mxu0
        %608 = vdwg.mxu0
        %v609 = vld [vmem:[%s318 + $0x1] sm:$0xff]
        %v610 = vld [vmem:[%s318 + $0x11] sm:$0xff]
        %v611 = vld [vmem:[%s318 + $0x21] sm:$0xff]
        %v612 = vld [vmem:[%s318 + $0x31] sm:$0xff]
        %v613 = vld [vmem:[%s318 + $0x41] sm:$0xff]
        %v614 = vld [vmem:[%s318 + $0x51] sm:$0xff]
        %v615 = vld [vmem:[%s318 + $0x61] sm:$0xff]
        %v616 = vld [vmem:[%s318 + $0x71] sm:$0xff]
        %v617 = vpack.c.bf16 %v610, %v609
        %v618 = vpack.c.bf16 %v612, %v611
        %v619 = vpack.c.bf16 %v614, %v613
        %v620 = vpack.c.bf16 %v616, %v615
        %s621 = scalar_lea.vmem %s1, 128
        %v622 = vld [vmem:[%s621] sm:$0xf]
        %v623 = vld [vmem:[%s621 + $0x4] sm:$0xf]
        %v624 = vld [vmem:[%s621 + $0x8] sm:$0xf]
        %v625 = vld [vmem:[%s621 + $0xc] sm:$0xf]
        %v626 = vld [vmem:[%s621 + $0x10] sm:$0xf]
        %v627 = vld [vmem:[%s621 + $0x14] sm:$0xf]
        %v628 = vld [vmem:[%s621 + $0x18] sm:$0xf]
        %v629 = vld [vmem:[%s621 + $0x1c] sm:$0xf]
        %v630 = vld [vmem:[%s621 + $0x20] sm:$0xf]
        %v631 = vld [vmem:[%s621 + $0x24] sm:$0xf]
        %v632 = vld [vmem:[%s621 + $0x28] sm:$0xf]
        %v633 = vld [vmem:[%s621 + $0x2c] sm:$0xf]
        %v634 = vld [vmem:[%s621 + $0x30] sm:$0xf]
        %v635 = vld [vmem:[%s621 + $0x34] sm:$0xf]
        %v636 = vld [vmem:[%s621 + $0x38] sm:$0xf]
        %v637 = vld [vmem:[%s621 + $0x3c] sm:$0xf]
        %v654 = vunpack.c.l.b16 %v622
        %v655 = vunpack.c.l.b16 %v623
        %v656 = vunpack.c.l.b16 %v624
        %v657 = vunpack.c.l.b16 %v625
        %v658 = vunpack.c.l.b16 %v626
        %v659 = vunpack.c.l.b16 %v627
        %v660 = vunpack.c.l.b16 %v628
        %v661 = vunpack.c.l.b16 %v629
        %v662 = vunpack.c.l.b16 %v630
        %v663 = vunpack.c.l.b16 %v631
        %v664 = vunpack.c.l.b16 %v632
        %v665 = vunpack.c.l.b16 %v633
        %v666 = vunpack.c.l.b16 %v634
        %v667 = vunpack.c.l.b16 %v635
        %v668 = vunpack.c.l.b16 %v636
        %v669 = vunpack.c.l.b16 %v637
        %v670 = vpack.c.b16 %v655, %v654
        %v671 = vpack.c.b16 %v657, %v656
        %v672 = vpack.c.b16 %v659, %v658
        %v673 = vpack.c.b16 %v661, %v660
        %v674 = vpack.c.b16 %v663, %v662
        %v675 = vpack.c.b16 %v665, %v664
        %v676 = vpack.c.b16 %v667, %v666
        %v677 = vpack.c.b16 %v669, %v668
        %686 = vmatprep.subr.bf16.mxu0 0
        %687 = vmatpush1.bf16.msra.mxu0 %v677
        %688 = vmatprep.subr.bf16.mxu0 0
        %689 = vmatpush1.bf16.msra.mxu0 %v676
        %690 = vmatprep.subr.bf16.mxu0 0
        %691 = vmatpush1.bf16.msra.mxu0 %v675
        %692 = vmatprep.subr.bf16.mxu0 0
        %693 = vmatpush1.bf16.msra.mxu0 %v674
        %694 = vmatprep.subr.bf16.mxu0 0
        %695 = vmatpush1.bf16.msra.mxu0 %v673
        %696 = vmatprep.subr.bf16.mxu0 0
        %697 = vmatpush1.bf16.msra.mxu0 %v672
        %698 = vmatprep.subr.bf16.mxu0 0
        %699 = vmatpush1.bf16.msra.mxu0 %v671
        %700 = vmatprep.subr.bf16.mxu0 0
        %701 = vmatpush1.bf16.msra.mxu0 %v670
        %702 = vmatprep.subr.bf16.mxu0 0
        %703 = vmatpush2.bf16.msra.mxu0 0
        %704 = vmatprep.subr.bf16.mxu0 0
        %705 = vmatpush2.bf16.msra.mxu0 0
        %706 = vmatprep.subr.bf16.mxu0 0
        %707 = vmatpush2.bf16.msra.mxu0 0
        %708 = vmatprep.subr.bf16.mxu0 0
        %709 = vmatpush2.bf16.msra.mxu0 0
        %710 = vmatprep.subr.bf16.mxu0 0
        %711 = vmatpush2.bf16.msra.mxu0 0
        %712 = vmatprep.subr.bf16.mxu0 0
        %713 = vmatpush2.bf16.msra.mxu0 0
        %714 = vmatprep.subr.bf16.mxu0 0
        %715 = vmatpush2.bf16.msra.mxu0 0
        %716 = vmatprep.subr.bf16.mxu0 0
        %717 = vmatpush2.bf16.msra.mxu0 0
        %718 = vmatprep.mubr.bf16.mxu0 0
        %719 = vmatmul.mubr.bf16.gmra.mxu0 %v617
        %v720 = vpop.f32.mrf.mxu0
        %v721 = vadd.f32 0.0, %v720
        %v722 = vpop.f32.mrf.mxu0
        %v723 = vpop.f32.mrf.mxu0
        %v724 = vadd.f32 0.0, %v723
        %v725 = vpop.f32.mrf.mxu0
        %726 = vmatprep.mubr.bf16.mxu0 0
        %727 = vmatmul.mubr.bf16.gmra.mxu0 %v618
        %v728 = vpop.f32.mrf.mxu0
        %v729 = vadd.f32 0.0, %v728
        %v730 = vpop.f32.mrf.mxu0
        %v731 = vpop.f32.mrf.mxu0
        %v732 = vadd.f32 0.0, %v731
        %v733 = vpop.f32.mrf.mxu0
        %734 = vmatprep.mubr.bf16.mxu0 0
        %735 = vmatmul.mubr.bf16.gmra.mxu0 %v619
        %v736 = vpop.f32.mrf.mxu0
        %v737 = vadd.f32 0.0, %v736
        %v738 = vpop.f32.mrf.mxu0
        %v739 = vpop.f32.mrf.mxu0
        %v740 = vadd.f32 0.0, %v739
        %v741 = vpop.f32.mrf.mxu0
        %742 = vmatprep.mubr.bf16.mxu0 0
        %743 = vmatmul.mubr.bf16.gmra.mxu0 %v620
        %v744 = vpop.f32.mrf.mxu0
        %v745 = vadd.f32 0.0, %v744
        %v746 = vpop.f32.mrf.mxu0
        %v747 = vpop.f32.mrf.mxu0
        %v748 = vadd.f32 0.0, %v747
        %v749 = vpop.f32.mrf.mxu0
        %750 = vdwg.mxu0
        %v751 = vadd.f32 %v579, %v721
        %v752 = vadd.f32 %v582, %v724
        %v753 = vadd.f32 %v587, %v729
        %v754 = vadd.f32 %v590, %v732
        %v755 = vadd.f32 %v595, %v737
        %v756 = vadd.f32 %v598, %v740
        %v757 = vadd.f32 %v603, %v745
        %v758 = vadd.f32 %v606, %v748
        %s759 = scalar_lea.vmem %s318, 288
        %v760 = vld [vmem:[%s759] sm:$0xff]
        %v761 = vld [vmem:[%s759 + $0x10] sm:$0xff]
        %v762 = vld [vmem:[%s759 + $0x20] sm:$0xff]
        %v763 = vld [vmem:[%s759 + $0x30] sm:$0xff]
        %v764 = vld [vmem:[%s759 + $0x40] sm:$0xff]
        %v765 = vld [vmem:[%s759 + $0x50] sm:$0xff]
        %v766 = vld [vmem:[%s759 + $0x60] sm:$0xff]
        %v767 = vld [vmem:[%s759 + $0x70] sm:$0xff]
        %v768 = vpack.c.bf16 %v761, %v760
        %v769 = vpack.c.bf16 %v763, %v762
        %v770 = vpack.c.bf16 %v765, %v764
        %v771 = vpack.c.bf16 %v767, %v766
        %s772 = scalar_lea.vmem %s1, 192
        %v773 = vld [vmem:[%s772] sm:$0xf]
        %v774 = vld [vmem:[%s772 + $0x4] sm:$0xf]
        %v775 = vld [vmem:[%s772 + $0x8] sm:$0xf]
        %v776 = vld [vmem:[%s772 + $0xc] sm:$0xf]
        %v777 = vld [vmem:[%s772 + $0x10] sm:$0xf]
        %v778 = vld [vmem:[%s772 + $0x14] sm:$0xf]
        %v779 = vld [vmem:[%s772 + $0x18] sm:$0xf]
        %v780 = vld [vmem:[%s772 + $0x1c] sm:$0xf]
        %v781 = vld [vmem:[%s772 + $0x20] sm:$0xf]
        %v782 = vld [vmem:[%s772 + $0x24] sm:$0xf]
        %v783 = vld [vmem:[%s772 + $0x28] sm:$0xf]
        %v784 = vld [vmem:[%s772 + $0x2c] sm:$0xf]
        %v785 = vld [vmem:[%s772 + $0x30] sm:$0xf]
        %v786 = vld [vmem:[%s772 + $0x34] sm:$0xf]
        %v787 = vld [vmem:[%s772 + $0x38] sm:$0xf]
        %v788 = vld [vmem:[%s772 + $0x3c] sm:$0xf]
        %v805 = vunpack.c.l.b16 %v773
        %v806 = vunpack.c.l.b16 %v774
        %v807 = vunpack.c.l.b16 %v775
        %v808 = vunpack.c.l.b16 %v776
        %v809 = vunpack.c.l.b16 %v777
        %v810 = vunpack.c.l.b16 %v778
        %v811 = vunpack.c.l.b16 %v779
        %v812 = vunpack.c.l.b16 %v780
        %v813 = vunpack.c.l.b16 %v781
        %v814 = vunpack.c.l.b16 %v782
        %v815 = vunpack.c.l.b16 %v783
        %v816 = vunpack.c.l.b16 %v784
        %v817 = vunpack.c.l.b16 %v785
        %v818 = vunpack.c.l.b16 %v786
        %v819 = vunpack.c.l.b16 %v787
        %v820 = vunpack.c.l.b16 %v788
        %v821 = vpack.c.b16 %v806, %v805
        %v822 = vpack.c.b16 %v808, %v807
        %v823 = vpack.c.b16 %v810, %v809
        %v824 = vpack.c.b16 %v812, %v811
        %v825 = vpack.c.b16 %v814, %v813
        %v826 = vpack.c.b16 %v816, %v815
        %v827 = vpack.c.b16 %v818, %v817
        %v828 = vpack.c.b16 %v820, %v819
        %837 = vmatprep.subr.bf16.mxu0 0
        %838 = vmatpush1.bf16.msra.mxu0 %v828
        %839 = vmatprep.subr.bf16.mxu0 0
        %840 = vmatpush1.bf16.msra.mxu0 %v827
        %841 = vmatprep.subr.bf16.mxu0 0
        %842 = vmatpush1.bf16.msra.mxu0 %v826
        %843 = vmatprep.subr.bf16.mxu0 0
        %844 = vmatpush1.bf16.msra.mxu0 %v825
        %845 = vmatprep.subr.bf16.mxu0 0
        %846 = vmatpush1.bf16.msra.mxu0 %v824
        %847 = vmatprep.subr.bf16.mxu0 0
        %848 = vmatpush1.bf16.msra.mxu0 %v823
        %849 = vmatprep.subr.bf16.mxu0 0
        %850 = vmatpush1.bf16.msra.mxu0 %v822
        %851 = vmatprep.subr.bf16.mxu0 0
        %852 = vmatpush1.bf16.msra.mxu0 %v821
        %853 = vmatprep.subr.bf16.mxu0 0
        %854 = vmatpush2.bf16.msra.mxu0 0
        %855 = vmatprep.subr.bf16.mxu0 0
        %856 = vmatpush2.bf16.msra.mxu0 0
        %857 = vmatprep.subr.bf16.mxu0 0
        %858 = vmatpush2.bf16.msra.mxu0 0
        %859 = vmatprep.subr.bf16.mxu0 0
        %860 = vmatpush2.bf16.msra.mxu0 0
        %861 = vmatprep.subr.bf16.mxu0 0
        %862 = vmatpush2.bf16.msra.mxu0 0
        %863 = vmatprep.subr.bf16.mxu0 0
        %864 = vmatpush2.bf16.msra.mxu0 0
        %865 = vmatprep.subr.bf16.mxu0 0
        %866 = vmatpush2.bf16.msra.mxu0 0
        %867 = vmatprep.subr.bf16.mxu0 0
        %868 = vmatpush2.bf16.msra.mxu0 0
        %869 = vmatprep.mubr.bf16.mxu0 0
        %870 = vmatmul.mubr.bf16.gmra.mxu0 %v768
        %v871 = vpop.f32.mrf.mxu0
        %v872 = vadd.f32 0.0, %v871
        %v873 = vpop.f32.mrf.mxu0
        %v874 = vpop.f32.mrf.mxu0
        %v875 = vadd.f32 0.0, %v874
        %v876 = vpop.f32.mrf.mxu0
        %877 = vmatprep.mubr.bf16.mxu0 0
        %878 = vmatmul.mubr.bf16.gmra.mxu0 %v769
        %v879 = vpop.f32.mrf.mxu0
        %v880 = vadd.f32 0.0, %v879
        %v881 = vpop.f32.mrf.mxu0
        %v882 = vpop.f32.mrf.mxu0
        %v883 = vadd.f32 0.0, %v882
        %v884 = vpop.f32.mrf.mxu0
        %885 = vmatprep.mubr.bf16.mxu0 0
        %886 = vmatmul.mubr.bf16.gmra.mxu0 %v770
        %v887 = vpop.f32.mrf.mxu0
        %v888 = vadd.f32 0.0, %v887
        %v889 = vpop.f32.mrf.mxu0
        %v890 = vpop.f32.mrf.mxu0
        %v891 = vadd.f32 0.0, %v890
        %v892 = vpop.f32.mrf.mxu0
        %893 = vmatprep.mubr.bf16.mxu0 0
        %894 = vmatmul.mubr.bf16.gmra.mxu0 %v771
        %v895 = vpop.f32.mrf.mxu0
        %v896 = vadd.f32 0.0, %v895
        %v897 = vpop.f32.mrf.mxu0
        %v898 = vpop.f32.mrf.mxu0
        %v899 = vadd.f32 0.0, %v898
        %v900 = vpop.f32.mrf.mxu0
        %901 = vdwg.mxu0
        %v902 = vadd.f32 %v751, %v872
        %v903 = vadd.f32 %v752, %v875
        %v904 = vadd.f32 %v753, %v880
        %v905 = vadd.f32 %v754, %v883
        %v906 = vadd.f32 %v755, %v888
        %v907 = vadd.f32 %v756, %v891
        %v908 = vadd.f32 %v757, %v896
        %v909 = vadd.f32 %v758, %v899
        %s910 = scalar_lea.vmem %s318, 432
        %v911 = vld [vmem:[%s910] sm:$0xff]
        %v912 = vld [vmem:[%s910 + $0x10] sm:$0xff]
        %v913 = vld [vmem:[%s910 + $0x20] sm:$0xff]
        %v914 = vld [vmem:[%s910 + $0x30] sm:$0xff]
        %v915 = vld [vmem:[%s910 + $0x40] sm:$0xff]
        %v916 = vld [vmem:[%s910 + $0x50] sm:$0xff]
        %v917 = vld [vmem:[%s910 + $0x60] sm:$0xff]
        %v918 = vld [vmem:[%s910 + $0x70] sm:$0xff]
        %v919 = vpack.c.bf16 %v912, %v911
        %v920 = vpack.c.bf16 %v914, %v913
        %v921 = vpack.c.bf16 %v916, %v915
        %v922 = vpack.c.bf16 %v918, %v917
        %s923 = scalar_lea.vmem %s1, 256
        %v924 = vld [vmem:[%s923] sm:$0xf]
        %v925 = vld [vmem:[%s923 + $0x4] sm:$0xf]
        %v926 = vld [vmem:[%s923 + $0x8] sm:$0xf]
        %v927 = vld [vmem:[%s923 + $0xc] sm:$0xf]
        %v928 = vld [vmem:[%s923 + $0x10] sm:$0xf]
        %v929 = vld [vmem:[%s923 + $0x14] sm:$0xf]
        %v930 = vld [vmem:[%s923 + $0x18] sm:$0xf]
        %v931 = vld [vmem:[%s923 + $0x1c] sm:$0xf]
        %v932 = vld [vmem:[%s923 + $0x20] sm:$0xf]
        %v933 = vld [vmem:[%s923 + $0x24] sm:$0xf]
        %v934 = vld [vmem:[%s923 + $0x28] sm:$0xf]
        %v935 = vld [vmem:[%s923 + $0x2c] sm:$0xf]
        %v936 = vld [vmem:[%s923 + $0x30] sm:$0xf]
        %v937 = vld [vmem:[%s923 + $0x34] sm:$0xf]
        %v938 = vld [vmem:[%s923 + $0x38] sm:$0xf]
        %v939 = vld [vmem:[%s923 + $0x3c] sm:$0xf]
        %v956 = vunpack.c.l.b16 %v924
        %v957 = vunpack.c.l.b16 %v925
        %v958 = vunpack.c.l.b16 %v926
        %v959 = vunpack.c.l.b16 %v927
        %v960 = vunpack.c.l.b16 %v928
        %v961 = vunpack.c.l.b16 %v929
        %v962 = vunpack.c.l.b16 %v930
        %v963 = vunpack.c.l.b16 %v931
        %v964 = vunpack.c.l.b16 %v932
        %v965 = vunpack.c.l.b16 %v933
        %v966 = vunpack.c.l.b16 %v934
        %v967 = vunpack.c.l.b16 %v935
        %v968 = vunpack.c.l.b16 %v936
        %v969 = vunpack.c.l.b16 %v937
        %v970 = vunpack.c.l.b16 %v938
        %v971 = vunpack.c.l.b16 %v939
        %v972 = vpack.c.b16 %v957, %v956
        %v973 = vpack.c.b16 %v959, %v958
        %v974 = vpack.c.b16 %v961, %v960
        %v975 = vpack.c.b16 %v963, %v962
        %v976 = vpack.c.b16 %v965, %v964
        %v977 = vpack.c.b16 %v967, %v966
        %v978 = vpack.c.b16 %v969, %v968
        %v979 = vpack.c.b16 %v971, %v970
        %988 = vmatprep.subr.bf16.mxu0 0
        %989 = vmatpush1.bf16.msra.mxu0 %v979
        %990 = vmatprep.subr.bf16.mxu0 0
        %991 = vmatpush1.bf16.msra.mxu0 %v978
        %992 = vmatprep.subr.bf16.mxu0 0
        %993 = vmatpush1.bf16.msra.mxu0 %v977
        %994 = vmatprep.subr.bf16.mxu0 0
        %995 = vmatpush1.bf16.msra.mxu0 %v976
        %996 = vmatprep.subr.bf16.mxu0 0
        %997 = vmatpush1.bf16.msra.mxu0 %v975
        %998 = vmatprep.subr.bf16.mxu0 0
        %999 = vmatpush1.bf16.msra.mxu0 %v974
        %1000 = vmatprep.subr.bf16.mxu0 0
        %1001 = vmatpush1.bf16.msra.mxu0 %v973
        %1002 = vmatprep.subr.bf16.mxu0 0
        %1003 = vmatpush1.bf16.msra.mxu0 %v972
        %1004 = vmatprep.subr.bf16.mxu0 0
        %1005 = vmatpush2.bf16.msra.mxu0 0
        %1006 = vmatprep.subr.bf16.mxu0 0
        %1007 = vmatpush2.bf16.msra.mxu0 0
        %1008 = vmatprep.subr.bf16.mxu0 0
        %1009 = vmatpush2.bf16.msra.mxu0 0
        %1010 = vmatprep.subr.bf16.mxu0 0
        %1011 = vmatpush2.bf16.msra.mxu0 0
        %1012 = vmatprep.subr.bf16.mxu0 0
        %1013 = vmatpush2.bf16.msra.mxu0 0
        %1014 = vmatprep.subr.bf16.mxu0 0
        %1015 = vmatpush2.bf16.msra.mxu0 0
        %1016 = vmatprep.subr.bf16.mxu0 0
        %1017 = vmatpush2.bf16.msra.mxu0 0
        %1018 = vmatprep.subr.bf16.mxu0 0
        %1019 = vmatpush2.bf16.msra.mxu0 0
        %1020 = vmatprep.mubr.bf16.mxu0 0
        %1021 = vmatmul.mubr.bf16.gmra.mxu0 %v919
        %v1022 = vpop.f32.mrf.mxu0
        %v1023 = vadd.f32 0.0, %v1022
        %v1024 = vpop.f32.mrf.mxu0
        %v1025 = vpop.f32.mrf.mxu0
        %v1026 = vadd.f32 0.0, %v1025
        %v1027 = vpop.f32.mrf.mxu0
        %1028 = vmatprep.mubr.bf16.mxu0 0
        %1029 = vmatmul.mubr.bf16.gmra.mxu0 %v920
        %v1030 = vpop.f32.mrf.mxu0
        %v1031 = vadd.f32 0.0, %v1030
        %v1032 = vpop.f32.mrf.mxu0
        %v1033 = vpop.f32.mrf.mxu0
        %v1034 = vadd.f32 0.0, %v1033
        %v1035 = vpop.f32.mrf.mxu0
        %1036 = vmatprep.mubr.bf16.mxu0 0
        %1037 = vmatmul.mubr.bf16.gmra.mxu0 %v921
        %v1038 = vpop.f32.mrf.mxu0
        %v1039 = vadd.f32 0.0, %v1038
        %v1040 = vpop.f32.mrf.mxu0
        %v1041 = vpop.f32.mrf.mxu0
        %v1042 = vadd.f32 0.0, %v1041
        %v1043 = vpop.f32.mrf.mxu0
        %1044 = vmatprep.mubr.bf16.mxu0 0
        %1045 = vmatmul.mubr.bf16.gmra.mxu0 %v922
        %v1046 = vpop.f32.mrf.mxu0
        %v1047 = vadd.f32 0.0, %v1046
        %v1048 = vpop.f32.mrf.mxu0
        %v1049 = vpop.f32.mrf.mxu0
        %v1050 = vadd.f32 0.0, %v1049
        %v1051 = vpop.f32.mrf.mxu0
        %1052 = vdwg.mxu0
        %v1053 = vadd.f32 %v902, %v1023
        %v1054 = vadd.f32 %v903, %v1026
        %v1055 = vadd.f32 %v904, %v1031
        %v1056 = vadd.f32 %v905, %v1034
        %v1057 = vadd.f32 %v906, %v1039
        %v1058 = vadd.f32 %v907, %v1042
        %v1059 = vadd.f32 %v908, %v1047
        %v1060 = vadd.f32 %v909, %v1050
        %v1061 = vld [vmem:[%s759 + $0x1] sm:$0xff]
        %v1062 = vld [vmem:[%s759 + $0x11] sm:$0xff]
        %v1063 = vld [vmem:[%s759 + $0x21] sm:$0xff]
        %v1064 = vld [vmem:[%s759 + $0x31] sm:$0xff]
        %v1065 = vld [vmem:[%s759 + $0x41] sm:$0xff]
        %v1066 = vld [vmem:[%s759 + $0x51] sm:$0xff]
        %v1067 = vld [vmem:[%s759 + $0x61] sm:$0xff]
        %v1068 = vld [vmem:[%s759 + $0x71] sm:$0xff]
        %v1069 = vpack.c.bf16 %v1062, %v1061
        %v1070 = vpack.c.bf16 %v1064, %v1063
        %v1071 = vpack.c.bf16 %v1066, %v1065
        %v1072 = vpack.c.bf16 %v1068, %v1067
        %s1073 = scalar_lea.vmem %s1, 320
        %v1074 = vld [vmem:[%s1073] sm:$0xf]
        %v1075 = vld [vmem:[%s1073 + $0x4] sm:$0xf]
        %v1076 = vld [vmem:[%s1073 + $0x8] sm:$0xf]
        %v1077 = vld [vmem:[%s1073 + $0xc] sm:$0xf]
        %v1078 = vld [vmem:[%s1073 + $0x10] sm:$0xf]
        %v1079 = vld [vmem:[%s1073 + $0x14] sm:$0xf]
        %v1080 = vld [vmem:[%s1073 + $0x18] sm:$0xf]
        %v1081 = vld [vmem:[%s1073 + $0x1c] sm:$0xf]
        %v1082 = vld [vmem:[%s1073 + $0x20] sm:$0xf]
        %v1083 = vld [vmem:[%s1073 + $0x24] sm:$0xf]
        %v1084 = vld [vmem:[%s1073 + $0x28] sm:$0xf]
        %v1085 = vld [vmem:[%s1073 + $0x2c] sm:$0xf]
        %v1086 = vld [vmem:[%s1073 + $0x30] sm:$0xf]
        %v1087 = vld [vmem:[%s1073 + $0x34] sm:$0xf]
        %v1088 = vld [vmem:[%s1073 + $0x38] sm:$0xf]
        %v1089 = vld [vmem:[%s1073 + $0x3c] sm:$0xf]
        %v1106 = vunpack.c.l.b16 %v1074
        %v1107 = vunpack.c.l.b16 %v1075
        %v1108 = vunpack.c.l.b16 %v1076
        %v1109 = vunpack.c.l.b16 %v1077
        %v1110 = vunpack.c.l.b16 %v1078
        %v1111 = vunpack.c.l.b16 %v1079
        %v1112 = vunpack.c.l.b16 %v1080
        %v1113 = vunpack.c.l.b16 %v1081
        %v1114 = vunpack.c.l.b16 %v1082
        %v1115 = vunpack.c.l.b16 %v1083
        %v1116 = vunpack.c.l.b16 %v1084
        %v1117 = vunpack.c.l.b16 %v1085
        %v1118 = vunpack.c.l.b16 %v1086
        %v1119 = vunpack.c.l.b16 %v1087
        %v1120 = vunpack.c.l.b16 %v1088
        %v1121 = vunpack.c.l.b16 %v1089
        %v1122 = vpack.c.b16 %v1107, %v1106
        %v1123 = vpack.c.b16 %v1109, %v1108
        %v1124 = vpack.c.b16 %v1111, %v1110
        %v1125 = vpack.c.b16 %v1113, %v1112
        %v1126 = vpack.c.b16 %v1115, %v1114
        %v1127 = vpack.c.b16 %v1117, %v1116
        %v1128 = vpack.c.b16 %v1119, %v1118
        %v1129 = vpack.c.b16 %v1121, %v1120
        %1138 = vmatprep.subr.bf16.mxu0 0
        %1139 = vmatpush1.bf16.msra.mxu0 %v1129
        %1140 = vmatprep.subr.bf16.mxu0 0
        %1141 = vmatpush1.bf16.msra.mxu0 %v1128
        %1142 = vmatprep.subr.bf16.mxu0 0
        %1143 = vmatpush1.bf16.msra.mxu0 %v1127
        %1144 = vmatprep.subr.bf16.mxu0 0
        %1145 = vmatpush1.bf16.msra.mxu0 %v1126
        %1146 = vmatprep.subr.bf16.mxu0 0
        %1147 = vmatpush1.bf16.msra.mxu0 %v1125
        %1148 = vmatprep.subr.bf16.mxu0 0
        %1149 = vmatpush1.bf16.msra.mxu0 %v1124
        %1150 = vmatprep.subr.bf16.mxu0 0
        %1151 = vmatpush1.bf16.msra.mxu0 %v1123
        %1152 = vmatprep.subr.bf16.mxu0 0
        %1153 = vmatpush1.bf16.msra.mxu0 %v1122
        %1154 = vmatprep.subr.bf16.mxu0 0
        %1155 = vmatpush2.bf16.msra.mxu0 0
        %1156 = vmatprep.subr.bf16.mxu0 0
        %1157 = vmatpush2.bf16.msra.mxu0 0
        %1158 = vmatprep.subr.bf16.mxu0 0
        %1159 = vmatpush2.bf16.msra.mxu0 0
        %1160 = vmatprep.subr.bf16.mxu0 0
        %1161 = vmatpush2.bf16.msra.mxu0 0
        %1162 = vmatprep.subr.bf16.mxu0 0
        %1163 = vmatpush2.bf16.msra.mxu0 0
        %1164 = vmatprep.subr.bf16.mxu0 0
        %1165 = vmatpush2.bf16.msra.mxu0 0
        %1166 = vmatprep.subr.bf16.mxu0 0
        %1167 = vmatpush2.bf16.msra.mxu0 0
        %1168 = vmatprep.subr.bf16.mxu0 0
        %1169 = vmatpush2.bf16.msra.mxu0 0
        %1170 = vmatprep.mubr.bf16.mxu0 0
        %1171 = vmatmul.mubr.bf16.gmra.mxu0 %v1069
        %v1172 = vpop.f32.mrf.mxu0
        %v1173 = vadd.f32 0.0, %v1172
        %v1174 = vpop.f32.mrf.mxu0
        %v1175 = vpop.f32.mrf.mxu0
        %v1176 = vadd.f32 0.0, %v1175
        %v1177 = vpop.f32.mrf.mxu0
        %1178 = vmatprep.mubr.bf16.mxu0 0
        %1179 = vmatmul.mubr.bf16.gmra.mxu0 %v1070
        %v1180 = vpop.f32.mrf.mxu0
        %v1181 = vadd.f32 0.0, %v1180
        %v1182 = vpop.f32.mrf.mxu0
        %v1183 = vpop.f32.mrf.mxu0
        %v1184 = vadd.f32 0.0, %v1183
        %v1185 = vpop.f32.mrf.mxu0
        %1186 = vmatprep.mubr.bf16.mxu0 0
        %1187 = vmatmul.mubr.bf16.gmra.mxu0 %v1071
        %v1188 = vpop.f32.mrf.mxu0
        %v1189 = vadd.f32 0.0, %v1188
        %v1190 = vpop.f32.mrf.mxu0
        %v1191 = vpop.f32.mrf.mxu0
        %v1192 = vadd.f32 0.0, %v1191
        %v1193 = vpop.f32.mrf.mxu0
        %1194 = vmatprep.mubr.bf16.mxu0 0
        %1195 = vmatmul.mubr.bf16.gmra.mxu0 %v1072
        %v1196 = vpop.f32.mrf.mxu0
        %v1197 = vadd.f32 0.0, %v1196
        %v1198 = vpop.f32.mrf.mxu0
        %v1199 = vpop.f32.mrf.mxu0
        %v1200 = vadd.f32 0.0, %v1199
        %v1201 = vpop.f32.mrf.mxu0
        %1202 = vdwg.mxu0
        %v1203 = vadd.f32 %v1053, %v1173
        %v1204 = vadd.f32 %v1054, %v1176
        %v1205 = vadd.f32 %v1055, %v1181
        %v1206 = vadd.f32 %v1056, %v1184
        %v1207 = vadd.f32 %v1057, %v1189
        %v1208 = vadd.f32 %v1058, %v1192
        %v1209 = vadd.f32 %v1059, %v1197
        %v1210 = vadd.f32 %v1060, %v1200
        %s1211 = scalar_lea.vmem %s318, 16
        %v1212 = vld [vmem:[%s1211] sm:$0xff]
        %v1213 = vld [vmem:[%s1211 + $0x10] sm:$0xff]
        %v1214 = vld [vmem:[%s1211 + $0x20] sm:$0xff]
        %v1215 = vld [vmem:[%s1211 + $0x30] sm:$0xff]
        %v1216 = vld [vmem:[%s1211 + $0x40] sm:$0xff]
        %v1217 = vld [vmem:[%s1211 + $0x50] sm:$0xff]
        %v1218 = vld [vmem:[%s1211 + $0x60] sm:$0xff]
        %v1219 = vld [vmem:[%s1211 + $0x70] sm:$0xff]
        %v1220 = vpack.c.bf16 %v1213, %v1212
        %v1221 = vpack.c.bf16 %v1215, %v1214
        %v1222 = vpack.c.bf16 %v1217, %v1216
        %v1223 = vpack.c.bf16 %v1219, %v1218
        %s1224 = scalar_lea.vmem %s1, 384
        %v1225 = vld [vmem:[%s1224] sm:$0xf]
        %v1226 = vld [vmem:[%s1224 + $0x4] sm:$0xf]
        %v1227 = vld [vmem:[%s1224 + $0x8] sm:$0xf]
        %v1228 = vld [vmem:[%s1224 + $0xc] sm:$0xf]
        %v1229 = vld [vmem:[%s1224 + $0x10] sm:$0xf]
        %v1230 = vld [vmem:[%s1224 + $0x14] sm:$0xf]
        %v1231 = vld [vmem:[%s1224 + $0x18] sm:$0xf]
        %v1232 = vld [vmem:[%s1224 + $0x1c] sm:$0xf]
        %v1233 = vld [vmem:[%s1224 + $0x20] sm:$0xf]
        %v1234 = vld [vmem:[%s1224 + $0x24] sm:$0xf]
        %v1235 = vld [vmem:[%s1224 + $0x28] sm:$0xf]
        %v1236 = vld [vmem:[%s1224 + $0x2c] sm:$0xf]
        %v1237 = vld [vmem:[%s1224 + $0x30] sm:$0xf]
        %v1238 = vld [vmem:[%s1224 + $0x34] sm:$0xf]
        %v1239 = vld [vmem:[%s1224 + $0x38] sm:$0xf]
        %v1240 = vld [vmem:[%s1224 + $0x3c] sm:$0xf]
        %v1257 = vunpack.c.l.b16 %v1225
        %v1258 = vunpack.c.l.b16 %v1226
        %v1259 = vunpack.c.l.b16 %v1227
        %v1260 = vunpack.c.l.b16 %v1228
        %v1261 = vunpack.c.l.b16 %v1229
        %v1262 = vunpack.c.l.b16 %v1230
        %v1263 = vunpack.c.l.b16 %v1231
        %v1264 = vunpack.c.l.b16 %v1232
        %v1265 = vunpack.c.l.b16 %v1233
        %v1266 = vunpack.c.l.b16 %v1234
        %v1267 = vunpack.c.l.b16 %v1235
        %v1268 = vunpack.c.l.b16 %v1236
        %v1269 = vunpack.c.l.b16 %v1237
        %v1270 = vunpack.c.l.b16 %v1238
        %v1271 = vunpack.c.l.b16 %v1239
        %v1272 = vunpack.c.l.b16 %v1240
        %v1273 = vpack.c.b16 %v1258, %v1257
        %v1274 = vpack.c.b16 %v1260, %v1259
        %v1275 = vpack.c.b16 %v1262, %v1261
        %v1276 = vpack.c.b16 %v1264, %v1263
        %v1277 = vpack.c.b16 %v1266, %v1265
        %v1278 = vpack.c.b16 %v1268, %v1267
        %v1279 = vpack.c.b16 %v1270, %v1269
        %v1280 = vpack.c.b16 %v1272, %v1271
        %1289 = vmatprep.subr.bf16.mxu0 0
        %1290 = vmatpush1.bf16.msra.mxu0 %v1280
        %1291 = vmatprep.subr.bf16.mxu0 0
        %1292 = vmatpush1.bf16.msra.mxu0 %v1279
        %1293 = vmatprep.subr.bf16.mxu0 0
        %1294 = vmatpush1.bf16.msra.mxu0 %v1278
        %1295 = vmatprep.subr.bf16.mxu0 0
        %1296 = vmatpush1.bf16.msra.mxu0 %v1277
        %1297 = vmatprep.subr.bf16.mxu0 0
        %1298 = vmatpush1.bf16.msra.mxu0 %v1276
        %1299 = vmatprep.subr.bf16.mxu0 0
        %1300 = vmatpush1.bf16.msra.mxu0 %v1275
        %1301 = vmatprep.subr.bf16.mxu0 0
        %1302 = vmatpush1.bf16.msra.mxu0 %v1274
        %1303 = vmatprep.subr.bf16.mxu0 0
        %1304 = vmatpush1.bf16.msra.mxu0 %v1273
        %1305 = vmatprep.subr.bf16.mxu0 0
        %1306 = vmatpush2.bf16.msra.mxu0 0
        %1307 = vmatprep.subr.bf16.mxu0 0
        %1308 = vmatpush2.bf16.msra.mxu0 0
        %1309 = vmatprep.subr.bf16.mxu0 0
        %1310 = vmatpush2.bf16.msra.mxu0 0
        %1311 = vmatprep.subr.bf16.mxu0 0
        %1312 = vmatpush2.bf16.msra.mxu0 0
        %1313 = vmatprep.subr.bf16.mxu0 0
        %1314 = vmatpush2.bf16.msra.mxu0 0
        %1315 = vmatprep.subr.bf16.mxu0 0
        %1316 = vmatpush2.bf16.msra.mxu0 0
        %1317 = vmatprep.subr.bf16.mxu0 0
        %1318 = vmatpush2.bf16.msra.mxu0 0
        %1319 = vmatprep.subr.bf16.mxu0 0
        %1320 = vmatpush2.bf16.msra.mxu0 0
        %1321 = vmatprep.mubr.bf16.mxu0 0
        %1322 = vmatmul.mubr.bf16.gmra.mxu0 %v1220
        %v1323 = vpop.f32.mrf.mxu0
        %v1324 = vadd.f32 0.0, %v1323
        %v1325 = vpop.f32.mrf.mxu0
        %v1326 = vpop.f32.mrf.mxu0
        %v1327 = vadd.f32 0.0, %v1326
        %v1328 = vpop.f32.mrf.mxu0
        %1329 = vmatprep.mubr.bf16.mxu0 0
        %1330 = vmatmul.mubr.bf16.gmra.mxu0 %v1221
        %v1331 = vpop.f32.mrf.mxu0
        %v1332 = vadd.f32 0.0, %v1331
        %v1333 = vpop.f32.mrf.mxu0
        %v1334 = vpop.f32.mrf.mxu0
        %v1335 = vadd.f32 0.0, %v1334
        %v1336 = vpop.f32.mrf.mxu0
        %1337 = vmatprep.mubr.bf16.mxu0 0
        %1338 = vmatmul.mubr.bf16.gmra.mxu0 %v1222
        %v1339 = vpop.f32.mrf.mxu0
        %v1340 = vadd.f32 0.0, %v1339
        %v1341 = vpop.f32.mrf.mxu0
        %v1342 = vpop.f32.mrf.mxu0
        %v1343 = vadd.f32 0.0, %v1342
        %v1344 = vpop.f32.mrf.mxu0
        %1345 = vmatprep.mubr.bf16.mxu0 0
        %1346 = vmatmul.mubr.bf16.gmra.mxu0 %v1223
        %v1347 = vpop.f32.mrf.mxu0
        %v1348 = vadd.f32 0.0, %v1347
        %v1349 = vpop.f32.mrf.mxu0
        %v1350 = vpop.f32.mrf.mxu0
        %v1351 = vadd.f32 0.0, %v1350
        %v1352 = vpop.f32.mrf.mxu0
        %1353 = vdwg.mxu0
        %v1354 = vadd.f32 %v1203, %v1324
        %v1355 = vadd.f32 %v1204, %v1327
        %v1356 = vadd.f32 %v1205, %v1332
        %v1357 = vadd.f32 %v1206, %v1335
        %v1358 = vadd.f32 %v1207, %v1340
        %v1359 = vadd.f32 %v1208, %v1343
        %v1360 = vadd.f32 %v1209, %v1348
        %v1361 = vadd.f32 %v1210, %v1351
        %s1362 = scalar_lea.vmem %s318, 160
        %v1363 = vld [vmem:[%s1362] sm:$0xff]
        %v1364 = vld [vmem:[%s1362 + $0x10] sm:$0xff]
        %v1365 = vld [vmem:[%s1362 + $0x20] sm:$0xff]
        %v1366 = vld [vmem:[%s1362 + $0x30] sm:$0xff]
        %v1367 = vld [vmem:[%s1362 + $0x40] sm:$0xff]
        %v1368 = vld [vmem:[%s1362 + $0x50] sm:$0xff]
        %v1369 = vld [vmem:[%s1362 + $0x60] sm:$0xff]
        %v1370 = vld [vmem:[%s1362 + $0x70] sm:$0xff]
        %v1371 = vpack.c.bf16 %v1364, %v1363
        %v1372 = vpack.c.bf16 %v1366, %v1365
        %v1373 = vpack.c.bf16 %v1368, %v1367
        %v1374 = vpack.c.bf16 %v1370, %v1369
        %s1375 = scalar_lea.vmem %s1, 448
        %v1376 = vld [vmem:[%s1375] sm:$0xf]
        %v1377 = vld [vmem:[%s1375 + $0x4] sm:$0xf]
        %v1378 = vld [vmem:[%s1375 + $0x8] sm:$0xf]
        %v1379 = vld [vmem:[%s1375 + $0xc] sm:$0xf]
        %v1380 = vld [vmem:[%s1375 + $0x10] sm:$0xf]
        %v1381 = vld [vmem:[%s1375 + $0x14] sm:$0xf]
        %v1382 = vld [vmem:[%s1375 + $0x18] sm:$0xf]
        %v1383 = vld [vmem:[%s1375 + $0x1c] sm:$0xf]
        %v1384 = vld [vmem:[%s1375 + $0x20] sm:$0xf]
        %v1385 = vld [vmem:[%s1375 + $0x24] sm:$0xf]
        %v1386 = vld [vmem:[%s1375 + $0x28] sm:$0xf]
        %v1387 = vld [vmem:[%s1375 + $0x2c] sm:$0xf]
        %v1388 = vld [vmem:[%s1375 + $0x30] sm:$0xf]
        %v1389 = vld [vmem:[%s1375 + $0x34] sm:$0xf]
        %v1390 = vld [vmem:[%s1375 + $0x38] sm:$0xf]
        %v1391 = vld [vmem:[%s1375 + $0x3c] sm:$0xf]
        %v1408 = vunpack.c.l.b16 %v1376
        %v1409 = vunpack.c.l.b16 %v1377
        %v1410 = vunpack.c.l.b16 %v1378
        %v1411 = vunpack.c.l.b16 %v1379
        %v1412 = vunpack.c.l.b16 %v1380
        %v1413 = vunpack.c.l.b16 %v1381
        %v1414 = vunpack.c.l.b16 %v1382
        %v1415 = vunpack.c.l.b16 %v1383
        %v1416 = vunpack.c.l.b16 %v1384
        %v1417 = vunpack.c.l.b16 %v1385
        %v1418 = vunpack.c.l.b16 %v1386
        %v1419 = vunpack.c.l.b16 %v1387
        %v1420 = vunpack.c.l.b16 %v1388
        %v1421 = vunpack.c.l.b16 %v1389
        %v1422 = vunpack.c.l.b16 %v1390
        %v1423 = vunpack.c.l.b16 %v1391
        %v1424 = vpack.c.b16 %v1409, %v1408
        %v1425 = vpack.c.b16 %v1411, %v1410
        %v1426 = vpack.c.b16 %v1413, %v1412
        %v1427 = vpack.c.b16 %v1415, %v1414
        %v1428 = vpack.c.b16 %v1417, %v1416
        %v1429 = vpack.c.b16 %v1419, %v1418
        %v1430 = vpack.c.b16 %v1421, %v1420
        %v1431 = vpack.c.b16 %v1423, %v1422
        %1440 = vmatprep.subr.bf16.mxu0 0
        %1441 = vmatpush1.bf16.msra.mxu0 %v1431
        %1442 = vmatprep.subr.bf16.mxu0 0
        %1443 = vmatpush1.bf16.msra.mxu0 %v1430
        %1444 = vmatprep.subr.bf16.mxu0 0
        %1445 = vmatpush1.bf16.msra.mxu0 %v1429
        %1446 = vmatprep.subr.bf16.mxu0 0
        %1447 = vmatpush1.bf16.msra.mxu0 %v1428
        %1448 = vmatprep.subr.bf16.mxu0 0
        %1449 = vmatpush1.bf16.msra.mxu0 %v1427
        %1450 = vmatprep.subr.bf16.mxu0 0
        %1451 = vmatpush1.bf16.msra.mxu0 %v1426
        %1452 = vmatprep.subr.bf16.mxu0 0
        %1453 = vmatpush1.bf16.msra.mxu0 %v1425
        %1454 = vmatprep.subr.bf16.mxu0 0
        %1455 = vmatpush1.bf16.msra.mxu0 %v1424
        %1456 = vmatprep.subr.bf16.mxu0 0
        %1457 = vmatpush2.bf16.msra.mxu0 0
        %1458 = vmatprep.subr.bf16.mxu0 0
        %1459 = vmatpush2.bf16.msra.mxu0 0
        %1460 = vmatprep.subr.bf16.mxu0 0
        %1461 = vmatpush2.bf16.msra.mxu0 0
        %1462 = vmatprep.subr.bf16.mxu0 0
        %1463 = vmatpush2.bf16.msra.mxu0 0
        %1464 = vmatprep.subr.bf16.mxu0 0
        %1465 = vmatpush2.bf16.msra.mxu0 0
        %1466 = vmatprep.subr.bf16.mxu0 0
        %1467 = vmatpush2.bf16.msra.mxu0 0
        %1468 = vmatprep.subr.bf16.mxu0 0
        %1469 = vmatpush2.bf16.msra.mxu0 0
        %1470 = vmatprep.subr.bf16.mxu0 0
        %1471 = vmatpush2.bf16.msra.mxu0 0
        %1472 = vmatprep.mubr.bf16.mxu0 0
        %1473 = vmatmul.mubr.bf16.gmra.mxu0 %v1371
        %v1474 = vpop.f32.mrf.mxu0
        %v1475 = vadd.f32 0.0, %v1474
        %v1476 = vpop.f32.mrf.mxu0
        %v1477 = vpop.f32.mrf.mxu0
        %v1478 = vadd.f32 0.0, %v1477
        %v1479 = vpop.f32.mrf.mxu0
        %1480 = vmatprep.mubr.bf16.mxu0 0
        %1481 = vmatmul.mubr.bf16.gmra.mxu0 %v1372
        %v1482 = vpop.f32.mrf.mxu0
        %v1483 = vadd.f32 0.0, %v1482
        %v1484 = vpop.f32.mrf.mxu0
        %v1485 = vpop.f32.mrf.mxu0
        %v1486 = vadd.f32 0.0, %v1485
        %v1487 = vpop.f32.mrf.mxu0
        %1488 = vmatprep.mubr.bf16.mxu0 0
        %1489 = vmatmul.mubr.bf16.gmra.mxu0 %v1373
        %v1490 = vpop.f32.mrf.mxu0
        %v1491 = vadd.f32 0.0, %v1490
        %v1492 = vpop.f32.mrf.mxu0
        %v1493 = vpop.f32.mrf.mxu0
        %v1494 = vadd.f32 0.0, %v1493
        %v1495 = vpop.f32.mrf.mxu0
        %1496 = vmatprep.mubr.bf16.mxu0 0
        %1497 = vmatmul.mubr.bf16.gmra.mxu0 %v1374
        %v1498 = vpop.f32.mrf.mxu0
        %v1499 = vadd.f32 0.0, %v1498
        %v1500 = vpop.f32.mrf.mxu0
        %v1501 = vpop.f32.mrf.mxu0
        %v1502 = vadd.f32 0.0, %v1501
        %v1503 = vpop.f32.mrf.mxu0
        %1504 = vdwg.mxu0
        %v1505 = vadd.f32 %v1354, %v1475
        %v1506 = vadd.f32 %v1355, %v1478
        %v1507 = vadd.f32 %v1356, %v1483
        %v1508 = vadd.f32 %v1357, %v1486
        %v1509 = vadd.f32 %v1358, %v1491
        %v1510 = vadd.f32 %v1359, %v1494
        %v1511 = vadd.f32 %v1360, %v1499
        %v1512 = vadd.f32 %v1361, %v1502
        %v1513 = vld [vmem:[%s1211 + $0x1] sm:$0xff]
        %v1514 = vld [vmem:[%s1211 + $0x11] sm:$0xff]
        %v1515 = vld [vmem:[%s1211 + $0x21] sm:$0xff]
        %v1516 = vld [vmem:[%s1211 + $0x31] sm:$0xff]
        %v1517 = vld [vmem:[%s1211 + $0x41] sm:$0xff]
        %v1518 = vld [vmem:[%s1211 + $0x51] sm:$0xff]
        %v1519 = vld [vmem:[%s1211 + $0x61] sm:$0xff]
        %v1520 = vld [vmem:[%s1211 + $0x71] sm:$0xff]
        %v1521 = vpack.c.bf16 %v1514, %v1513
        %v1522 = vpack.c.bf16 %v1516, %v1515
        %v1523 = vpack.c.bf16 %v1518, %v1517
        %v1524 = vpack.c.bf16 %v1520, %v1519
        %s1525 = scalar_lea.vmem %s1, 512
        %v1526 = vld [vmem:[%s1525] sm:$0xf]
        %v1527 = vld [vmem:[%s1525 + $0x4] sm:$0xf]
        %v1528 = vld [vmem:[%s1525 + $0x8] sm:$0xf]
        %v1529 = vld [vmem:[%s1525 + $0xc] sm:$0xf]
        %v1530 = vld [vmem:[%s1525 + $0x10] sm:$0xf]
        %v1531 = vld [vmem:[%s1525 + $0x14] sm:$0xf]
        %v1532 = vld [vmem:[%s1525 + $0x18] sm:$0xf]
        %v1533 = vld [vmem:[%s1525 + $0x1c] sm:$0xf]
        %v1534 = vld [vmem:[%s1525 + $0x20] sm:$0xf]
        %v1535 = vld [vmem:[%s1525 + $0x24] sm:$0xf]
        %v1536 = vld [vmem:[%s1525 + $0x28] sm:$0xf]
        %v1537 = vld [vmem:[%s1525 + $0x2c] sm:$0xf]
        %v1538 = vld [vmem:[%s1525 + $0x30] sm:$0xf]
        %v1539 = vld [vmem:[%s1525 + $0x34] sm:$0xf]
        %v1540 = vld [vmem:[%s1525 + $0x38] sm:$0xf]
        %v1541 = vld [vmem:[%s1525 + $0x3c] sm:$0xf]
        %v1558 = vunpack.c.l.b16 %v1526
        %v1559 = vunpack.c.l.b16 %v1527
        %v1560 = vunpack.c.l.b16 %v1528
        %v1561 = vunpack.c.l.b16 %v1529
        %v1562 = vunpack.c.l.b16 %v1530
        %v1563 = vunpack.c.l.b16 %v1531
        %v1564 = vunpack.c.l.b16 %v1532
        %v1565 = vunpack.c.l.b16 %v1533
        %v1566 = vunpack.c.l.b16 %v1534
        %v1567 = vunpack.c.l.b16 %v1535
        %v1568 = vunpack.c.l.b16 %v1536
        %v1569 = vunpack.c.l.b16 %v1537
        %v1570 = vunpack.c.l.b16 %v1538
        %v1571 = vunpack.c.l.b16 %v1539
        %v1572 = vunpack.c.l.b16 %v1540
        %v1573 = vunpack.c.l.b16 %v1541
        %v1574 = vpack.c.b16 %v1559, %v1558
        %v1575 = vpack.c.b16 %v1561, %v1560
        %v1576 = vpack.c.b16 %v1563, %v1562
        %v1577 = vpack.c.b16 %v1565, %v1564
        %v1578 = vpack.c.b16 %v1567, %v1566
        %v1579 = vpack.c.b16 %v1569, %v1568
        %v1580 = vpack.c.b16 %v1571, %v1570
        %v1581 = vpack.c.b16 %v1573, %v1572
        %1590 = vmatprep.subr.bf16.mxu0 0
        %1591 = vmatpush1.bf16.msra.mxu0 %v1581
        %1592 = vmatprep.subr.bf16.mxu0 0
        %1593 = vmatpush1.bf16.msra.mxu0 %v1580
        %1594 = vmatprep.subr.bf16.mxu0 0
        %1595 = vmatpush1.bf16.msra.mxu0 %v1579
        %1596 = vmatprep.subr.bf16.mxu0 0
        %1597 = vmatpush1.bf16.msra.mxu0 %v1578
        %1598 = vmatprep.subr.bf16.mxu0 0
        %1599 = vmatpush1.bf16.msra.mxu0 %v1577
        %1600 = vmatprep.subr.bf16.mxu0 0
        %1601 = vmatpush1.bf16.msra.mxu0 %v1576
        %1602 = vmatprep.subr.bf16.mxu0 0
        %1603 = vmatpush1.bf16.msra.mxu0 %v1575
        %1604 = vmatprep.subr.bf16.mxu0 0
        %1605 = vmatpush1.bf16.msra.mxu0 %v1574
        %1606 = vmatprep.subr.bf16.mxu0 0
        %1607 = vmatpush2.bf16.msra.mxu0 0
        %1608 = vmatprep.subr.bf16.mxu0 0
        %1609 = vmatpush2.bf16.msra.mxu0 0
        %1610 = vmatprep.subr.bf16.mxu0 0
        %1611 = vmatpush2.bf16.msra.mxu0 0
        %1612 = vmatprep.subr.bf16.mxu0 0
        %1613 = vmatpush2.bf16.msra.mxu0 0
        %1614 = vmatprep.subr.bf16.mxu0 0
        %1615 = vmatpush2.bf16.msra.mxu0 0
        %1616 = vmatprep.subr.bf16.mxu0 0
        %1617 = vmatpush2.bf16.msra.mxu0 0
        %1618 = vmatprep.subr.bf16.mxu0 0
        %1619 = vmatpush2.bf16.msra.mxu0 0
        %1620 = vmatprep.subr.bf16.mxu0 0
        %1621 = vmatpush2.bf16.msra.mxu0 0
        %1622 = vmatprep.mubr.bf16.mxu0 0
        %1623 = vmatmul.mubr.bf16.gmra.mxu0 %v1521
        %v1624 = vpop.f32.mrf.mxu0
        %v1625 = vadd.f32 0.0, %v1624
        %v1626 = vpop.f32.mrf.mxu0
        %v1627 = vpop.f32.mrf.mxu0
        %v1628 = vadd.f32 0.0, %v1627
        %v1629 = vpop.f32.mrf.mxu0
        %1630 = vmatprep.mubr.bf16.mxu0 0
        %1631 = vmatmul.mubr.bf16.gmra.mxu0 %v1522
        %v1632 = vpop.f32.mrf.mxu0
        %v1633 = vadd.f32 0.0, %v1632
        %v1634 = vpop.f32.mrf.mxu0
        %v1635 = vpop.f32.mrf.mxu0
        %v1636 = vadd.f32 0.0, %v1635
        %v1637 = vpop.f32.mrf.mxu0
        %1638 = vmatprep.mubr.bf16.mxu0 0
        %1639 = vmatmul.mubr.bf16.gmra.mxu0 %v1523
        %v1640 = vpop.f32.mrf.mxu0
        %v1641 = vadd.f32 0.0, %v1640
        %v1642 = vpop.f32.mrf.mxu0
        %v1643 = vpop.f32.mrf.mxu0
        %v1644 = vadd.f32 0.0, %v1643
        %v1645 = vpop.f32.mrf.mxu0
        %1646 = vmatprep.mubr.bf16.mxu0 0
        %1647 = vmatmul.mubr.bf16.gmra.mxu0 %v1524
        %v1648 = vpop.f32.mrf.mxu0
        %v1649 = vadd.f32 0.0, %v1648
        %v1650 = vpop.f32.mrf.mxu0
        %v1651 = vpop.f32.mrf.mxu0
        %v1652 = vadd.f32 0.0, %v1651
        %v1653 = vpop.f32.mrf.mxu0
        %1654 = vdwg.mxu0
        %v1655 = vadd.f32 %v1505, %v1625
        %v1656 = vadd.f32 %v1506, %v1628
        %v1657 = vadd.f32 %v1507, %v1633
        %v1658 = vadd.f32 %v1508, %v1636
        %v1659 = vadd.f32 %v1509, %v1641
        %v1660 = vadd.f32 %v1510, %v1644
        %v1661 = vadd.f32 %v1511, %v1649
        %v1662 = vadd.f32 %v1512, %v1652
        %v1663 = vld [vmem:[%s3] sm:$0x1]
        %v1665 = vlaneseq
        %v1666 = vshrl.u32 %v1665, 7
        %v1667 = vsub.s32 0, %v1666
        %v1668 = vrot.slane %v1663, %v1667
        %v1670 = vmul.f32 %v1655, %v1668
        %v1671 = vmul.f32 %v1656, %v1668
        %v1672 = vmul.f32 %v1657, %v1668
        %v1673 = vmul.f32 %v1658, %v1668
        %v1674 = vmul.f32 %v1659, %v1668
        %v1675 = vmul.f32 %v1660, %v1668
        %v1676 = vmul.f32 %v1661, %v1668
        %v1677 = vmul.f32 %v1662, %v1668
        %v1678 = vld [vmem:[%s4] sm:$0x1]
        %v1680 = vlaneseq
        %v1681 = vshrl.u32 %v1680, 7
        %v1682 = vsub.s32 0, %v1681
        %v1683 = vrot.slane %v1678, %v1682
        %v1685 = vadd.f32 %v1670, %v1683
        %v1686 = vadd.f32 %v1671, %v1683
        %v1687 = vadd.f32 %v1672, %v1683
        %v1688 = vadd.f32 %v1673, %v1683
        %v1689 = vadd.f32 %v1674, %v1683
        %v1690 = vadd.f32 %v1675, %v1683
        %v1691 = vadd.f32 %v1676, %v1683
        %v1692 = vadd.f32 %v1677, %v1683
        %v1693 = vmax.f32 %v1685, 0.0
        %v1694 = vmax.f32 %v1686, 0.0
        %v1695 = vmax.f32 %v1687, 0.0
        %v1696 = vmax.f32 %v1688, 0.0
        %v1697 = vmax.f32 %v1689, 0.0
        %v1698 = vmax.f32 %v1690, 0.0
        %v1699 = vmax.f32 %v1691, 0.0
        %v1700 = vmax.f32 %v1692, 0.0
        %1701 = vst [vmem:[#allocation2] sm:$0xff] 0.0
        %1702 = vst [vmem:[#allocation2 + $0x8] sm:$0x3] 0.0
        %1703 = vst [vmem:[#allocation2 + $0x10] sm:$0xff] 0.0
        %1704 = vst [vmem:[#allocation2 + $0x18] sm:$0x3] 0.0
        %1705 = vst [vmem:[#allocation2 + $0x20] sm:$0xff] 0.0
        %1706 = vst [vmem:[#allocation2 + $0x28] sm:$0x3] 0.0
        %1707 = vst [vmem:[#allocation2 + $0x30] sm:$0xff] 0.0
        %1708 = vst [vmem:[#allocation2 + $0x38] sm:$0x3] 0.0
        %1709 = vst [vmem:[#allocation2 + $0x40] sm:$0xff] 0.0
        %1710 = vst [vmem:[#allocation2 + $0x48] sm:$0x3] 0.0
        %1711 = vst [vmem:[#allocation2 + $0x50] sm:$0xff] 0.0
        %1712 = vst [vmem:[#allocation2 + $0x58] sm:$0x3] 0.0
        %1713 = vst [vmem:[#allocation2 + $0x60] sm:$0xff] 0.0
        %1714 = vst [vmem:[#allocation2 + $0x68] sm:$0x3] 0.0
        %1715 = vst [vmem:[#allocation2 + $0x70] sm:$0xff] 0.0
        %1716 = vst [vmem:[#allocation2 + $0x78] sm:$0x3] 0.0
        %1717 = vst [vmem:[#allocation2 + $0x80] sm:$0xff] 0.0
        %1718 = vst [vmem:[#allocation2 + $0x88] sm:$0x3] 0.0
        %1719 = vst [vmem:[#allocation2 + $0x90] sm:$0xff] 0.0
        %1720 = vst [vmem:[#allocation2 + $0x98] sm:$0x3] 0.0
        %s1721 = scalar_lea.vmem [#allocation2], 16
        %1722 = vst [vmem:[%s1721 + $0x1] sm:$0xff] %v1693
        %1723 = vst [vmem:[%s1721 + $0x11] sm:$0xff] %v1694
        %1724 = vst [vmem:[%s1721 + $0x21] sm:$0xff] %v1695
        %1725 = vst [vmem:[%s1721 + $0x31] sm:$0xff] %v1696
        %1726 = vst [vmem:[%s1721 + $0x41] sm:$0xff] %v1697
        %1727 = vst [vmem:[%s1721 + $0x51] sm:$0xff] %v1698
        %1728 = vst [vmem:[%s1721 + $0x61] sm:$0xff] %v1699
        %1729 = vst [vmem:[%s1721 + $0x71] sm:$0xff] %v1700
        %v1730 = vld [vmem:[#allocation2] sm:$0xff]
        %v1731 = vld [vmem:[#allocation2 + $0x10] sm:$0xff]
        %v1732 = vld [vmem:[#allocation2 + $0x20] sm:$0xff]
        %v1733 = vld [vmem:[#allocation2 + $0x30] sm:$0xff]
        %v1734 = vld [vmem:[#allocation2 + $0x40] sm:$0xff]
        %v1735 = vld [vmem:[#allocation2 + $0x50] sm:$0xff]
        %v1736 = vld [vmem:[#allocation2 + $0x60] sm:$0xff]
        %v1737 = vld [vmem:[#allocation2 + $0x70] sm:$0xff]
        %v1738 = vpack.c.bf16 %v1731, %v1730
        %v1739 = vpack.c.bf16 %v1733, %v1732
        %v1740 = vpack.c.bf16 %v1735, %v1734
        %v1741 = vpack.c.bf16 %v1737, %v1736
        %v1742 = vld [vmem:[%s2] sm:$0xf]
        %v1743 = vld [vmem:[%s2 + $0x4] sm:$0xf]
        %v1744 = vld [vmem:[%s2 + $0x8] sm:$0xf]
        %v1745 = vld [vmem:[%s2 + $0xc] sm:$0xf]
        %v1746 = vld [vmem:[%s2 + $0x10] sm:$0xf]
        %v1747 = vld [vmem:[%s2 + $0x14] sm:$0xf]
        %v1748 = vld [vmem:[%s2 + $0x18] sm:$0xf]
        %v1749 = vld [vmem:[%s2 + $0x1c] sm:$0xf]
        %v1750 = vld [vmem:[%s2 + $0x20] sm:$0xf]
        %v1751 = vld [vmem:[%s2 + $0x24] sm:$0xf]
        %v1752 = vld [vmem:[%s2 + $0x28] sm:$0xf]
        %v1753 = vld [vmem:[%s2 + $0x2c] sm:$0xf]
        %v1754 = vld [vmem:[%s2 + $0x30] sm:$0xf]
        %v1755 = vld [vmem:[%s2 + $0x34] sm:$0xf]
        %v1756 = vld [vmem:[%s2 + $0x38] sm:$0xf]
        %v1757 = vld [vmem:[%s2 + $0x3c] sm:$0xf]
        %v1758 = vld [vmem:[#allocation2 + $0x1] sm:$0xff]
        %v1759 = vld [vmem:[#allocation2 + $0x11] sm:$0xff]
        %v1760 = vld [vmem:[#allocation2 + $0x21] sm:$0xff]
        %v1761 = vld [vmem:[#allocation2 + $0x31] sm:$0xff]
        %v1762 = vld [vmem:[#allocation2 + $0x41] sm:$0xff]
        %v1763 = vld [vmem:[#allocation2 + $0x51] sm:$0xff]
        %v1764 = vld [vmem:[#allocation2 + $0x61] sm:$0xff]
        %v1765 = vld [vmem:[#allocation2 + $0x71] sm:$0xff]
        %v1766 = vpack.c.bf16 %v1759, %v1758
        %v1767 = vpack.c.bf16 %v1761, %v1760
        %v1768 = vpack.c.bf16 %v1763, %v1762
        %v1769 = vpack.c.bf16 %v1765, %v1764
        %s1770 = scalar_lea.vmem %s2, 64
        %v1771 = vld [vmem:[%s1770] sm:$0xf]
        %v1772 = vld [vmem:[%s1770 + $0x4] sm:$0xf]
        %v1773 = vld [vmem:[%s1770 + $0x8] sm:$0xf]
        %v1774 = vld [vmem:[%s1770 + $0xc] sm:$0xf]
        %v1775 = vld [vmem:[%s1770 + $0x10] sm:$0xf]
        %v1776 = vld [vmem:[%s1770 + $0x14] sm:$0xf]
        %v1777 = vld [vmem:[%s1770 + $0x18] sm:$0xf]
        %v1778 = vld [vmem:[%s1770 + $0x1c] sm:$0xf]
        %v1779 = vld [vmem:[%s1770 + $0x20] sm:$0xf]
        %v1780 = vld [vmem:[%s1770 + $0x24] sm:$0xf]
        %v1781 = vld [vmem:[%s1770 + $0x28] sm:$0xf]
        %v1782 = vld [vmem:[%s1770 + $0x2c] sm:$0xf]
        %v1783 = vld [vmem:[%s1770 + $0x30] sm:$0xf]
        %v1784 = vld [vmem:[%s1770 + $0x34] sm:$0xf]
        %v1785 = vld [vmem:[%s1770 + $0x38] sm:$0xf]
        %v1786 = vld [vmem:[%s1770 + $0x3c] sm:$0xf]
        %v1803 = vunpack.c.l.b16 %v1771
        %v1804 = vunpack.c.l.b16 %v1772
        %v1805 = vunpack.c.l.b16 %v1773
        %v1806 = vunpack.c.l.b16 %v1774
        %v1807 = vunpack.c.l.b16 %v1775
        %v1808 = vunpack.c.l.b16 %v1776
        %v1809 = vunpack.c.l.b16 %v1777
        %v1810 = vunpack.c.l.b16 %v1778
        %v1811 = vunpack.c.l.b16 %v1779
        %v1812 = vunpack.c.l.b16 %v1780
        %v1813 = vunpack.c.l.b16 %v1781
        %v1814 = vunpack.c.l.b16 %v1782
        %v1815 = vunpack.c.l.b16 %v1783
        %v1816 = vunpack.c.l.b16 %v1784
        %v1817 = vunpack.c.l.b16 %v1785
        %v1818 = vunpack.c.l.b16 %v1786
        %v1819 = vpack.c.b16 %v1804, %v1803
        %v1820 = vpack.c.b16 %v1806, %v1805
        %v1821 = vpack.c.b16 %v1808, %v1807
        %v1822 = vpack.c.b16 %v1810, %v1809
        %v1823 = vpack.c.b16 %v1812, %v1811
        %v1824 = vpack.c.b16 %v1814, %v1813
        %v1825 = vpack.c.b16 %v1816, %v1815
        %v1826 = vpack.c.b16 %v1818, %v1817
        %1835 = vmatprep.subr.bf16.mxu0 0
        %1836 = vmatpush1.bf16.msra.mxu0 %v1826
        %1837 = vmatprep.subr.bf16.mxu0 0
        %1838 = vmatpush1.bf16.msra.mxu0 %v1825
        %1839 = vmatprep.subr.bf16.mxu0 0
        %1840 = vmatpush1.bf16.msra.mxu0 %v1824
        %1841 = vmatprep.subr.bf16.mxu0 0
        %1842 = vmatpush1.bf16.msra.mxu0 %v1823
        %1843 = vmatprep.subr.bf16.mxu0 0
        %1844 = vmatpush1.bf16.msra.mxu0 %v1822
        %1845 = vmatprep.subr.bf16.mxu0 0
        %1846 = vmatpush1.bf16.msra.mxu0 %v1821
        %1847 = vmatprep.subr.bf16.mxu0 0
        %1848 = vmatpush1.bf16.msra.mxu0 %v1820
        %1849 = vmatprep.subr.bf16.mxu0 0
        %1850 = vmatpush1.bf16.msra.mxu0 %v1819
        %1851 = vmatprep.subr.bf16.mxu0 0
        %1852 = vmatpush2.bf16.msra.mxu0 0
        %1853 = vmatprep.subr.bf16.mxu0 0
        %1854 = vmatpush2.bf16.msra.mxu0 0
        %1855 = vmatprep.subr.bf16.mxu0 0
        %1856 = vmatpush2.bf16.msra.mxu0 0
        %1857 = vmatprep.subr.bf16.mxu0 0
        %1858 = vmatpush2.bf16.msra.mxu0 0
        %1859 = vmatprep.subr.bf16.mxu0 0
        %1860 = vmatpush2.bf16.msra.mxu0 0
        %1861 = vmatprep.subr.bf16.mxu0 0
        %1862 = vmatpush2.bf16.msra.mxu0 0
        %1863 = vmatprep.subr.bf16.mxu0 0
        %1864 = vmatpush2.bf16.msra.mxu0 0
        %1865 = vmatprep.subr.bf16.mxu0 0
        %1866 = vmatpush2.bf16.msra.mxu0 0
        %1867 = vmatprep.mubr.bf16.mxu0 0
        %1868 = vmatmul.mubr.bf16.gmra.mxu0 %v1766
        %v1869 = vpop.f32.mrf.mxu0
        %v1870 = vadd.f32 0.0, %v1869
        %v1871 = vpop.f32.mrf.mxu0
        %v1872 = vpop.f32.mrf.mxu0
        %v1873 = vadd.f32 0.0, %v1872
        %v1874 = vpop.f32.mrf.mxu0
        %1875 = vmatprep.mubr.bf16.mxu0 0
        %1876 = vmatmul.mubr.bf16.gmra.mxu0 %v1767
        %v1877 = vpop.f32.mrf.mxu0
        %v1878 = vadd.f32 0.0, %v1877
        %v1879 = vpop.f32.mrf.mxu0
        %v1880 = vpop.f32.mrf.mxu0
        %v1881 = vadd.f32 0.0, %v1880
        %v1882 = vpop.f32.mrf.mxu0
        %1883 = vmatprep.mubr.bf16.mxu0 0
        %1884 = vmatmul.mubr.bf16.gmra.mxu0 %v1768
        %v1885 = vpop.f32.mrf.mxu0
        %v1886 = vadd.f32 0.0, %v1885
        %v1887 = vpop.f32.mrf.mxu0
        %v1888 = vpop.f32.mrf.mxu0
        %v1889 = vadd.f32 0.0, %v1888
        %v1890 = vpop.f32.mrf.mxu0
        %1891 = vmatprep.mubr.bf16.mxu0 0
        %1892 = vmatmul.mubr.bf16.gmra.mxu0 %v1769
        %v1893 = vpop.f32.mrf.mxu0
        %v1894 = vadd.f32 0.0, %v1893
        %v1895 = vpop.f32.mrf.mxu0
        %v1896 = vpop.f32.mrf.mxu0
        %v1897 = vadd.f32 0.0, %v1896
        %v1898 = vpop.f32.mrf.mxu0
        %1899 = vdwg.mxu0
        %v1916 = vunpack.c.l.b16 %v1742
        %v1917 = vunpack.c.l.b16 %v1743
        %v1918 = vunpack.c.l.b16 %v1744
        %v1919 = vunpack.c.l.b16 %v1745
        %v1920 = vunpack.c.l.b16 %v1746
        %v1921 = vunpack.c.l.b16 %v1747
        %v1922 = vunpack.c.l.b16 %v1748
        %v1923 = vunpack.c.l.b16 %v1749
        %v1924 = vunpack.c.l.b16 %v1750
        %v1925 = vunpack.c.l.b16 %v1751
        %v1926 = vunpack.c.l.b16 %v1752
        %v1927 = vunpack.c.l.b16 %v1753
        %v1928 = vunpack.c.l.b16 %v1754
        %v1929 = vunpack.c.l.b16 %v1755
        %v1930 = vunpack.c.l.b16 %v1756
        %v1931 = vunpack.c.l.b16 %v1757
        %v1932 = vpack.c.b16 %v1917, %v1916
        %v1933 = vpack.c.b16 %v1919, %v1918
        %v1934 = vpack.c.b16 %v1921, %v1920
        %v1935 = vpack.c.b16 %v1923, %v1922
        %v1936 = vpack.c.b16 %v1925, %v1924
        %v1937 = vpack.c.b16 %v1927, %v1926
        %v1938 = vpack.c.b16 %v1929, %v1928
        %v1939 = vpack.c.b16 %v1931, %v1930
        %1948 = vmatprep.subr.bf16.mxu0 0
        %1949 = vmatpush1.bf16.msra.mxu0 %v1939
        %1950 = vmatprep.subr.bf16.mxu0 0
        %1951 = vmatpush1.bf16.msra.mxu0 %v1938
        %1952 = vmatprep.subr.bf16.mxu0 0
        %1953 = vmatpush1.bf16.msra.mxu0 %v1937
        %1954 = vmatprep.subr.bf16.mxu0 0
        %1955 = vmatpush1.bf16.msra.mxu0 %v1936
        %1956 = vmatprep.subr.bf16.mxu0 0
        %1957 = vmatpush1.bf16.msra.mxu0 %v1935
        %1958 = vmatprep.subr.bf16.mxu0 0
        %1959 = vmatpush1.bf16.msra.mxu0 %v1934
        %1960 = vmatprep.subr.bf16.mxu0 0
        %1961 = vmatpush1.bf16.msra.mxu0 %v1933
        %1962 = vmatprep.subr.bf16.mxu0 0
        %1963 = vmatpush1.bf16.msra.mxu0 %v1932
        %1964 = vmatprep.subr.bf16.mxu0 0
        %1965 = vmatpush2.bf16.msra.mxu0 0
        %1966 = vmatprep.subr.bf16.mxu0 0
        %1967 = vmatpush2.bf16.msra.mxu0 0
        %1968 = vmatprep.subr.bf16.mxu0 0
        %1969 = vmatpush2.bf16.msra.mxu0 0
        %1970 = vmatprep.subr.bf16.mxu0 0
        %1971 = vmatpush2.bf16.msra.mxu0 0
        %1972 = vmatprep.subr.bf16.mxu0 0
        %1973 = vmatpush2.bf16.msra.mxu0 0
        %1974 = vmatprep.subr.bf16.mxu0 0
        %1975 = vmatpush2.bf16.msra.mxu0 0
        %1976 = vmatprep.subr.bf16.mxu0 0
        %1977 = vmatpush2.bf16.msra.mxu0 0
        %1978 = vmatprep.subr.bf16.mxu0 0
        %1979 = vmatpush2.bf16.msra.mxu0 0
        %1980 = vmatprep.mubr.bf16.mxu0 0
        %1981 = vmatmul.mubr.bf16.gmra.mxu0 %v1738
        %v1982 = vpop.f32.mrf.mxu0
        %v1983 = vadd.f32 %v1870, %v1982
        %v1984 = vpop.f32.mrf.mxu0
        %v1985 = vpop.f32.mrf.mxu0
        %v1986 = vadd.f32 %v1873, %v1985
        %v1987 = vpop.f32.mrf.mxu0
        %1988 = vmatprep.mubr.bf16.mxu0 0
        %1989 = vmatmul.mubr.bf16.gmra.mxu0 %v1739
        %v1990 = vpop.f32.mrf.mxu0
        %v1991 = vadd.f32 %v1878, %v1990
        %v1992 = vpop.f32.mrf.mxu0
        %v1993 = vpop.f32.mrf.mxu0
        %v1994 = vadd.f32 %v1881, %v1993
        %v1995 = vpop.f32.mrf.mxu0
        %1996 = vmatprep.mubr.bf16.mxu0 0
        %1997 = vmatmul.mubr.bf16.gmra.mxu0 %v1740
        %v1998 = vpop.f32.mrf.mxu0
        %v1999 = vadd.f32 %v1886, %v1998
        %v2000 = vpop.f32.mrf.mxu0
        %v2001 = vpop.f32.mrf.mxu0
        %v2002 = vadd.f32 %v1889, %v2001
        %v2003 = vpop.f32.mrf.mxu0
        %2004 = vmatprep.mubr.bf16.mxu0 0
        %2005 = vmatmul.mubr.bf16.gmra.mxu0 %v1741
        %v2006 = vpop.f32.mrf.mxu0
        %v2007 = vadd.f32 %v1894, %v2006
        %v2008 = vpop.f32.mrf.mxu0
        %v2009 = vpop.f32.mrf.mxu0
        %v2010 = vadd.f32 %v1897, %v2009
        %v2011 = vpop.f32.mrf.mxu0
        %2012 = vdwg.mxu0
        %v2013 = vld [vmem:[#allocation2 + $0x2] sm:$0xff]
        %v2014 = vld [vmem:[#allocation2 + $0x12] sm:$0xff]
        %v2015 = vld [vmem:[#allocation2 + $0x22] sm:$0xff]
        %v2016 = vld [vmem:[#allocation2 + $0x32] sm:$0xff]
        %v2017 = vld [vmem:[#allocation2 + $0x42] sm:$0xff]
        %v2018 = vld [vmem:[#allocation2 + $0x52] sm:$0xff]
        %v2019 = vld [vmem:[#allocation2 + $0x62] sm:$0xff]
        %v2020 = vld [vmem:[#allocation2 + $0x72] sm:$0xff]
        %v2021 = vpack.c.bf16 %v2014, %v2013
        %v2022 = vpack.c.bf16 %v2016, %v2015
        %v2023 = vpack.c.bf16 %v2018, %v2017
        %v2024 = vpack.c.bf16 %v2020, %v2019
        %s2025 = scalar_lea.vmem %s2, 128
        %v2026 = vld [vmem:[%s2025] sm:$0xf]
        %v2027 = vld [vmem:[%s2025 + $0x4] sm:$0xf]
        %v2028 = vld [vmem:[%s2025 + $0x8] sm:$0xf]
        %v2029 = vld [vmem:[%s2025 + $0xc] sm:$0xf]
        %v2030 = vld [vmem:[%s2025 + $0x10] sm:$0xf]
        %v2031 = vld [vmem:[%s2025 + $0x14] sm:$0xf]
        %v2032 = vld [vmem:[%s2025 + $0x18] sm:$0xf]
        %v2033 = vld [vmem:[%s2025 + $0x1c] sm:$0xf]
        %v2034 = vld [vmem:[%s2025 + $0x20] sm:$0xf]
        %v2035 = vld [vmem:[%s2025 + $0x24] sm:$0xf]
        %v2036 = vld [vmem:[%s2025 + $0x28] sm:$0xf]
        %v2037 = vld [vmem:[%s2025 + $0x2c] sm:$0xf]
        %v2038 = vld [vmem:[%s2025 + $0x30] sm:$0xf]
        %v2039 = vld [vmem:[%s2025 + $0x34] sm:$0xf]
        %v2040 = vld [vmem:[%s2025 + $0x38] sm:$0xf]
        %v2041 = vld [vmem:[%s2025 + $0x3c] sm:$0xf]
        %v2058 = vunpack.c.l.b16 %v2026
        %v2059 = vunpack.c.l.b16 %v2027
        %v2060 = vunpack.c.l.b16 %v2028
        %v2061 = vunpack.c.l.b16 %v2029
        %v2062 = vunpack.c.l.b16 %v2030
        %v2063 = vunpack.c.l.b16 %v2031
        %v2064 = vunpack.c.l.b16 %v2032
        %v2065 = vunpack.c.l.b16 %v2033
        %v2066 = vunpack.c.l.b16 %v2034
        %v2067 = vunpack.c.l.b16 %v2035
        %v2068 = vunpack.c.l.b16 %v2036
        %v2069 = vunpack.c.l.b16 %v2037
        %v2070 = vunpack.c.l.b16 %v2038
        %v2071 = vunpack.c.l.b16 %v2039
        %v2072 = vunpack.c.l.b16 %v2040
        %v2073 = vunpack.c.l.b16 %v2041
        %v2074 = vpack.c.b16 %v2059, %v2058
        %v2075 = vpack.c.b16 %v2061, %v2060
        %v2076 = vpack.c.b16 %v2063, %v2062
        %v2077 = vpack.c.b16 %v2065, %v2064
        %v2078 = vpack.c.b16 %v2067, %v2066
        %v2079 = vpack.c.b16 %v2069, %v2068
        %v2080 = vpack.c.b16 %v2071, %v2070
        %v2081 = vpack.c.b16 %v2073, %v2072
        %2090 = vmatprep.subr.bf16.mxu0 0
        %2091 = vmatpush1.bf16.msra.mxu0 %v2081
        %2092 = vmatprep.subr.bf16.mxu0 0
        %2093 = vmatpush1.bf16.msra.mxu0 %v2080
        %2094 = vmatprep.subr.bf16.mxu0 0
        %2095 = vmatpush1.bf16.msra.mxu0 %v2079
        %2096 = vmatprep.subr.bf16.mxu0 0
        %2097 = vmatpush1.bf16.msra.mxu0 %v2078
        %2098 = vmatprep.subr.bf16.mxu0 0
        %2099 = vmatpush1.bf16.msra.mxu0 %v2077
        %2100 = vmatprep.subr.bf16.mxu0 0
        %2101 = vmatpush1.bf16.msra.mxu0 %v2076
        %2102 = vmatprep.subr.bf16.mxu0 0
        %2103 = vmatpush1.bf16.msra.mxu0 %v2075
        %2104 = vmatprep.subr.bf16.mxu0 0
        %2105 = vmatpush1.bf16.msra.mxu0 %v2074
        %2106 = vmatprep.subr.bf16.mxu0 0
        %2107 = vmatpush2.bf16.msra.mxu0 0
        %2108 = vmatprep.subr.bf16.mxu0 0
        %2109 = vmatpush2.bf16.msra.mxu0 0
        %2110 = vmatprep.subr.bf16.mxu0 0
        %2111 = vmatpush2.bf16.msra.mxu0 0
        %2112 = vmatprep.subr.bf16.mxu0 0
        %2113 = vmatpush2.bf16.msra.mxu0 0
        %2114 = vmatprep.subr.bf16.mxu0 0
        %2115 = vmatpush2.bf16.msra.mxu0 0
        %2116 = vmatprep.subr.bf16.mxu0 0
        %2117 = vmatpush2.bf16.msra.mxu0 0
        %2118 = vmatprep.subr.bf16.mxu0 0
        %2119 = vmatpush2.bf16.msra.mxu0 0
        %2120 = vmatprep.subr.bf16.mxu0 0
        %2121 = vmatpush2.bf16.msra.mxu0 0
        %2122 = vmatprep.mubr.bf16.mxu0 0
        %2123 = vmatmul.mubr.bf16.gmra.mxu0 %v2021
        %v2124 = vpop.f32.mrf.mxu0
        %v2125 = vadd.f32 0.0, %v2124
        %v2126 = vpop.f32.mrf.mxu0
        %v2127 = vpop.f32.mrf.mxu0
        %v2128 = vadd.f32 0.0, %v2127
        %v2129 = vpop.f32.mrf.mxu0
        %2130 = vmatprep.mubr.bf16.mxu0 0
        %2131 = vmatmul.mubr.bf16.gmra.mxu0 %v2022
        %v2132 = vpop.f32.mrf.mxu0
        %v2133 = vadd.f32 0.0, %v2132
        %v2134 = vpop.f32.mrf.mxu0
        %v2135 = vpop.f32.mrf.mxu0
        %v2136 = vadd.f32 0.0, %v2135
        %v2137 = vpop.f32.mrf.mxu0
        %2138 = vmatprep.mubr.bf16.mxu0 0
        %2139 = vmatmul.mubr.bf16.gmra.mxu0 %v2023
        %v2140 = vpop.f32.mrf.mxu0
        %v2141 = vadd.f32 0.0, %v2140
        %v2142 = vpop.f32.mrf.mxu0
        %v2143 = vpop.f32.mrf.mxu0
        %v2144 = vadd.f32 0.0, %v2143
        %v2145 = vpop.f32.mrf.mxu0
        %2146 = vmatprep.mubr.bf16.mxu0 0
        %2147 = vmatmul.mubr.bf16.gmra.mxu0 %v2024
        %v2148 = vpop.f32.mrf.mxu0
        %v2149 = vadd.f32 0.0, %v2148
        %v2150 = vpop.f32.mrf.mxu0
        %v2151 = vpop.f32.mrf.mxu0
        %v2152 = vadd.f32 0.0, %v2151
        %v2153 = vpop.f32.mrf.mxu0
        %2154 = vdwg.mxu0
        %v2155 = vadd.f32 %v1983, %v2125
        %v2156 = vadd.f32 %v1986, %v2128
        %v2157 = vadd.f32 %v1991, %v2133
        %v2158 = vadd.f32 %v1994, %v2136
        %v2159 = vadd.f32 %v1999, %v2141
        %v2160 = vadd.f32 %v2002, %v2144
        %v2161 = vadd.f32 %v2007, %v2149
        %v2162 = vadd.f32 %v2010, %v2152
        %v2163 = vld [vmem:[%s1721] sm:$0xff]
        %v2164 = vld [vmem:[%s1721 + $0x10] sm:$0xff]
        %v2165 = vld [vmem:[%s1721 + $0x20] sm:$0xff]
        %v2166 = vld [vmem:[%s1721 + $0x30] sm:$0xff]
        %v2167 = vld [vmem:[%s1721 + $0x40] sm:$0xff]
        %v2168 = vld [vmem:[%s1721 + $0x50] sm:$0xff]
        %v2169 = vld [vmem:[%s1721 + $0x60] sm:$0xff]
        %v2170 = vld [vmem:[%s1721 + $0x70] sm:$0xff]
        %v2171 = vpack.c.bf16 %v2164, %v2163
        %v2172 = vpack.c.bf16 %v2166, %v2165
        %v2173 = vpack.c.bf16 %v2168, %v2167
        %v2174 = vpack.c.bf16 %v2170, %v2169
        %s2175 = scalar_lea.vmem %s2, 192
        %v2176 = vld [vmem:[%s2175] sm:$0xf]
        %v2177 = vld [vmem:[%s2175 + $0x4] sm:$0xf]
        %v2178 = vld [vmem:[%s2175 + $0x8] sm:$0xf]
        %v2179 = vld [vmem:[%s2175 + $0xc] sm:$0xf]
        %v2180 = vld [vmem:[%s2175 + $0x10] sm:$0xf]
        %v2181 = vld [vmem:[%s2175 + $0x14] sm:$0xf]
        %v2182 = vld [vmem:[%s2175 + $0x18] sm:$0xf]
        %v2183 = vld [vmem:[%s2175 + $0x1c] sm:$0xf]
        %v2184 = vld [vmem:[%s2175 + $0x20] sm:$0xf]
        %v2185 = vld [vmem:[%s2175 + $0x24] sm:$0xf]
        %v2186 = vld [vmem:[%s2175 + $0x28] sm:$0xf]
        %v2187 = vld [vmem:[%s2175 + $0x2c] sm:$0xf]
        %v2188 = vld [vmem:[%s2175 + $0x30] sm:$0xf]
        %v2189 = vld [vmem:[%s2175 + $0x34] sm:$0xf]
        %v2190 = vld [vmem:[%s2175 + $0x38] sm:$0xf]
        %v2191 = vld [vmem:[%s2175 + $0x3c] sm:$0xf]
        %v2208 = vunpack.c.l.b16 %v2176
        %v2209 = vunpack.c.l.b16 %v2177
        %v2210 = vunpack.c.l.b16 %v2178
        %v2211 = vunpack.c.l.b16 %v2179
        %v2212 = vunpack.c.l.b16 %v2180
        %v2213 = vunpack.c.l.b16 %v2181
        %v2214 = vunpack.c.l.b16 %v2182
        %v2215 = vunpack.c.l.b16 %v2183
        %v2216 = vunpack.c.l.b16 %v2184
        %v2217 = vunpack.c.l.b16 %v2185
        %v2218 = vunpack.c.l.b16 %v2186
        %v2219 = vunpack.c.l.b16 %v2187
        %v2220 = vunpack.c.l.b16 %v2188
        %v2221 = vunpack.c.l.b16 %v2189
        %v2222 = vunpack.c.l.b16 %v2190
        %v2223 = vunpack.c.l.b16 %v2191
        %v2224 = vpack.c.b16 %v2209, %v2208
        %v2225 = vpack.c.b16 %v2211, %v2210
        %v2226 = vpack.c.b16 %v2213, %v2212
        %v2227 = vpack.c.b16 %v2215, %v2214
        %v2228 = vpack.c.b16 %v2217, %v2216
        %v2229 = vpack.c.b16 %v2219, %v2218
        %v2230 = vpack.c.b16 %v2221, %v2220
        %v2231 = vpack.c.b16 %v2223, %v2222
        %2240 = vmatprep.subr.bf16.mxu0 0
        %2241 = vmatpush1.bf16.msra.mxu0 %v2231
        %2242 = vmatprep.subr.bf16.mxu0 0
        %2243 = vmatpush1.bf16.msra.mxu0 %v2230
        %2244 = vmatprep.subr.bf16.mxu0 0
        %2245 = vmatpush1.bf16.msra.mxu0 %v2229
        %2246 = vmatprep.subr.bf16.mxu0 0
        %2247 = vmatpush1.bf16.msra.mxu0 %v2228
        %2248 = vmatprep.subr.bf16.mxu0 0
        %2249 = vmatpush1.bf16.msra.mxu0 %v2227
        %2250 = vmatprep.subr.bf16.mxu0 0
        %2251 = vmatpush1.bf16.msra.mxu0 %v2226
        %2252 = vmatprep.subr.bf16.mxu0 0
        %2253 = vmatpush1.bf16.msra.mxu0 %v2225
        %2254 = vmatprep.subr.bf16.mxu0 0
        %2255 = vmatpush1.bf16.msra.mxu0 %v2224
        %2256 = vmatprep.subr.bf16.mxu0 0
        %2257 = vmatpush2.bf16.msra.mxu0 0
        %2258 = vmatprep.subr.bf16.mxu0 0
        %2259 = vmatpush2.bf16.msra.mxu0 0
        %2260 = vmatprep.subr.bf16.mxu0 0
        %2261 = vmatpush2.bf16.msra.mxu0 0
        %2262 = vmatprep.subr.bf16.mxu0 0
        %2263 = vmatpush2.bf16.msra.mxu0 0
        %2264 = vmatprep.subr.bf16.mxu0 0
        %2265 = vmatpush2.bf16.msra.mxu0 0
        %2266 = vmatprep.subr.bf16.mxu0 0
        %2267 = vmatpush2.bf16.msra.mxu0 0
        %2268 = vmatprep.subr.bf16.mxu0 0
        %2269 = vmatpush2.bf16.msra.mxu0 0
        %2270 = vmatprep.subr.bf16.mxu0 0
        %2271 = vmatpush2.bf16.msra.mxu0 0
        %2272 = vmatprep.mubr.bf16.mxu0 0
        %2273 = vmatmul.mubr.bf16.gmra.mxu0 %v2171
        %v2274 = vpop.f32.mrf.mxu0
        %v2275 = vadd.f32 0.0, %v2274
        %v2276 = vpop.f32.mrf.mxu0
        %v2277 = vpop.f32.mrf.mxu0
        %v2278 = vadd.f32 0.0, %v2277
        %v2279 = vpop.f32.mrf.mxu0
        %2280 = vmatprep.mubr.bf16.mxu0 0
        %2281 = vmatmul.mubr.bf16.gmra.mxu0 %v2172
        %v2282 = vpop.f32.mrf.mxu0
        %v2283 = vadd.f32 0.0, %v2282
        %v2284 = vpop.f32.mrf.mxu0
        %v2285 = vpop.f32.mrf.mxu0
        %v2286 = vadd.f32 0.0, %v2285
        %v2287 = vpop.f32.mrf.mxu0
        %2288 = vmatprep.mubr.bf16.mxu0 0
        %2289 = vmatmul.mubr.bf16.gmra.mxu0 %v2173
        %v2290 = vpop.f32.mrf.mxu0
        %v2291 = vadd.f32 0.0, %v2290
        %v2292 = vpop.f32.mrf.mxu0
        %v2293 = vpop.f32.mrf.mxu0
        %v2294 = vadd.f32 0.0, %v2293
        %v2295 = vpop.f32.mrf.mxu0
        %2296 = vmatprep.mubr.bf16.mxu0 0
        %2297 = vmatmul.mubr.bf16.gmra.mxu0 %v2174
        %v2298 = vpop.f32.mrf.mxu0
        %v2299 = vadd.f32 0.0, %v2298
        %v2300 = vpop.f32.mrf.mxu0
        %v2301 = vpop.f32.mrf.mxu0
        %v2302 = vadd.f32 0.0, %v2301
        %v2303 = vpop.f32.mrf.mxu0
        %2304 = vdwg.mxu0
        %v2305 = vadd.f32 %v2155, %v2275
        %v2306 = vadd.f32 %v2156, %v2278
        %v2307 = vadd.f32 %v2157, %v2283
        %v2308 = vadd.f32 %v2158, %v2286
        %v2309 = vadd.f32 %v2159, %v2291
        %v2310 = vadd.f32 %v2160, %v2294
        %v2311 = vadd.f32 %v2161, %v2299
        %v2312 = vadd.f32 %v2162, %v2302
        %v2313 = vld [vmem:[%s1721 + $0x1] sm:$0xff]
        %v2314 = vld [vmem:[%s1721 + $0x11] sm:$0xff]
        %v2315 = vld [vmem:[%s1721 + $0x21] sm:$0xff]
        %v2316 = vld [vmem:[%s1721 + $0x31] sm:$0xff]
        %v2317 = vld [vmem:[%s1721 + $0x41] sm:$0xff]
        %v2318 = vld [vmem:[%s1721 + $0x51] sm:$0xff]
        %v2319 = vld [vmem:[%s1721 + $0x61] sm:$0xff]
        %v2320 = vld [vmem:[%s1721 + $0x71] sm:$0xff]
        %v2321 = vpack.c.bf16 %v2314, %v2313
        %v2322 = vpack.c.bf16 %v2316, %v2315
        %v2323 = vpack.c.bf16 %v2318, %v2317
        %v2324 = vpack.c.bf16 %v2320, %v2319
        %s2325 = scalar_lea.vmem %s2, 256
        %v2326 = vld [vmem:[%s2325] sm:$0xf]
        %v2327 = vld [vmem:[%s2325 + $0x4] sm:$0xf]
        %v2328 = vld [vmem:[%s2325 + $0x8] sm:$0xf]
        %v2329 = vld [vmem:[%s2325 + $0xc] sm:$0xf]
        %v2330 = vld [vmem:[%s2325 + $0x10] sm:$0xf]
        %v2331 = vld [vmem:[%s2325 + $0x14] sm:$0xf]
        %v2332 = vld [vmem:[%s2325 + $0x18] sm:$0xf]
        %v2333 = vld [vmem:[%s2325 + $0x1c] sm:$0xf]
        %v2334 = vld [vmem:[%s2325 + $0x20] sm:$0xf]
        %v2335 = vld [vmem:[%s2325 + $0x24] sm:$0xf]
        %v2336 = vld [vmem:[%s2325 + $0x28] sm:$0xf]
        %v2337 = vld [vmem:[%s2325 + $0x2c] sm:$0xf]
        %v2338 = vld [vmem:[%s2325 + $0x30] sm:$0xf]
        %v2339 = vld [vmem:[%s2325 + $0x34] sm:$0xf]
        %v2340 = vld [vmem:[%s2325 + $0x38] sm:$0xf]
        %v2341 = vld [vmem:[%s2325 + $0x3c] sm:$0xf]
        %v2358 = vunpack.c.l.b16 %v2326
        %v2359 = vunpack.c.l.b16 %v2327
        %v2360 = vunpack.c.l.b16 %v2328
        %v2361 = vunpack.c.l.b16 %v2329
        %v2362 = vunpack.c.l.b16 %v2330
        %v2363 = vunpack.c.l.b16 %v2331
        %v2364 = vunpack.c.l.b16 %v2332
        %v2365 = vunpack.c.l.b16 %v2333
        %v2366 = vunpack.c.l.b16 %v2334
        %v2367 = vunpack.c.l.b16 %v2335
        %v2368 = vunpack.c.l.b16 %v2336
        %v2369 = vunpack.c.l.b16 %v2337
        %v2370 = vunpack.c.l.b16 %v2338
        %v2371 = vunpack.c.l.b16 %v2339
        %v2372 = vunpack.c.l.b16 %v2340
        %v2373 = vunpack.c.l.b16 %v2341
        %v2374 = vpack.c.b16 %v2359, %v2358
        %v2375 = vpack.c.b16 %v2361, %v2360
        %v2376 = vpack.c.b16 %v2363, %v2362
        %v2377 = vpack.c.b16 %v2365, %v2364
        %v2378 = vpack.c.b16 %v2367, %v2366
        %v2379 = vpack.c.b16 %v2369, %v2368
        %v2380 = vpack.c.b16 %v2371, %v2370
        %v2381 = vpack.c.b16 %v2373, %v2372
        %2390 = vmatprep.subr.bf16.mxu0 0
        %2391 = vmatpush1.bf16.msra.mxu0 %v2381
        %2392 = vmatprep.subr.bf16.mxu0 0
        %2393 = vmatpush1.bf16.msra.mxu0 %v2380
        %2394 = vmatprep.subr.bf16.mxu0 0
        %2395 = vmatpush1.bf16.msra.mxu0 %v2379
        %2396 = vmatprep.subr.bf16.mxu0 0
        %2397 = vmatpush1.bf16.msra.mxu0 %v2378
        %2398 = vmatprep.subr.bf16.mxu0 0
        %2399 = vmatpush1.bf16.msra.mxu0 %v2377
        %2400 = vmatprep.subr.bf16.mxu0 0
        %2401 = vmatpush1.bf16.msra.mxu0 %v2376
        %2402 = vmatprep.subr.bf16.mxu0 0
        %2403 = vmatpush1.bf16.msra.mxu0 %v2375
        %2404 = vmatprep.subr.bf16.mxu0 0
        %2405 = vmatpush1.bf16.msra.mxu0 %v2374
        %2406 = vmatprep.subr.bf16.mxu0 0
        %2407 = vmatpush2.bf16.msra.mxu0 0
        %2408 = vmatprep.subr.bf16.mxu0 0
        %2409 = vmatpush2.bf16.msra.mxu0 0
        %2410 = vmatprep.subr.bf16.mxu0 0
        %2411 = vmatpush2.bf16.msra.mxu0 0
        %2412 = vmatprep.subr.bf16.mxu0 0
        %2413 = vmatpush2.bf16.msra.mxu0 0
        %2414 = vmatprep.subr.bf16.mxu0 0
        %2415 = vmatpush2.bf16.msra.mxu0 0
        %2416 = vmatprep.subr.bf16.mxu0 0
        %2417 = vmatpush2.bf16.msra.mxu0 0
        %2418 = vmatprep.subr.bf16.mxu0 0
        %2419 = vmatpush2.bf16.msra.mxu0 0
        %2420 = vmatprep.subr.bf16.mxu0 0
        %2421 = vmatpush2.bf16.msra.mxu0 0
        %2422 = vmatprep.mubr.bf16.mxu0 0
        %2423 = vmatmul.mubr.bf16.gmra.mxu0 %v2321
        %v2424 = vpop.f32.mrf.mxu0
        %v2425 = vadd.f32 0.0, %v2424
        %v2426 = vpop.f32.mrf.mxu0
        %v2427 = vpop.f32.mrf.mxu0
        %v2428 = vadd.f32 0.0, %v2427
        %v2429 = vpop.f32.mrf.mxu0
        %2430 = vmatprep.mubr.bf16.mxu0 0
        %2431 = vmatmul.mubr.bf16.gmra.mxu0 %v2322
        %v2432 = vpop.f32.mrf.mxu0
        %v2433 = vadd.f32 0.0, %v2432
        %v2434 = vpop.f32.mrf.mxu0
        %v2435 = vpop.f32.mrf.mxu0
        %v2436 = vadd.f32 0.0, %v2435
        %v2437 = vpop.f32.mrf.mxu0
        %2438 = vmatprep.mubr.bf16.mxu0 0
        %2439 = vmatmul.mubr.bf16.gmra.mxu0 %v2323
        %v2440 = vpop.f32.mrf.mxu0
        %v2441 = vadd.f32 0.0, %v2440
        %v2442 = vpop.f32.mrf.mxu0
        %v2443 = vpop.f32.mrf.mxu0
        %v2444 = vadd.f32 0.0, %v2443
        %v2445 = vpop.f32.mrf.mxu0
        %2446 = vmatprep.mubr.bf16.mxu0 0
        %2447 = vmatmul.mubr.bf16.gmra.mxu0 %v2324
        %v2448 = vpop.f32.mrf.mxu0
        %v2449 = vadd.f32 0.0, %v2448
        %v2450 = vpop.f32.mrf.mxu0
        %v2451 = vpop.f32.mrf.mxu0
        %v2452 = vadd.f32 0.0, %v2451
        %v2453 = vpop.f32.mrf.mxu0
        %2454 = vdwg.mxu0
        %v2455 = vadd.f32 %v2305, %v2425
        %v2456 = vadd.f32 %v2306, %v2428
        %v2457 = vadd.f32 %v2307, %v2433
        %v2458 = vadd.f32 %v2308, %v2436
        %v2459 = vadd.f32 %v2309, %v2441
        %v2460 = vadd.f32 %v2310, %v2444
        %v2461 = vadd.f32 %v2311, %v2449
        %v2462 = vadd.f32 %v2312, %v2452
        %v2463 = vld [vmem:[%s1721 + $0x2] sm:$0xff]
        %v2464 = vld [vmem:[%s1721 + $0x12] sm:$0xff]
        %v2465 = vld [vmem:[%s1721 + $0x22] sm:$0xff]
        %v2466 = vld [vmem:[%s1721 + $0x32] sm:$0xff]
        %v2467 = vld [vmem:[%s1721 + $0x42] sm:$0xff]
        %v2468 = vld [vmem:[%s1721 + $0x52] sm:$0xff]
        %v2469 = vld [vmem:[%s1721 + $0x62] sm:$0xff]
        %v2470 = vld [vmem:[%s1721 + $0x72] sm:$0xff]
        %v2471 = vpack.c.bf16 %v2464, %v2463
        %v2472 = vpack.c.bf16 %v2466, %v2465
        %v2473 = vpack.c.bf16 %v2468, %v2467
        %v2474 = vpack.c.bf16 %v2470, %v2469
        %s2475 = scalar_lea.vmem %s2, 320
        %v2476 = vld [vmem:[%s2475] sm:$0xf]
        %v2477 = vld [vmem:[%s2475 + $0x4] sm:$0xf]
        %v2478 = vld [vmem:[%s2475 + $0x8] sm:$0xf]
        %v2479 = vld [vmem:[%s2475 + $0xc] sm:$0xf]
        %v2480 = vld [vmem:[%s2475 + $0x10] sm:$0xf]
        %v2481 = vld [vmem:[%s2475 + $0x14] sm:$0xf]
        %v2482 = vld [vmem:[%s2475 + $0x18] sm:$0xf]
        %v2483 = vld [vmem:[%s2475 + $0x1c] sm:$0xf]
        %v2484 = vld [vmem:[%s2475 + $0x20] sm:$0xf]
        %v2485 = vld [vmem:[%s2475 + $0x24] sm:$0xf]
        %v2486 = vld [vmem:[%s2475 + $0x28] sm:$0xf]
        %v2487 = vld [vmem:[%s2475 + $0x2c] sm:$0xf]
        %v2488 = vld [vmem:[%s2475 + $0x30] sm:$0xf]
        %v2489 = vld [vmem:[%s2475 + $0x34] sm:$0xf]
        %v2490 = vld [vmem:[%s2475 + $0x38] sm:$0xf]
        %v2491 = vld [vmem:[%s2475 + $0x3c] sm:$0xf]
        %v2508 = vunpack.c.l.b16 %v2476
        %v2509 = vunpack.c.l.b16 %v2477
        %v2510 = vunpack.c.l.b16 %v2478
        %v2511 = vunpack.c.l.b16 %v2479
        %v2512 = vunpack.c.l.b16 %v2480
        %v2513 = vunpack.c.l.b16 %v2481
        %v2514 = vunpack.c.l.b16 %v2482
        %v2515 = vunpack.c.l.b16 %v2483
        %v2516 = vunpack.c.l.b16 %v2484
        %v2517 = vunpack.c.l.b16 %v2485
        %v2518 = vunpack.c.l.b16 %v2486
        %v2519 = vunpack.c.l.b16 %v2487
        %v2520 = vunpack.c.l.b16 %v2488
        %v2521 = vunpack.c.l.b16 %v2489
        %v2522 = vunpack.c.l.b16 %v2490
        %v2523 = vunpack.c.l.b16 %v2491
        %v2524 = vpack.c.b16 %v2509, %v2508
        %v2525 = vpack.c.b16 %v2511, %v2510
        %v2526 = vpack.c.b16 %v2513, %v2512
        %v2527 = vpack.c.b16 %v2515, %v2514
        %v2528 = vpack.c.b16 %v2517, %v2516
        %v2529 = vpack.c.b16 %v2519, %v2518
        %v2530 = vpack.c.b16 %v2521, %v2520
        %v2531 = vpack.c.b16 %v2523, %v2522
        %2540 = vmatprep.subr.bf16.mxu0 0
        %2541 = vmatpush1.bf16.msra.mxu0 %v2531
        %2542 = vmatprep.subr.bf16.mxu0 0
        %2543 = vmatpush1.bf16.msra.mxu0 %v2530
        %2544 = vmatprep.subr.bf16.mxu0 0
        %2545 = vmatpush1.bf16.msra.mxu0 %v2529
        %2546 = vmatprep.subr.bf16.mxu0 0
        %2547 = vmatpush1.bf16.msra.mxu0 %v2528
        %2548 = vmatprep.subr.bf16.mxu0 0
        %2549 = vmatpush1.bf16.msra.mxu0 %v2527
        %2550 = vmatprep.subr.bf16.mxu0 0
        %2551 = vmatpush1.bf16.msra.mxu0 %v2526
        %2552 = vmatprep.subr.bf16.mxu0 0
        %2553 = vmatpush1.bf16.msra.mxu0 %v2525
        %2554 = vmatprep.subr.bf16.mxu0 0
        %2555 = vmatpush1.bf16.msra.mxu0 %v2524
        %2556 = vmatprep.subr.bf16.mxu0 0
        %2557 = vmatpush2.bf16.msra.mxu0 0
        %2558 = vmatprep.subr.bf16.mxu0 0
        %2559 = vmatpush2.bf16.msra.mxu0 0
        %2560 = vmatprep.subr.bf16.mxu0 0
        %2561 = vmatpush2.bf16.msra.mxu0 0
        %2562 = vmatprep.subr.bf16.mxu0 0
        %2563 = vmatpush2.bf16.msra.mxu0 0
        %2564 = vmatprep.subr.bf16.mxu0 0
        %2565 = vmatpush2.bf16.msra.mxu0 0
        %2566 = vmatprep.subr.bf16.mxu0 0
        %2567 = vmatpush2.bf16.msra.mxu0 0
        %2568 = vmatprep.subr.bf16.mxu0 0
        %2569 = vmatpush2.bf16.msra.mxu0 0
        %2570 = vmatprep.subr.bf16.mxu0 0
        %2571 = vmatpush2.bf16.msra.mxu0 0
        %2572 = vmatprep.mubr.bf16.mxu0 0
        %2573 = vmatmul.mubr.bf16.gmra.mxu0 %v2471
        %v2574 = vpop.f32.mrf.mxu0
        %v2575 = vadd.f32 0.0, %v2574
        %v2576 = vpop.f32.mrf.mxu0
        %v2577 = vpop.f32.mrf.mxu0
        %v2578 = vadd.f32 0.0, %v2577
        %v2579 = vpop.f32.mrf.mxu0
        %2580 = vmatprep.mubr.bf16.mxu0 0
        %2581 = vmatmul.mubr.bf16.gmra.mxu0 %v2472
        %v2582 = vpop.f32.mrf.mxu0
        %v2583 = vadd.f32 0.0, %v2582
        %v2584 = vpop.f32.mrf.mxu0
        %v2585 = vpop.f32.mrf.mxu0
        %v2586 = vadd.f32 0.0, %v2585
        %v2587 = vpop.f32.mrf.mxu0
        %2588 = vmatprep.mubr.bf16.mxu0 0
        %2589 = vmatmul.mubr.bf16.gmra.mxu0 %v2473
        %v2590 = vpop.f32.mrf.mxu0
        %v2591 = vadd.f32 0.0, %v2590
        %v2592 = vpop.f32.mrf.mxu0
        %v2593 = vpop.f32.mrf.mxu0
        %v2594 = vadd.f32 0.0, %v2593
        %v2595 = vpop.f32.mrf.mxu0
        %2596 = vmatprep.mubr.bf16.mxu0 0
        %2597 = vmatmul.mubr.bf16.gmra.mxu0 %v2474
        %v2598 = vpop.f32.mrf.mxu0
        %v2599 = vadd.f32 0.0, %v2598
        %v2600 = vpop.f32.mrf.mxu0
        %v2601 = vpop.f32.mrf.mxu0
        %v2602 = vadd.f32 0.0, %v2601
        %v2603 = vpop.f32.mrf.mxu0
        %2604 = vdwg.mxu0
        %v2605 = vadd.f32 %v2455, %v2575
        %v2606 = vadd.f32 %v2456, %v2578
        %v2607 = vadd.f32 %v2457, %v2583
        %v2608 = vadd.f32 %v2458, %v2586
        %v2609 = vadd.f32 %v2459, %v2591
        %v2610 = vadd.f32 %v2460, %v2594
        %v2611 = vadd.f32 %v2461, %v2599
        %v2612 = vadd.f32 %v2462, %v2602
        %s2613 = scalar_lea.vmem [#allocation2], 32
        %v2614 = vld [vmem:[%s2613] sm:$0xff]
        %v2615 = vld [vmem:[%s2613 + $0x10] sm:$0xff]
        %v2616 = vld [vmem:[%s2613 + $0x20] sm:$0xff]
        %v2617 = vld [vmem:[%s2613 + $0x30] sm:$0xff]
        %v2618 = vld [vmem:[%s2613 + $0x40] sm:$0xff]
        %v2619 = vld [vmem:[%s2613 + $0x50] sm:$0xff]
        %v2620 = vld [vmem:[%s2613 + $0x60] sm:$0xff]
        %v2621 = vld [vmem:[%s2613 + $0x70] sm:$0xff]
        %v2622 = vpack.c.bf16 %v2615, %v2614
        %v2623 = vpack.c.bf16 %v2617, %v2616
        %v2624 = vpack.c.bf16 %v2619, %v2618
        %v2625 = vpack.c.bf16 %v2621, %v2620
        %s2626 = scalar_lea.vmem %s2, 384
        %v2627 = vld [vmem:[%s2626] sm:$0xf]
        %v2628 = vld [vmem:[%s2626 + $0x4] sm:$0xf]
        %v2629 = vld [vmem:[%s2626 + $0x8] sm:$0xf]
        %v2630 = vld [vmem:[%s2626 + $0xc] sm:$0xf]
        %v2631 = vld [vmem:[%s2626 + $0x10] sm:$0xf]
        %v2632 = vld [vmem:[%s2626 + $0x14] sm:$0xf]
        %v2633 = vld [vmem:[%s2626 + $0x18] sm:$0xf]
        %v2634 = vld [vmem:[%s2626 + $0x1c] sm:$0xf]
        %v2635 = vld [vmem:[%s2626 + $0x20] sm:$0xf]
        %v2636 = vld [vmem:[%s2626 + $0x24] sm:$0xf]
        %v2637 = vld [vmem:[%s2626 + $0x28] sm:$0xf]
        %v2638 = vld [vmem:[%s2626 + $0x2c] sm:$0xf]
        %v2639 = vld [vmem:[%s2626 + $0x30] sm:$0xf]
        %v2640 = vld [vmem:[%s2626 + $0x34] sm:$0xf]
        %v2641 = vld [vmem:[%s2626 + $0x38] sm:$0xf]
        %v2642 = vld [vmem:[%s2626 + $0x3c] sm:$0xf]
        %v2659 = vunpack.c.l.b16 %v2627
        %v2660 = vunpack.c.l.b16 %v2628
        %v2661 = vunpack.c.l.b16 %v2629
        %v2662 = vunpack.c.l.b16 %v2630
        %v2663 = vunpack.c.l.b16 %v2631
        %v2664 = vunpack.c.l.b16 %v2632
        %v2665 = vunpack.c.l.b16 %v2633
        %v2666 = vunpack.c.l.b16 %v2634
        %v2667 = vunpack.c.l.b16 %v2635
        %v2668 = vunpack.c.l.b16 %v2636
        %v2669 = vunpack.c.l.b16 %v2637
        %v2670 = vunpack.c.l.b16 %v2638
        %v2671 = vunpack.c.l.b16 %v2639
        %v2672 = vunpack.c.l.b16 %v2640
        %v2673 = vunpack.c.l.b16 %v2641
        %v2674 = vunpack.c.l.b16 %v2642
        %v2675 = vpack.c.b16 %v2660, %v2659
        %v2676 = vpack.c.b16 %v2662, %v2661
        %v2677 = vpack.c.b16 %v2664, %v2663
        %v2678 = vpack.c.b16 %v2666, %v2665
        %v2679 = vpack.c.b16 %v2668, %v2667
        %v2680 = vpack.c.b16 %v2670, %v2669
        %v2681 = vpack.c.b16 %v2672, %v2671
        %v2682 = vpack.c.b16 %v2674, %v2673
        %2691 = vmatprep.subr.bf16.mxu0 0
        %2692 = vmatpush1.bf16.msra.mxu0 %v2682
        %2693 = vmatprep.subr.bf16.mxu0 0
        %2694 = vmatpush1.bf16.msra.mxu0 %v2681
        %2695 = vmatprep.subr.bf16.mxu0 0
        %2696 = vmatpush1.bf16.msra.mxu0 %v2680
        %2697 = vmatprep.subr.bf16.mxu0 0
        %2698 = vmatpush1.bf16.msra.mxu0 %v2679
        %2699 = vmatprep.subr.bf16.mxu0 0
        %2700 = vmatpush1.bf16.msra.mxu0 %v2678
        %2701 = vmatprep.subr.bf16.mxu0 0
        %2702 = vmatpush1.bf16.msra.mxu0 %v2677
        %2703 = vmatprep.subr.bf16.mxu0 0
        %2704 = vmatpush1.bf16.msra.mxu0 %v2676
        %2705 = vmatprep.subr.bf16.mxu0 0
        %2706 = vmatpush1.bf16.msra.mxu0 %v2675
        %2707 = vmatprep.subr.bf16.mxu0 0
        %2708 = vmatpush2.bf16.msra.mxu0 0
        %2709 = vmatprep.subr.bf16.mxu0 0
        %2710 = vmatpush2.bf16.msra.mxu0 0
        %2711 = vmatprep.subr.bf16.mxu0 0
        %2712 = vmatpush2.bf16.msra.mxu0 0
        %2713 = vmatprep.subr.bf16.mxu0 0
        %2714 = vmatpush2.bf16.msra.mxu0 0
        %2715 = vmatprep.subr.bf16.mxu0 0
        %2716 = vmatpush2.bf16.msra.mxu0 0
        %2717 = vmatprep.subr.bf16.mxu0 0
        %2718 = vmatpush2.bf16.msra.mxu0 0
        %2719 = vmatprep.subr.bf16.mxu0 0
        %2720 = vmatpush2.bf16.msra.mxu0 0
        %2721 = vmatprep.subr.bf16.mxu0 0
        %2722 = vmatpush2.bf16.msra.mxu0 0
        %2723 = vmatprep.mubr.bf16.mxu0 0
        %2724 = vmatmul.mubr.bf16.gmra.mxu0 %v2622
        %v2725 = vpop.f32.mrf.mxu0
        %v2726 = vadd.f32 0.0, %v2725
        %v2727 = vpop.f32.mrf.mxu0
        %v2728 = vpop.f32.mrf.mxu0
        %v2729 = vadd.f32 0.0, %v2728
        %v2730 = vpop.f32.mrf.mxu0
        %2731 = vmatprep.mubr.bf16.mxu0 0
        %2732 = vmatmul.mubr.bf16.gmra.mxu0 %v2623
        %v2733 = vpop.f32.mrf.mxu0
        %v2734 = vadd.f32 0.0, %v2733
        %v2735 = vpop.f32.mrf.mxu0
        %v2736 = vpop.f32.mrf.mxu0
        %v2737 = vadd.f32 0.0, %v2736
        %v2738 = vpop.f32.mrf.mxu0
        %2739 = vmatprep.mubr.bf16.mxu0 0
        %2740 = vmatmul.mubr.bf16.gmra.mxu0 %v2624
        %v2741 = vpop.f32.mrf.mxu0
        %v2742 = vadd.f32 0.0, %v2741
        %v2743 = vpop.f32.mrf.mxu0
        %v2744 = vpop.f32.mrf.mxu0
        %v2745 = vadd.f32 0.0, %v2744
        %v2746 = vpop.f32.mrf.mxu0
        %2747 = vmatprep.mubr.bf16.mxu0 0
        %2748 = vmatmul.mubr.bf16.gmra.mxu0 %v2625
        %v2749 = vpop.f32.mrf.mxu0
        %v2750 = vadd.f32 0.0, %v2749
        %v2751 = vpop.f32.mrf.mxu0
        %v2752 = vpop.f32.mrf.mxu0
        %v2753 = vadd.f32 0.0, %v2752
        %v2754 = vpop.f32.mrf.mxu0
        %2755 = vdwg.mxu0
        %v2756 = vadd.f32 %v2605, %v2726
        %v2757 = vadd.f32 %v2606, %v2729
        %v2758 = vadd.f32 %v2607, %v2734
        %v2759 = vadd.f32 %v2608, %v2737
        %v2760 = vadd.f32 %v2609, %v2742
        %v2761 = vadd.f32 %v2610, %v2745
        %v2762 = vadd.f32 %v2611, %v2750
        %v2763 = vadd.f32 %v2612, %v2753
        %v2764 = vld [vmem:[%s2613 + $0x1] sm:$0xff]
        %v2765 = vld [vmem:[%s2613 + $0x11] sm:$0xff]
        %v2766 = vld [vmem:[%s2613 + $0x21] sm:$0xff]
        %v2767 = vld [vmem:[%s2613 + $0x31] sm:$0xff]
        %v2768 = vld [vmem:[%s2613 + $0x41] sm:$0xff]
        %v2769 = vld [vmem:[%s2613 + $0x51] sm:$0xff]
        %v2770 = vld [vmem:[%s2613 + $0x61] sm:$0xff]
        %v2771 = vld [vmem:[%s2613 + $0x71] sm:$0xff]
        %v2772 = vpack.c.bf16 %v2765, %v2764
        %v2773 = vpack.c.bf16 %v2767, %v2766
        %v2774 = vpack.c.bf16 %v2769, %v2768
        %v2775 = vpack.c.bf16 %v2771, %v2770
        %s2776 = scalar_lea.vmem %s2, 448
        %v2777 = vld [vmem:[%s2776] sm:$0xf]
        %v2778 = vld [vmem:[%s2776 + $0x4] sm:$0xf]
        %v2779 = vld [vmem:[%s2776 + $0x8] sm:$0xf]
        %v2780 = vld [vmem:[%s2776 + $0xc] sm:$0xf]
        %v2781 = vld [vmem:[%s2776 + $0x10] sm:$0xf]
        %v2782 = vld [vmem:[%s2776 + $0x14] sm:$0xf]
        %v2783 = vld [vmem:[%s2776 + $0x18] sm:$0xf]
        %v2784 = vld [vmem:[%s2776 + $0x1c] sm:$0xf]
        %v2785 = vld [vmem:[%s2776 + $0x20] sm:$0xf]
        %v2786 = vld [vmem:[%s2776 + $0x24] sm:$0xf]
        %v2787 = vld [vmem:[%s2776 + $0x28] sm:$0xf]
        %v2788 = vld [vmem:[%s2776 + $0x2c] sm:$0xf]
        %v2789 = vld [vmem:[%s2776 + $0x30] sm:$0xf]
        %v2790 = vld [vmem:[%s2776 + $0x34] sm:$0xf]
        %v2791 = vld [vmem:[%s2776 + $0x38] sm:$0xf]
        %v2792 = vld [vmem:[%s2776 + $0x3c] sm:$0xf]
        %v2809 = vunpack.c.l.b16 %v2777
        %v2810 = vunpack.c.l.b16 %v2778
        %v2811 = vunpack.c.l.b16 %v2779
        %v2812 = vunpack.c.l.b16 %v2780
        %v2813 = vunpack.c.l.b16 %v2781
        %v2814 = vunpack.c.l.b16 %v2782
        %v2815 = vunpack.c.l.b16 %v2783
        %v2816 = vunpack.c.l.b16 %v2784
        %v2817 = vunpack.c.l.b16 %v2785
        %v2818 = vunpack.c.l.b16 %v2786
        %v2819 = vunpack.c.l.b16 %v2787
        %v2820 = vunpack.c.l.b16 %v2788
        %v2821 = vunpack.c.l.b16 %v2789
        %v2822 = vunpack.c.l.b16 %v2790
        %v2823 = vunpack.c.l.b16 %v2791
        %v2824 = vunpack.c.l.b16 %v2792
        %v2825 = vpack.c.b16 %v2810, %v2809
        %v2826 = vpack.c.b16 %v2812, %v2811
        %v2827 = vpack.c.b16 %v2814, %v2813
        %v2828 = vpack.c.b16 %v2816, %v2815
        %v2829 = vpack.c.b16 %v2818, %v2817
        %v2830 = vpack.c.b16 %v2820, %v2819
        %v2831 = vpack.c.b16 %v2822, %v2821
        %v2832 = vpack.c.b16 %v2824, %v2823
        %2841 = vmatprep.subr.bf16.mxu0 0
        %2842 = vmatpush1.bf16.msra.mxu0 %v2832
        %2843 = vmatprep.subr.bf16.mxu0 0
        %2844 = vmatpush1.bf16.msra.mxu0 %v2831
        %2845 = vmatprep.subr.bf16.mxu0 0
        %2846 = vmatpush1.bf16.msra.mxu0 %v2830
        %2847 = vmatprep.subr.bf16.mxu0 0
        %2848 = vmatpush1.bf16.msra.mxu0 %v2829
        %2849 = vmatprep.subr.bf16.mxu0 0
        %2850 = vmatpush1.bf16.msra.mxu0 %v2828
        %2851 = vmatprep.subr.bf16.mxu0 0
        %2852 = vmatpush1.bf16.msra.mxu0 %v2827
        %2853 = vmatprep.subr.bf16.mxu0 0
        %2854 = vmatpush1.bf16.msra.mxu0 %v2826
        %2855 = vmatprep.subr.bf16.mxu0 0
        %2856 = vmatpush1.bf16.msra.mxu0 %v2825
        %2857 = vmatprep.subr.bf16.mxu0 0
        %2858 = vmatpush2.bf16.msra.mxu0 0
        %2859 = vmatprep.subr.bf16.mxu0 0
        %2860 = vmatpush2.bf16.msra.mxu0 0
        %2861 = vmatprep.subr.bf16.mxu0 0
        %2862 = vmatpush2.bf16.msra.mxu0 0
        %2863 = vmatprep.subr.bf16.mxu0 0
        %2864 = vmatpush2.bf16.msra.mxu0 0
        %2865 = vmatprep.subr.bf16.mxu0 0
        %2866 = vmatpush2.bf16.msra.mxu0 0
        %2867 = vmatprep.subr.bf16.mxu0 0
        %2868 = vmatpush2.bf16.msra.mxu0 0
        %2869 = vmatprep.subr.bf16.mxu0 0
        %2870 = vmatpush2.bf16.msra.mxu0 0
        %2871 = vmatprep.subr.bf16.mxu0 0
        %2872 = vmatpush2.bf16.msra.mxu0 0
        %2873 = vmatprep.mubr.bf16.mxu0 0
        %2874 = vmatmul.mubr.bf16.gmra.mxu0 %v2772
        %v2875 = vpop.f32.mrf.mxu0
        %v2876 = vadd.f32 0.0, %v2875
        %v2877 = vpop.f32.mrf.mxu0
        %v2878 = vpop.f32.mrf.mxu0
        %v2879 = vadd.f32 0.0, %v2878
        %v2880 = vpop.f32.mrf.mxu0
        %2881 = vmatprep.mubr.bf16.mxu0 0
        %2882 = vmatmul.mubr.bf16.gmra.mxu0 %v2773
        %v2883 = vpop.f32.mrf.mxu0
        %v2884 = vadd.f32 0.0, %v2883
        %v2885 = vpop.f32.mrf.mxu0
        %v2886 = vpop.f32.mrf.mxu0
        %v2887 = vadd.f32 0.0, %v2886
        %v2888 = vpop.f32.mrf.mxu0
        %2889 = vmatprep.mubr.bf16.mxu0 0
        %2890 = vmatmul.mubr.bf16.gmra.mxu0 %v2774
        %v2891 = vpop.f32.mrf.mxu0
        %v2892 = vadd.f32 0.0, %v2891
        %v2893 = vpop.f32.mrf.mxu0
        %v2894 = vpop.f32.mrf.mxu0
        %v2895 = vadd.f32 0.0, %v2894
        %v2896 = vpop.f32.mrf.mxu0
        %2897 = vmatprep.mubr.bf16.mxu0 0
        %2898 = vmatmul.mubr.bf16.gmra.mxu0 %v2775
        %v2899 = vpop.f32.mrf.mxu0
        %v2900 = vadd.f32 0.0, %v2899
        %v2901 = vpop.f32.mrf.mxu0
        %v2902 = vpop.f32.mrf.mxu0
        %v2903 = vadd.f32 0.0, %v2902
        %v2904 = vpop.f32.mrf.mxu0
        %2905 = vdwg.mxu0
        %v2906 = vadd.f32 %v2756, %v2876
        %v2907 = vadd.f32 %v2757, %v2879
        %v2908 = vadd.f32 %v2758, %v2884
        %v2909 = vadd.f32 %v2759, %v2887
        %v2910 = vadd.f32 %v2760, %v2892
        %v2911 = vadd.f32 %v2761, %v2895
        %v2912 = vadd.f32 %v2762, %v2900
        %v2913 = vadd.f32 %v2763, %v2903
        %v2914 = vld [vmem:[%s2613 + $0x2] sm:$0xff]
        %v2915 = vld [vmem:[%s2613 + $0x12] sm:$0xff]
        %v2916 = vld [vmem:[%s2613 + $0x22] sm:$0xff]
        %v2917 = vld [vmem:[%s2613 + $0x32] sm:$0xff]
        %v2918 = vld [vmem:[%s2613 + $0x42] sm:$0xff]
        %v2919 = vld [vmem:[%s2613 + $0x52] sm:$0xff]
        %v2920 = vld [vmem:[%s2613 + $0x62] sm:$0xff]
        %v2921 = vld [vmem:[%s2613 + $0x72] sm:$0xff]
        %v2922 = vpack.c.bf16 %v2915, %v2914
        %v2923 = vpack.c.bf16 %v2917, %v2916
        %v2924 = vpack.c.bf16 %v2919, %v2918
        %v2925 = vpack.c.bf16 %v2921, %v2920
        %s2926 = scalar_lea.vmem %s2, 512
        %v2927 = vld [vmem:[%s2926] sm:$0xf]
        %v2928 = vld [vmem:[%s2926 + $0x4] sm:$0xf]
        %v2929 = vld [vmem:[%s2926 + $0x8] sm:$0xf]
        %v2930 = vld [vmem:[%s2926 + $0xc] sm:$0xf]
        %v2931 = vld [vmem:[%s2926 + $0x10] sm:$0xf]
        %v2932 = vld [vmem:[%s2926 + $0x14] sm:$0xf]
        %v2933 = vld [vmem:[%s2926 + $0x18] sm:$0xf]
        %v2934 = vld [vmem:[%s2926 + $0x1c] sm:$0xf]
        %v2935 = vld [vmem:[%s2926 + $0x20] sm:$0xf]
        %v2936 = vld [vmem:[%s2926 + $0x24] sm:$0xf]
        %v2937 = vld [vmem:[%s2926 + $0x28] sm:$0xf]
        %v2938 = vld [vmem:[%s2926 + $0x2c] sm:$0xf]
        %v2939 = vld [vmem:[%s2926 + $0x30] sm:$0xf]
        %v2940 = vld [vmem:[%s2926 + $0x34] sm:$0xf]
        %v2941 = vld [vmem:[%s2926 + $0x38] sm:$0xf]
        %v2942 = vld [vmem:[%s2926 + $0x3c] sm:$0xf]
        %v2959 = vunpack.c.l.b16 %v2927
        %v2960 = vunpack.c.l.b16 %v2928
        %v2961 = vunpack.c.l.b16 %v2929
        %v2962 = vunpack.c.l.b16 %v2930
        %v2963 = vunpack.c.l.b16 %v2931
        %v2964 = vunpack.c.l.b16 %v2932
        %v2965 = vunpack.c.l.b16 %v2933
        %v2966 = vunpack.c.l.b16 %v2934
        %v2967 = vunpack.c.l.b16 %v2935
        %v2968 = vunpack.c.l.b16 %v2936
        %v2969 = vunpack.c.l.b16 %v2937
        %v2970 = vunpack.c.l.b16 %v2938
        %v2971 = vunpack.c.l.b16 %v2939
        %v2972 = vunpack.c.l.b16 %v2940
        %v2973 = vunpack.c.l.b16 %v2941
        %v2974 = vunpack.c.l.b16 %v2942
        %v2975 = vpack.c.b16 %v2960, %v2959
        %v2976 = vpack.c.b16 %v2962, %v2961
        %v2977 = vpack.c.b16 %v2964, %v2963
        %v2978 = vpack.c.b16 %v2966, %v2965
        %v2979 = vpack.c.b16 %v2968, %v2967
        %v2980 = vpack.c.b16 %v2970, %v2969
        %v2981 = vpack.c.b16 %v2972, %v2971
        %v2982 = vpack.c.b16 %v2974, %v2973
        %2991 = vmatprep.subr.bf16.mxu0 0
        %2992 = vmatpush1.bf16.msra.mxu0 %v2982
        %2993 = vmatprep.subr.bf16.mxu0 0
        %2994 = vmatpush1.bf16.msra.mxu0 %v2981
        %2995 = vmatprep.subr.bf16.mxu0 0
        %2996 = vmatpush1.bf16.msra.mxu0 %v2980
        %2997 = vmatprep.subr.bf16.mxu0 0
        %2998 = vmatpush1.bf16.msra.mxu0 %v2979
        %2999 = vmatprep.subr.bf16.mxu0 0
        %3000 = vmatpush1.bf16.msra.mxu0 %v2978
        %3001 = vmatprep.subr.bf16.mxu0 0
        %3002 = vmatpush1.bf16.msra.mxu0 %v2977
        %3003 = vmatprep.subr.bf16.mxu0 0
        %3004 = vmatpush1.bf16.msra.mxu0 %v2976
        %3005 = vmatprep.subr.bf16.mxu0 0
        %3006 = vmatpush1.bf16.msra.mxu0 %v2975
        %3007 = vmatprep.subr.bf16.mxu0 0
        %3008 = vmatpush2.bf16.msra.mxu0 0
        %3009 = vmatprep.subr.bf16.mxu0 0
        %3010 = vmatpush2.bf16.msra.mxu0 0
        %3011 = vmatprep.subr.bf16.mxu0 0
        %3012 = vmatpush2.bf16.msra.mxu0 0
        %3013 = vmatprep.subr.bf16.mxu0 0
        %3014 = vmatpush2.bf16.msra.mxu0 0
        %3015 = vmatprep.subr.bf16.mxu0 0
        %3016 = vmatpush2.bf16.msra.mxu0 0
        %3017 = vmatprep.subr.bf16.mxu0 0
        %3018 = vmatpush2.bf16.msra.mxu0 0
        %3019 = vmatprep.subr.bf16.mxu0 0
        %3020 = vmatpush2.bf16.msra.mxu0 0
        %3021 = vmatprep.subr.bf16.mxu0 0
        %3022 = vmatpush2.bf16.msra.mxu0 0
        %3023 = vmatprep.mubr.bf16.mxu0 0
        %3024 = vmatmul.mubr.bf16.gmra.mxu0 %v2922
        %v3025 = vpop.f32.mrf.mxu0
        %v3026 = vadd.f32 0.0, %v3025
        %v3027 = vpop.f32.mrf.mxu0
        %v3028 = vpop.f32.mrf.mxu0
        %v3029 = vadd.f32 0.0, %v3028
        %v3030 = vpop.f32.mrf.mxu0
        %3031 = vmatprep.mubr.bf16.mxu0 0
        %3032 = vmatmul.mubr.bf16.gmra.mxu0 %v2923
        %v3033 = vpop.f32.mrf.mxu0
        %v3034 = vadd.f32 0.0, %v3033
        %v3035 = vpop.f32.mrf.mxu0
        %v3036 = vpop.f32.mrf.mxu0
        %v3037 = vadd.f32 0.0, %v3036
        %v3038 = vpop.f32.mrf.mxu0
        %3039 = vmatprep.mubr.bf16.mxu0 0
        %3040 = vmatmul.mubr.bf16.gmra.mxu0 %v2924
        %v3041 = vpop.f32.mrf.mxu0
        %v3042 = vadd.f32 0.0, %v3041
        %v3043 = vpop.f32.mrf.mxu0
        %v3044 = vpop.f32.mrf.mxu0
        %v3045 = vadd.f32 0.0, %v3044
        %v3046 = vpop.f32.mrf.mxu0
        %3047 = vmatprep.mubr.bf16.mxu0 0
        %3048 = vmatmul.mubr.bf16.gmra.mxu0 %v2925
        %v3049 = vpop.f32.mrf.mxu0
        %v3050 = vadd.f32 0.0, %v3049
        %v3051 = vpop.f32.mrf.mxu0
        %v3052 = vpop.f32.mrf.mxu0
        %v3053 = vadd.f32 0.0, %v3052
        %v3054 = vpop.f32.mrf.mxu0
        %3055 = vdwg.mxu0
        %v3056 = vadd.f32 %v2906, %v3026
        %v3057 = vadd.f32 %v2907, %v3029
        %v3058 = vadd.f32 %v2908, %v3034
        %v3059 = vadd.f32 %v2909, %v3037
        %v3060 = vadd.f32 %v2910, %v3042
        %v3061 = vadd.f32 %v2911, %v3045
        %v3062 = vadd.f32 %v2912, %v3050
        %v3063 = vadd.f32 %v2913, %v3053
        %v3064 = vld [vmem:[%s5] sm:$0x1]
        %v3066 = vlaneseq
        %v3067 = vshrl.u32 %v3066, 7
        %v3068 = vsub.s32 0, %v3067
        %v3069 = vrot.slane %v3064, %v3068
        %v3071 = vmul.f32 %v3056, %v3069
        %v3072 = vmul.f32 %v3057, %v3069
        %v3073 = vmul.f32 %v3058, %v3069
        %v3074 = vmul.f32 %v3059, %v3069
        %v3075 = vmul.f32 %v3060, %v3069
        %v3076 = vmul.f32 %v3061, %v3069
        %v3077 = vmul.f32 %v3062, %v3069
        %v3078 = vmul.f32 %v3063, %v3069
        %v3079 = vld [vmem:[%s6] sm:$0x1]
        %v3081 = vlaneseq
        %v3082 = vshrl.u32 %v3081, 7
        %v3083 = vsub.s32 0, %v3082
        %v3084 = vrot.slane %v3079, %v3083
        %v3086 = vadd.f32 %v3071, %v3084
        %v3087 = vadd.f32 %v3072, %v3084
        %v3088 = vadd.f32 %v3073, %v3084
        %v3089 = vadd.f32 %v3074, %v3084
        %v3090 = vadd.f32 %v3075, %v3084
        %v3091 = vadd.f32 %v3076, %v3084
        %v3092 = vadd.f32 %v3077, %v3084
        %v3093 = vadd.f32 %v3078, %v3084
        %v3094 = vld [vmem:[%s323] sm:$0xf]
        %v3095 = vld [vmem:[%s323 + $0x4] sm:$0xf]
        %v3096 = vld [vmem:[%s323 + $0x8] sm:$0xf]
        %v3097 = vld [vmem:[%s323 + $0xc] sm:$0xf]
        %v3098 = vld [vmem:[%s323 + $0x10] sm:$0xf]
        %v3099 = vld [vmem:[%s323 + $0x14] sm:$0xf]
        %v3100 = vld [vmem:[%s323 + $0x18] sm:$0xf]
        %v3101 = vld [vmem:[%s323 + $0x1c] sm:$0xf]
        %v3102 = vunpack.c.l.bf16 %v3094
        %v3103 = vunpack.c.l.bf16 %v3095
        %v3104 = vunpack.c.l.bf16 %v3096
        %v3105 = vunpack.c.l.bf16 %v3097
        %v3106 = vunpack.c.l.bf16 %v3098
        %v3107 = vunpack.c.l.bf16 %v3099
        %v3108 = vunpack.c.l.bf16 %v3100
        %v3109 = vunpack.c.l.bf16 %v3101
        %v3110 = vadd.f32 %v3086, %v3102
        %v3111 = vadd.f32 %v3087, %v3103
        %v3112 = vadd.f32 %v3088, %v3104
        %v3113 = vadd.f32 %v3089, %v3105
        %v3114 = vadd.f32 %v3090, %v3106
        %v3115 = vadd.f32 %v3091, %v3107
        %v3116 = vadd.f32 %v3092, %v3108
        %v3117 = vadd.f32 %v3093, %v3109
        %v3118 = vmax.f32 %v3110, 0.0
        %v3119 = vmax.f32 %v3111, 0.0
        %v3120 = vmax.f32 %v3112, 0.0
        %v3121 = vmax.f32 %v3113, 0.0
        %v3122 = vmax.f32 %v3114, 0.0
        %v3123 = vmax.f32 %v3115, 0.0
        %v3124 = vmax.f32 %v3116, 0.0
        %v3125 = vmax.f32 %v3117, 0.0
        %3126 = vst [vmem:[%s313] sm:$0xff] %v3118
        %3127 = vst [vmem:[%s313 + $0x8] sm:$0xff] %v3119
        %3128 = vst [vmem:[%s313 + $0x10] sm:$0xff] %v3120
        %3129 = vst [vmem:[%s313 + $0x18] sm:$0xff] %v3121
        %3130 = vst [vmem:[%s313 + $0x20] sm:$0xff] %v3122
        %3131 = vst [vmem:[%s313 + $0x28] sm:$0xff] %v3123
        %3132 = vst [vmem:[%s313 + $0x30] sm:$0xff] %v3124
        %3133 = vst [vmem:[%s313 + $0x38] sm:$0xff] %v3125
        %s3134 = sand.u32 %s208, 1
        %s3135 = scalar_lea.sflag [#allocation4], %s3134
        %s3136 = sand.u32 %s208, 1
        %s3137 = smul.addr %s3136, 64
        %s3138 = scalar_lea.vmem [#allocation3], %s3137
        // Predicated region
        $region53: #{tpu_custom_call.1} parent=51 // pred_check
          %p3139 = pneg %p218
        $region54: #{tpu_custom_call.1} parent=51 // pred_check_branch
          %3141 = sbr.rel (%p3139) target = $region56
        $region55: #{tpu_custom_call.1} parent=51 // pred_region
          %s3143 = ssub.s32 1024, 1024
          %3144 = vsyncadd %s3135, %s3143
          %s3145 = smul.addr %s22, 8
          %s3146 = smul.addr %s3145, 128
          %s3147 = scalar_lea.hbm %s8, %s3146
          %s3148 = sshll.u32 %s3138, 4
          %s3149 = int_to_ptr.vmem [resolvable:$true] %s3148
          %3154 = dma.vmem_to_hbm [thread:$0]  %s3149, 1024, %s3147, %s3135, 128, 128, 8
        $region56: #{tpu_custom_call.1} parent=51 // pred_fallthru
          _
      $region52: #{tpu_custom_call.1} parent=5 // pred_fallthru
        _
      %p3155 = scmp.le.s32.totalorder 2, %s17
      // Predicated region
      $region57: #{tpu_custom_call.1} parent=5 // pred_check
        %p3156 = pneg %p3155
      $region58: #{tpu_custom_call.1} parent=5 // pred_check_branch
        %3158 = sbr.rel (%p3156) target = $region60
      $region59: #{tpu_custom_call.1} parent=5 // pred_region
        %s3159 = ssub.s32 %s17, 2
        // Predicated region
        $region61: #{tpu_custom_call.1} parent=59 // pred_check
          %p3160 = pneg %p224
        $region62: #{tpu_custom_call.1} parent=59 // pred_check_branch
          %3162 = sbr.rel (%p3160) target = $region64
        $region63: #{tpu_custom_call.1} parent=59 // pred_region
          %s3163 = sand.u32 %s209, 1
          %s3164 = scalar_lea.sflag [#allocation4], %s3163
          %s3165 = sand.u32 %s209, 1
          %s3166 = smul.addr %s3165, 64
          %s3167 = scalar_lea.vmem [#allocation3], %s3166
          %3168 = dma.done %s3164, 1024
        $region64: #{tpu_custom_call.1} parent=59 // pred_fallthru
          _
      $region60: #{tpu_custom_call.1} parent=5 // pred_fallthru
        _
    $region6: #{tpu_custom_call.1} parent=1 // loop_footer
      %s21 = sadd.s32 1, %s17
    $region7: #{tpu_custom_call.1} parent=1 // loop_footer_branch
      %16 = sbr.rel target = $region3
    $region8: #{tpu_custom_call.1} parent=1 // loop_exit
      _
    %3169 = vsyncpa [#allocation4], 1
    %s3170 = scalar_lea.sflag [#allocation4], 1
    %3171 = vsyncpa %s3170, 1

</llo_original>
